<compile_context>
chip_gen: v5e
topology: v5e:2x2
jax: 0.10.0
libtpu: 0.0.40
codegen_flags: <defaults>
</compile_context>

<pallas_src>
import jax
import jax.numpy as jnp
from jax.experimental import pallas as pl
from jax.experimental.pallas import tpu as pltpu

N_BATCH = 4    # hard-coded by `.view(4, -1)` in the PyTorch forward
L_IN = 40      # 40 -> 20 -> 10 -> 5, so fc1 sees 128 * 5 features


# ---------------------------------------------------------------------------
# Fused forward kernel
# ---------------------------------------------------------------------------
def _umt_audio_kernel(beta_ref, audio_ref, noise_ref,
                      cw1_ref, cb1_ref, cw2_ref, cb2_ref, cw3_ref, cb3_ref,
                      w1_ref, b1_ref, w2_ref, b2_ref, w3_ref, b3_ref,
                      out_ref):
    f32 = jnp.float32

    def mm(a, b):
        return jnp.dot(a, b, preferred_element_type=f32)

    def iota2(shape, dim):
        return jax.lax.broadcasted_iota(jnp.int32, shape, dim)

    def shift_mats(length):
        # 0/1 matrices D_prev, D_next for batch-major rows (row = n*length + l).
        # (D_prev @ x)[r] == x[r-1] within the same sample, 0 at l == 0
        # (i.e. the Conv1d zero padding); symmetrically for D_next.
        m = N_BATCH * length
        r = iota2((m, m), 0)
        q = iota2((m, m), 1)
        first = (r == 0)
        last = (r == length - 1)
        for n in range(1, N_BATCH):
            first = first | (r == n * length)
            last = last | (r == (n + 1) * length - 1)
        d_prev = jnp.where((q == r - 1) & jnp.logical_not(first), 1.0, 0.0)
        d_next = jnp.where((q == r + 1) & jnp.logical_not(last), 1.0, 0.0)
        return d_prev.astype(f32), d_next.astype(f32)

    def pool_mats(length):
        # Even / odd row selectors implementing MaxPool1d(2):
        # output row r' = n*(L/2)+j picks input rows 2r' and 2r'+1.
        m_in = N_BATCH * length
        m_out = m_in // 2
        r = iota2((m_out, m_in), 0)
        q = iota2((m_out, m_in), 1)
        even = jnp.where(q == 2 * r, 1.0, 0.0).astype(f32)
        odd = jnp.where(q == 2 * r + 1, 1.0, 0.0).astype(f32)
        return even, odd

    def conv_relu_pool(x, w_ref_, b_ref_, cin_is_one):
        # x: (N_BATCH*L, Cin), batch-major rows; returns (N_BATCH*L/2, Cout).
        length = x.shape[0] // N_BATCH
        d_prev, d_next = shift_mats(length)
        x_prev = mm(d_prev, x)
        x_next = mm(d_next, x)
        if cin_is_one:
            # Cin == 1: channel mixing is a pure VPU broadcast (no K=3 matmul).
            y = x_prev * w_ref_[0] + x * w_ref_[1] + x_next * w_ref_[2]
        else:
            y = mm(x_prev, w_ref_[0]) + mm(x, w_ref_[1]) + mm(x_next, w_ref_[2])
        y = jnp.maximum(y + b_ref_[...], 0.0)          # bias + ReLU
        e_even, e_odd = pool_mats(length)
        return jnp.maximum(mm(e_even, y), mm(e_odd, y))  # MaxPool1d(2)

    # ---- conv stack: (N*40,1) -> (N*20,32) -> (N*10,64) -> (N*5,128) --------
    x = audio_ref[...]
    x = conv_relu_pool(x, cw1_ref, cb1_ref, True)
    x = conv_relu_pool(x, cw2_ref, cb2_ref, False)
    x = conv_relu_pool(x, cw3_ref, cb3_ref, False)      # (N*5, 128), row = n*5+l

    # ---- fc1: PyTorch .view(4,-1) flatten is folded into w1 (stored (5,C,out))
    n_pos = w1_ref.shape[0]
    mlp_dim = w1_ref.shape[2]
    rr = iota2((N_BATCH, N_BATCH * n_pos), 0)
    qq = iota2((N_BATCH, N_BATCH * n_pos), 1)
    h1 = jnp.zeros((N_BATCH, mlp_dim), f32)
    for l in range(n_pos):
        sel = jnp.where(qq == n_pos * rr + l, 1.0, 0.0).astype(f32)  # (4, 20)
        h1 = h1 + mm(mm(sel, x), w1_ref[l])
    h1 = jnp.maximum(h1 + b1_ref[...], 0.0)
    # dropout(p=0.0) is the identity -> skipped.

    # ---- noise injection: x + beta * abs(x).mean() * noise (global scalar mean)
    beta = beta_ref[0, 0]
    scale = jnp.mean(jnp.abs(h1), keepdims=True)        # (1, 1)
    h1 = h1 + beta * scale * noise_ref[...]

    # ---- fc2 + ReLU, fc3 ----------------------------------------------------
    h2 = jnp.maximum(mm(h1, w2_ref[...]) + b2_ref[...], 0.0)
    out_ref[...] = mm(h2, w3_ref[...]) + b3_ref[...]


# ---------------------------------------------------------------------------
# Wrapper
# ---------------------------------------------------------------------------
@jax.jit
def umt_audio_forward(params, audio, beta, noise):
    n, length = audio.shape                      # (4, 40)
    audio_col = audio.reshape(n * length, 1)     # batch-major rows: n*40 + l
    beta_arr = jnp.asarray(beta, jnp.float32).reshape(1, 1)

    vmem = pl.BlockSpec(memory_space=pltpu.MemorySpace.VMEM)
    smem = pl.BlockSpec(memory_space=pltpu.MemorySpace.SMEM)
    out_dim = params["b3"].shape[-1]

    return pl.pallas_call(
        _umt_audio_kernel,
        out_shape=jax.ShapeDtypeStruct((n, out_dim), jnp.float32),
        in_specs=[smem] + [vmem] * 14,
        out_specs=vmem,
    )(beta_arr, audio_col, noise,
      params["cw1"], params["cb1"], params["cw2"], params["cb2"],
      params["cw3"], params["cb3"],
      params["w1"], params["b1"], params["w2"], params["b2"],
      params["w3"], params["b3"])


# ---------------------------------------------------------------------------
# Parameter init (deterministic, PyTorch-default-like uniform(-1/sqrt(fan_in)))
# Weights are stored once in the layouts the kernel consumes (matmul layouts,
# fc1 flatten permutation folded in) so there is zero per-forward layout work.
# ---------------------------------------------------------------------------
def init_params(key, hidden_dim=128, mlp_dim=128, output_dim=8):
    keys = jax.random.split(key, 12)

    def uni(k, shape, fan_in):
        bound = float(fan_in) ** -0.5
        return jax.random.uniform(k, shape, jnp.float32, -bound, bound)

    p = {}
    # Conv weights stored as (tap k, in, out); biases as (1, out) rows.
    p["cw1"] = uni(keys[0], (3, 1, 32), 3 * 1)               # Conv1d(1, 32)
    p["cb1"] = uni(keys[1], (1, 32), 3 * 1)
    p["cw2"] = uni(keys[2], (3, 32, 64), 3 * 32)             # Conv1d(32, 64)
    p["cb2"] = uni(keys[3], (1, 64), 3 * 32)
    p["cw3"] = uni(keys[4], (3, 64, hidden_dim), 3 * 64)     # Conv1d(64, 128)
    p["cb3"] = uni(keys[5], (1, hidden_dim), 3 * 64)
    # fc1 weight stored as (L=5, C=hidden, out): PyTorch's .view(4,-1) flatten
    # index is c*5 + l, i.e. w1[l, c, :] == W1_torch.T[c*5 + l, :]; folding that
    # permutation here makes the runtime (C,L) transpose free.
    p["w1"] = uni(keys[6], (5, hidden_dim, mlp_dim), hidden_dim * 5)
    p["b1"] = uni(keys[7], (1, mlp_dim), hidden_dim * 5)
    p["w2"] = uni(keys[8], (hidden_dim, mlp_dim), hidden_dim)   # fc2
    p["b2"] = uni(keys[9], (1, mlp_dim), hidden_dim)
    p["w3"] = uni(keys[10], (hidden_dim, output_dim), hidden_dim)  # fc3
    p["b3"] = uni(keys[11], (1, output_dim), hidden_dim)
    return p


if __name__ == "__main__":
    key = jax.random.PRNGKey(0)
    k_param, k_audio, k_noise = jax.random.split(key, 3)

    params = init_params(k_param)
    # batch=4 (hard-coded by .view(4, -1)), length 40 -> 5 after 3 pools
    audio = jax.random.normal(k_audio, (N_BATCH, L_IN), jnp.float32)
    beta = jnp.float32(0.1)
    # TODO(synk): torch.randn(...).cuda() runtime device RNG replaced with a
    # deterministic fixed-key normal tensor supplied as a kernel input.
    noise = jax.random.normal(k_noise, (N_BATCH, 128), jnp.float32)

    out = umt_audio_forward(params, audio, beta, noise)
    out = jax.block_until_ready(out)
    assert out.shape == (N_BATCH, 8) and out.dtype == jnp.float32
    print("KERNEL_OK")
</pallas_src>

<mosaic_0001>
module attributes {stable_mosaic.version = 11 : i64} {
  func.func @_umt_audio_kernel(%arg0: memref<1x1xf32, #tpu.memory_space<smem>>, %arg1: memref<160x1xf32, #tpu.memory_space<vmem>>, %arg2: memref<4x128xf32, #tpu.memory_space<vmem>>, %arg3: memref<3x1x32xf32, #tpu.memory_space<vmem>>, %arg4: memref<1x32xf32, #tpu.memory_space<vmem>>, %arg5: memref<3x32x64xf32, #tpu.memory_space<vmem>>, %arg6: memref<1x64xf32, #tpu.memory_space<vmem>>, %arg7: memref<3x64x128xf32, #tpu.memory_space<vmem>>, %arg8: memref<1x128xf32, #tpu.memory_space<vmem>>, %arg9: memref<5x128x128xf32, #tpu.memory_space<vmem>>, %arg10: memref<1x128xf32, #tpu.memory_space<vmem>>, %arg11: memref<128x128xf32, #tpu.memory_space<vmem>>, %arg12: memref<1x128xf32, #tpu.memory_space<vmem>>, %arg13: memref<128x8xf32, #tpu.memory_space<vmem>>, %arg14: memref<1x8xf32, #tpu.memory_space<vmem>>, %arg15: memref<4x8xf32, #tpu.memory_space<vmem>>) attributes {dimension_semantics = [], scalar_prefetch = 0 : i64, scratch_operands = 0 : i64, tpu.core_type = #tpu.core_type<tc>} {
    %c0 = arith.constant 0 : index
    %c0_0 = arith.constant 0 : index
    %0 = vector.load %arg1[%c0, %c0_0] : memref<160x1xf32, #tpu.memory_space<vmem>>, vector<160x1xf32>
    %1 = tpu.iota {dimensions = array<i32: 0>} : vector<160x160xi32>
    %2 = tpu.iota {dimensions = array<i32: 1>} : vector<160x160xi32>
    %c0_i32 = arith.constant 0 : i32
    %3 = vector.broadcast %c0_i32 : i32 to vector<160x160xi32>
    %4 = arith.cmpi eq, %1, %3 : vector<160x160xi32>
    %c39_i32 = arith.constant 39 : i32
    %5 = vector.broadcast %c39_i32 : i32 to vector<160x160xi32>
    %6 = arith.cmpi eq, %1, %5 : vector<160x160xi32>
    %c40_i32 = arith.constant 40 : i32
    %7 = vector.broadcast %c40_i32 : i32 to vector<160x160xi32>
    %8 = arith.cmpi eq, %1, %7 : vector<160x160xi32>
    %9 = arith.ori %4, %8 : vector<160x160xi1>
    %c79_i32 = arith.constant 79 : i32
    %10 = vector.broadcast %c79_i32 : i32 to vector<160x160xi32>
    %11 = arith.cmpi eq, %1, %10 : vector<160x160xi32>
    %12 = arith.ori %6, %11 : vector<160x160xi1>
    %c80_i32 = arith.constant 80 : i32
    %13 = vector.broadcast %c80_i32 : i32 to vector<160x160xi32>
    %14 = arith.cmpi eq, %1, %13 : vector<160x160xi32>
    %15 = arith.ori %9, %14 : vector<160x160xi1>
    %c119_i32 = arith.constant 119 : i32
    %16 = vector.broadcast %c119_i32 : i32 to vector<160x160xi32>
    %17 = arith.cmpi eq, %1, %16 : vector<160x160xi32>
    %18 = arith.ori %12, %17 : vector<160x160xi1>
    %c120_i32 = arith.constant 120 : i32
    %19 = vector.broadcast %c120_i32 : i32 to vector<160x160xi32>
    %20 = arith.cmpi eq, %1, %19 : vector<160x160xi32>
    %21 = arith.ori %15, %20 : vector<160x160xi1>
    %c159_i32 = arith.constant 159 : i32
    %22 = vector.broadcast %c159_i32 : i32 to vector<160x160xi32>
    %23 = arith.cmpi eq, %1, %22 : vector<160x160xi32>
    %24 = arith.ori %18, %23 : vector<160x160xi1>
    %c1_i32 = arith.constant 1 : i32
    %25 = vector.broadcast %c1_i32 : i32 to vector<160x160xi32>
    %26 = arith.subi %1, %25 : vector<160x160xi32>
    %27 = arith.cmpi eq, %2, %26 : vector<160x160xi32>
    %cst = arith.constant dense<true> : vector<160x160xi1>
    %28 = arith.xori %21, %cst : vector<160x160xi1>
    %29 = arith.andi %27, %28 : vector<160x160xi1>
    %cst_1 = arith.constant 1.000000e+00 : f32
    %cst_2 = arith.constant 0.000000e+00 : f32
    %30 = vector.broadcast %cst_1 : f32 to vector<160x160xf32>
    %31 = vector.broadcast %cst_2 : f32 to vector<160x160xf32>
    %32 = arith.select %29, %30, %31 : vector<160x160xi1>, vector<160x160xf32>
    %c1_i32_3 = arith.constant 1 : i32
    %33 = vector.broadcast %c1_i32_3 : i32 to vector<160x160xi32>
    %34 = arith.addi %1, %33 : vector<160x160xi32>
    %35 = arith.cmpi eq, %2, %34 : vector<160x160xi32>
    %cst_4 = arith.constant dense<true> : vector<160x160xi1>
    %36 = arith.xori %24, %cst_4 : vector<160x160xi1>
    %37 = arith.andi %35, %36 : vector<160x160xi1>
    %cst_5 = arith.constant 1.000000e+00 : f32
    %cst_6 = arith.constant 0.000000e+00 : f32
    %38 = vector.broadcast %cst_5 : f32 to vector<160x160xf32>
    %39 = vector.broadcast %cst_6 : f32 to vector<160x160xf32>
    %40 = arith.select %37, %38, %39 : vector<160x160xi1>, vector<160x160xf32>
    %cst_7 = arith.constant dense<0.000000e+00> : vector<160x1xf32>
    %41 = tpu.matmul %32, %0, %cst_7 {dimension_numbers = #tpu.dot_dimension_numbers<[1], [0], [0], [1], [0, 0, 1, 1], [], []>} : vector<160x160xf32>, vector<160x1xf32>, vector<160x1xf32> -> vector<160x1xf32>
    %cst_8 = arith.constant dense<0.000000e+00> : vector<160x1xf32>
    %42 = tpu.matmul %40, %0, %cst_8 {dimension_numbers = #tpu.dot_dimension_numbers<[1], [0], [0], [1], [0, 0, 1, 1], [], []>} : vector<160x160xf32>, vector<160x1xf32>, vector<160x1xf32> -> vector<160x1xf32>
    %c0_9 = arith.constant 0 : index
    %c0_10 = arith.constant 0 : index
    %c0_11 = arith.constant 0 : index
    %43 = vector.load %arg3[%c0_9, %c0_10, %c0_11] : memref<3x1x32xf32, #tpu.memory_space<vmem>>, vector<1x1x32xf32>
    %44 = vector.shape_cast %43 : vector<1x1x32xf32> to vector<1x32xf32>
    %45 = vector.broadcast %41 : vector<160x1xf32> to vector<160x32xf32>
    %46 = vector.broadcast %44 : vector<1x32xf32> to vector<160x32xf32>
    %47 = arith.mulf %45, %46 : vector<160x32xf32>
    %c1 = arith.constant 1 : index
    %c0_12 = arith.constant 0 : index
    %c0_13 = arith.constant 0 : index
    %48 = vector.load %arg3[%c1, %c0_12, %c0_13] : memref<3x1x32xf32, #tpu.memory_space<vmem>>, vector<1x1x32xf32>
    %49 = vector.shape_cast %48 : vector<1x1x32xf32> to vector<1x32xf32>
    %50 = vector.broadcast %0 : vector<160x1xf32> to vector<160x32xf32>
    %51 = vector.broadcast %49 : vector<1x32xf32> to vector<160x32xf32>
    %52 = arith.mulf %50, %51 : vector<160x32xf32>
    %53 = arith.addf %47, %52 : vector<160x32xf32>
    %c2 = arith.constant 2 : index
    %c0_14 = arith.constant 0 : index
    %c0_15 = arith.constant 0 : index
    %54 = vector.load %arg3[%c2, %c0_14, %c0_15] : memref<3x1x32xf32, #tpu.memory_space<vmem>>, vector<1x1x32xf32>
    %55 = vector.shape_cast %54 : vector<1x1x32xf32> to vector<1x32xf32>
    %56 = vector.broadcast %42 : vector<160x1xf32> to vector<160x32xf32>
    %57 = vector.broadcast %55 : vector<1x32xf32> to vector<160x32xf32>
    %58 = arith.mulf %56, %57 : vector<160x32xf32>
    %59 = arith.addf %53, %58 : vector<160x32xf32>
    %c0_16 = arith.constant 0 : index
    %c0_17 = arith.constant 0 : index
    %60 = vector.load %arg4[%c0_16, %c0_17] : memref<1x32xf32, #tpu.memory_space<vmem>>, vector<1x32xf32>
    %61 = vector.broadcast %60 : vector<1x32xf32> to vector<160x32xf32>
    %62 = arith.addf %59, %61 : vector<160x32xf32>
    %cst_18 = arith.constant 0.000000e+00 : f32
    %63 = vector.broadcast %cst_18 : f32 to vector<160x32xf32>
    %64 = arith.maximumf %62, %63 : vector<160x32xf32>
    %65 = tpu.iota {dimensions = array<i32: 0>} : vector<80x160xi32>
    %66 = tpu.iota {dimensions = array<i32: 1>} : vector<80x160xi32>
    %c2_i32 = arith.constant 2 : i32
    %67 = vector.broadcast %c2_i32 : i32 to vector<80x160xi32>
    %68 = arith.muli %67, %65 : vector<80x160xi32>
    %69 = arith.cmpi eq, %66, %68 : vector<80x160xi32>
    %cst_19 = arith.constant 1.000000e+00 : f32
    %cst_20 = arith.constant 0.000000e+00 : f32
    %70 = vector.broadcast %cst_19 : f32 to vector<80x160xf32>
    %71 = vector.broadcast %cst_20 : f32 to vector<80x160xf32>
    %72 = arith.select %69, %70, %71 : vector<80x160xi1>, vector<80x160xf32>
    %c2_i32_21 = arith.constant 2 : i32
    %73 = vector.broadcast %c2_i32_21 : i32 to vector<80x160xi32>
    %74 = arith.muli %73, %65 : vector<80x160xi32>
    %c1_i32_22 = arith.constant 1 : i32
    %75 = vector.broadcast %c1_i32_22 : i32 to vector<80x160xi32>
    %76 = arith.addi %74, %75 : vector<80x160xi32>
    %77 = arith.cmpi eq, %66, %76 : vector<80x160xi32>
    %cst_23 = arith.constant 1.000000e+00 : f32
    %cst_24 = arith.constant 0.000000e+00 : f32
    %78 = vector.broadcast %cst_23 : f32 to vector<80x160xf32>
    %79 = vector.broadcast %cst_24 : f32 to vector<80x160xf32>
    %80 = arith.select %77, %78, %79 : vector<80x160xi1>, vector<80x160xf32>
    %cst_25 = arith.constant dense<0.000000e+00> : vector<80x32xf32>
    %81 = tpu.matmul %72, %64, %cst_25 {dimension_numbers = #tpu.dot_dimension_numbers<[1], [0], [0], [1], [0, 0, 1, 1], [], []>} : vector<80x160xf32>, vector<160x32xf32>, vector<80x32xf32> -> vector<80x32xf32>
    %cst_26 = arith.constant dense<0.000000e+00> : vector<80x32xf32>
    %82 = tpu.matmul %80, %64, %cst_26 {dimension_numbers = #tpu.dot_dimension_numbers<[1], [0], [0], [1], [0, 0, 1, 1], [], []>} : vector<80x160xf32>, vector<160x32xf32>, vector<80x32xf32> -> vector<80x32xf32>
    %83 = arith.maximumf %81, %82 : vector<80x32xf32>
    %84 = tpu.iota {dimensions = array<i32: 0>} : vector<80x80xi32>
    %85 = tpu.iota {dimensions = array<i32: 1>} : vector<80x80xi32>
    %c0_i32_27 = arith.constant 0 : i32
    %86 = vector.broadcast %c0_i32_27 : i32 to vector<80x80xi32>
    %87 = arith.cmpi eq, %84, %86 : vector<80x80xi32>
    %c19_i32 = arith.constant 19 : i32
    %88 = vector.broadcast %c19_i32 : i32 to vector<80x80xi32>
    %89 = arith.cmpi eq, %84, %88 : vector<80x80xi32>
    %c20_i32 = arith.constant 20 : i32
    %90 = vector.broadcast %c20_i32 : i32 to vector<80x80xi32>
    %91 = arith.cmpi eq, %84, %90 : vector<80x80xi32>
    %92 = arith.ori %87, %91 : vector<80x80xi1>
    %c39_i32_28 = arith.constant 39 : i32
    %93 = vector.broadcast %c39_i32_28 : i32 to vector<80x80xi32>
    %94 = arith.cmpi eq, %84, %93 : vector<80x80xi32>
    %95 = arith.ori %89, %94 : vector<80x80xi1>
    %c40_i32_29 = arith.constant 40 : i32
    %96 = vector.broadcast %c40_i32_29 : i32 to vector<80x80xi32>
    %97 = arith.cmpi eq, %84, %96 : vector<80x80xi32>
    %98 = arith.ori %92, %97 : vector<80x80xi1>
    %c59_i32 = arith.constant 59 : i32
    %99 = vector.broadcast %c59_i32 : i32 to vector<80x80xi32>
    %100 = arith.cmpi eq, %84, %99 : vector<80x80xi32>
    %101 = arith.ori %95, %100 : vector<80x80xi1>
    %c60_i32 = arith.constant 60 : i32
    %102 = vector.broadcast %c60_i32 : i32 to vector<80x80xi32>
    %103 = arith.cmpi eq, %84, %102 : vector<80x80xi32>
    %104 = arith.ori %98, %103 : vector<80x80xi1>
    %c79_i32_30 = arith.constant 79 : i32
    %105 = vector.broadcast %c79_i32_30 : i32 to vector<80x80xi32>
    %106 = arith.cmpi eq, %84, %105 : vector<80x80xi32>
    %107 = arith.ori %101, %106 : vector<80x80xi1>
    %c1_i32_31 = arith.constant 1 : i32
    %108 = vector.broadcast %c1_i32_31 : i32 to vector<80x80xi32>
    %109 = arith.subi %84, %108 : vector<80x80xi32>
    %110 = arith.cmpi eq, %85, %109 : vector<80x80xi32>
    %cst_32 = arith.constant dense<true> : vector<80x80xi1>
    %111 = arith.xori %104, %cst_32 : vector<80x80xi1>
    %112 = arith.andi %110, %111 : vector<80x80xi1>
    %cst_33 = arith.constant 1.000000e+00 : f32
    %cst_34 = arith.constant 0.000000e+00 : f32
    %113 = vector.broadcast %cst_33 : f32 to vector<80x80xf32>
    %114 = vector.broadcast %cst_34 : f32 to vector<80x80xf32>
    %115 = arith.select %112, %113, %114 : vector<80x80xi1>, vector<80x80xf32>
    %c1_i32_35 = arith.constant 1 : i32
    %116 = vector.broadcast %c1_i32_35 : i32 to vector<80x80xi32>
    %117 = arith.addi %84, %116 : vector<80x80xi32>
    %118 = arith.cmpi eq, %85, %117 : vector<80x80xi32>
    %cst_36 = arith.constant dense<true> : vector<80x80xi1>
    %119 = arith.xori %107, %cst_36 : vector<80x80xi1>
    %120 = arith.andi %118, %119 : vector<80x80xi1>
    %cst_37 = arith.constant 1.000000e+00 : f32
    %cst_38 = arith.constant 0.000000e+00 : f32
    %121 = vector.broadcast %cst_37 : f32 to vector<80x80xf32>
    %122 = vector.broadcast %cst_38 : f32 to vector<80x80xf32>
    %123 = arith.select %120, %121, %122 : vector<80x80xi1>, vector<80x80xf32>
    %cst_39 = arith.constant dense<0.000000e+00> : vector<80x32xf32>
    %124 = tpu.matmul %115, %83, %cst_39 {dimension_numbers = #tpu.dot_dimension_numbers<[1], [0], [0], [1], [0, 0, 1, 1], [], []>} : vector<80x80xf32>, vector<80x32xf32>, vector<80x32xf32> -> vector<80x32xf32>
    %cst_40 = arith.constant dense<0.000000e+00> : vector<80x32xf32>
    %125 = tpu.matmul %123, %83, %cst_40 {dimension_numbers = #tpu.dot_dimension_numbers<[1], [0], [0], [1], [0, 0, 1, 1], [], []>} : vector<80x80xf32>, vector<80x32xf32>, vector<80x32xf32> -> vector<80x32xf32>
    %c0_41 = arith.constant 0 : index
    %c0_42 = arith.constant 0 : index
    %c0_43 = arith.constant 0 : index
    %126 = vector.load %arg5[%c0_41, %c0_42, %c0_43] : memref<3x32x64xf32, #tpu.memory_space<vmem>>, vector<1x32x64xf32>
    %127 = vector.shape_cast %126 : vector<1x32x64xf32> to vector<32x64xf32>
    %cst_44 = arith.constant dense<0.000000e+00> : vector<80x64xf32>
    %128 = tpu.matmul %124, %127, %cst_44 {dimension_numbers = #tpu.dot_dimension_numbers<[1], [0], [0], [1], [0, 0, 1, 1], [], []>} : vector<80x32xf32>, vector<32x64xf32>, vector<80x64xf32> -> vector<80x64xf32>
    %c1_45 = arith.constant 1 : index
    %c0_46 = arith.constant 0 : index
    %c0_47 = arith.constant 0 : index
    %129 = vector.load %arg5[%c1_45, %c0_46, %c0_47] : memref<3x32x64xf32, #tpu.memory_space<vmem>>, vector<1x32x64xf32>
    %130 = vector.shape_cast %129 : vector<1x32x64xf32> to vector<32x64xf32>
    %cst_48 = arith.constant dense<0.000000e+00> : vector<80x64xf32>
    %131 = tpu.matmul %83, %130, %cst_48 {dimension_numbers = #tpu.dot_dimension_numbers<[1], [0], [0], [1], [0, 0, 1, 1], [], []>} : vector<80x32xf32>, vector<32x64xf32>, vector<80x64xf32> -> vector<80x64xf32>
    %132 = arith.addf %128, %131 : vector<80x64xf32>
    %c2_49 = arith.constant 2 : index
    %c0_50 = arith.constant 0 : index
    %c0_51 = arith.constant 0 : index
    %133 = vector.load %arg5[%c2_49, %c0_50, %c0_51] : memref<3x32x64xf32, #tpu.memory_space<vmem>>, vector<1x32x64xf32>
    %134 = vector.shape_cast %133 : vector<1x32x64xf32> to vector<32x64xf32>
    %cst_52 = arith.constant dense<0.000000e+00> : vector<80x64xf32>
    %135 = tpu.matmul %125, %134, %cst_52 {dimension_numbers = #tpu.dot_dimension_numbers<[1], [0], [0], [1], [0, 0, 1, 1], [], []>} : vector<80x32xf32>, vector<32x64xf32>, vector<80x64xf32> -> vector<80x64xf32>
    %136 = arith.addf %132, %135 : vector<80x64xf32>
    %c0_53 = arith.constant 0 : index
    %c0_54 = arith.constant 0 : index
    %137 = vector.load %arg6[%c0_53, %c0_54] : memref<1x64xf32, #tpu.memory_space<vmem>>, vector<1x64xf32>
    %138 = vector.broadcast %137 : vector<1x64xf32> to vector<80x64xf32>
    %139 = arith.addf %136, %138 : vector<80x64xf32>
    %cst_55 = arith.constant 0.000000e+00 : f32
    %140 = vector.broadcast %cst_55 : f32 to vector<80x64xf32>
    %141 = arith.maximumf %139, %140 : vector<80x64xf32>
    %142 = tpu.iota {dimensions = array<i32: 0>} : vector<40x80xi32>
    %143 = tpu.iota {dimensions = array<i32: 1>} : vector<40x80xi32>
    %c2_i32_56 = arith.constant 2 : i32
    %144 = vector.broadcast %c2_i32_56 : i32 to vector<40x80xi32>
    %145 = arith.muli %144, %142 : vector<40x80xi32>
    %146 = arith.cmpi eq, %143, %145 : vector<40x80xi32>
    %cst_57 = arith.constant 1.000000e+00 : f32
    %cst_58 = arith.constant 0.000000e+00 : f32
    %147 = vector.broadcast %cst_57 : f32 to vector<40x80xf32>
    %148 = vector.broadcast %cst_58 : f32 to vector<40x80xf32>
    %149 = arith.select %146, %147, %148 : vector<40x80xi1>, vector<40x80xf32>
    %c2_i32_59 = arith.constant 2 : i32
    %150 = vector.broadcast %c2_i32_59 : i32 to vector<40x80xi32>
    %151 = arith.muli %150, %142 : vector<40x80xi32>
    %c1_i32_60 = arith.constant 1 : i32
    %152 = vector.broadcast %c1_i32_60 : i32 to vector<40x80xi32>
    %153 = arith.addi %151, %152 : vector<40x80xi32>
    %154 = arith.cmpi eq, %143, %153 : vector<40x80xi32>
    %cst_61 = arith.constant 1.000000e+00 : f32
    %cst_62 = arith.constant 0.000000e+00 : f32
    %155 = vector.broadcast %cst_61 : f32 to vector<40x80xf32>
    %156 = vector.broadcast %cst_62 : f32 to vector<40x80xf32>
    %157 = arith.select %154, %155, %156 : vector<40x80xi1>, vector<40x80xf32>
    %cst_63 = arith.constant dense<0.000000e+00> : vector<40x64xf32>
    %158 = tpu.matmul %149, %141, %cst_63 {dimension_numbers = #tpu.dot_dimension_numbers<[1], [0], [0], [1], [0, 0, 1, 1], [], []>} : vector<40x80xf32>, vector<80x64xf32>, vector<40x64xf32> -> vector<40x64xf32>
    %cst_64 = arith.constant dense<0.000000e+00> : vector<40x64xf32>
    %159 = tpu.matmul %157, %141, %cst_64 {dimension_numbers = #tpu.dot_dimension_numbers<[1], [0], [0], [1], [0, 0, 1, 1], [], []>} : vector<40x80xf32>, vector<80x64xf32>, vector<40x64xf32> -> vector<40x64xf32>
    %160 = arith.maximumf %158, %159 : vector<40x64xf32>
    %161 = tpu.iota {dimensions = array<i32: 0>} : vector<40x40xi32>
    %162 = tpu.iota {dimensions = array<i32: 1>} : vector<40x40xi32>
    %c0_i32_65 = arith.constant 0 : i32
    %163 = vector.broadcast %c0_i32_65 : i32 to vector<40x40xi32>
    %164 = arith.cmpi eq, %161, %163 : vector<40x40xi32>
    %c9_i32 = arith.constant 9 : i32
    %165 = vector.broadcast %c9_i32 : i32 to vector<40x40xi32>
    %166 = arith.cmpi eq, %161, %165 : vector<40x40xi32>
    %c10_i32 = arith.constant 10 : i32
    %167 = vector.broadcast %c10_i32 : i32 to vector<40x40xi32>
    %168 = arith.cmpi eq, %161, %167 : vector<40x40xi32>
    %169 = arith.ori %164, %168 : vector<40x40xi1>
    %c19_i32_66 = arith.constant 19 : i32
    %170 = vector.broadcast %c19_i32_66 : i32 to vector<40x40xi32>
    %171 = arith.cmpi eq, %161, %170 : vector<40x40xi32>
    %172 = arith.ori %166, %171 : vector<40x40xi1>
    %c20_i32_67 = arith.constant 20 : i32
    %173 = vector.broadcast %c20_i32_67 : i32 to vector<40x40xi32>
    %174 = arith.cmpi eq, %161, %173 : vector<40x40xi32>
    %175 = arith.ori %169, %174 : vector<40x40xi1>
    %c29_i32 = arith.constant 29 : i32
    %176 = vector.broadcast %c29_i32 : i32 to vector<40x40xi32>
    %177 = arith.cmpi eq, %161, %176 : vector<40x40xi32>
    %178 = arith.ori %172, %177 : vector<40x40xi1>
    %c30_i32 = arith.constant 30 : i32
    %179 = vector.broadcast %c30_i32 : i32 to vector<40x40xi32>
    %180 = arith.cmpi eq, %161, %179 : vector<40x40xi32>
    %181 = arith.ori %175, %180 : vector<40x40xi1>
    %c39_i32_68 = arith.constant 39 : i32
    %182 = vector.broadcast %c39_i32_68 : i32 to vector<40x40xi32>
    %183 = arith.cmpi eq, %161, %182 : vector<40x40xi32>
    %184 = arith.ori %178, %183 : vector<40x40xi1>
    %c1_i32_69 = arith.constant 1 : i32
    %185 = vector.broadcast %c1_i32_69 : i32 to vector<40x40xi32>
    %186 = arith.subi %161, %185 : vector<40x40xi32>
    %187 = arith.cmpi eq, %162, %186 : vector<40x40xi32>
    %cst_70 = arith.constant dense<true> : vector<40x40xi1>
    %188 = arith.xori %181, %cst_70 : vector<40x40xi1>
    %189 = arith.andi %187, %188 : vector<40x40xi1>
    %cst_71 = arith.constant 1.000000e+00 : f32
    %cst_72 = arith.constant 0.000000e+00 : f32
    %190 = vector.broadcast %cst_71 : f32 to vector<40x40xf32>
    %191 = vector.broadcast %cst_72 : f32 to vector<40x40xf32>
    %192 = arith.select %189, %190, %191 : vector<40x40xi1>, vector<40x40xf32>
    %c1_i32_73 = arith.constant 1 : i32
    %193 = vector.broadcast %c1_i32_73 : i32 to vector<40x40xi32>
    %194 = arith.addi %161, %193 : vector<40x40xi32>
    %195 = arith.cmpi eq, %162, %194 : vector<40x40xi32>
    %cst_74 = arith.constant dense<true> : vector<40x40xi1>
    %196 = arith.xori %184, %cst_74 : vector<40x40xi1>
    %197 = arith.andi %195, %196 : vector<40x40xi1>
    %cst_75 = arith.constant 1.000000e+00 : f32
    %cst_76 = arith.constant 0.000000e+00 : f32
    %198 = vector.broadcast %cst_75 : f32 to vector<40x40xf32>
    %199 = vector.broadcast %cst_76 : f32 to vector<40x40xf32>
    %200 = arith.select %197, %198, %199 : vector<40x40xi1>, vector<40x40xf32>
    %cst_77 = arith.constant dense<0.000000e+00> : vector<40x64xf32>
    %201 = tpu.matmul %192, %160, %cst_77 {dimension_numbers = #tpu.dot_dimension_numbers<[1], [0], [0], [1], [0, 0, 1, 1], [], []>} : vector<40x40xf32>, vector<40x64xf32>, vector<40x64xf32> -> vector<40x64xf32>
    %cst_78 = arith.constant dense<0.000000e+00> : vector<40x64xf32>
    %202 = tpu.matmul %200, %160, %cst_78 {dimension_numbers = #tpu.dot_dimension_numbers<[1], [0], [0], [1], [0, 0, 1, 1], [], []>} : vector<40x40xf32>, vector<40x64xf32>, vector<40x64xf32> -> vector<40x64xf32>
    %c0_79 = arith.constant 0 : index
    %c0_80 = arith.constant 0 : index
    %c0_81 = arith.constant 0 : index
    %203 = vector.load %arg7[%c0_79, %c0_80, %c0_81] : memref<3x64x128xf32, #tpu.memory_space<vmem>>, vector<1x64x128xf32>
    %204 = vector.shape_cast %203 : vector<1x64x128xf32> to vector<64x128xf32>
    %cst_82 = arith.constant dense<0.000000e+00> : vector<40x128xf32>
    %205 = tpu.matmul %201, %204, %cst_82 {dimension_numbers = #tpu.dot_dimension_numbers<[1], [0], [0], [1], [0, 0, 1, 1], [], []>} : vector<40x64xf32>, vector<64x128xf32>, vector<40x128xf32> -> vector<40x128xf32>
    %c1_83 = arith.constant 1 : index
    %c0_84 = arith.constant 0 : index
    %c0_85 = arith.constant 0 : index
    %206 = vector.load %arg7[%c1_83, %c0_84, %c0_85] : memref<3x64x128xf32, #tpu.memory_space<vmem>>, vector<1x64x128xf32>
    %207 = vector.shape_cast %206 : vector<1x64x128xf32> to vector<64x128xf32>
    %cst_86 = arith.constant dense<0.000000e+00> : vector<40x128xf32>
    %208 = tpu.matmul %160, %207, %cst_86 {dimension_numbers = #tpu.dot_dimension_numbers<[1], [0], [0], [1], [0, 0, 1, 1], [], []>} : vector<40x64xf32>, vector<64x128xf32>, vector<40x128xf32> -> vector<40x128xf32>
    %209 = arith.addf %205, %208 : vector<40x128xf32>
    %c2_87 = arith.constant 2 : index
    %c0_88 = arith.constant 0 : index
    %c0_89 = arith.constant 0 : index
    %210 = vector.load %arg7[%c2_87, %c0_88, %c0_89] : memref<3x64x128xf32, #tpu.memory_space<vmem>>, vector<1x64x128xf32>
    %211 = vector.shape_cast %210 : vector<1x64x128xf32> to vector<64x128xf32>
    %cst_90 = arith.constant dense<0.000000e+00> : vector<40x128xf32>
    %212 = tpu.matmul %202, %211, %cst_90 {dimension_numbers = #tpu.dot_dimension_numbers<[1], [0], [0], [1], [0, 0, 1, 1], [], []>} : vector<40x64xf32>, vector<64x128xf32>, vector<40x128xf32> -> vector<40x128xf32>
    %213 = arith.addf %209, %212 : vector<40x128xf32>
    %c0_91 = arith.constant 0 : index
    %c0_92 = arith.constant 0 : index
    %214 = vector.load %arg8[%c0_91, %c0_92] : memref<1x128xf32, #tpu.memory_space<vmem>>, vector<1x128xf32>
    %215 = vector.broadcast %214 : vector<1x128xf32> to vector<40x128xf32>
    %216 = arith.addf %213, %215 : vector<40x128xf32>
    %cst_93 = arith.constant 0.000000e+00 : f32
    %217 = vector.broadcast %cst_93 : f32 to vector<40x128xf32>
    %218 = arith.maximumf %216, %217 : vector<40x128xf32>
    %219 = tpu.iota {dimensions = array<i32: 0>} : vector<20x40xi32>
    %220 = tpu.iota {dimensions = array<i32: 1>} : vector<20x40xi32>
    %c2_i32_94 = arith.constant 2 : i32
    %221 = vector.broadcast %c2_i32_94 : i32 to vector<20x40xi32>
    %222 = arith.muli %221, %219 : vector<20x40xi32>
    %223 = arith.cmpi eq, %220, %222 : vector<20x40xi32>
    %cst_95 = arith.constant 1.000000e+00 : f32
    %cst_96 = arith.constant 0.000000e+00 : f32
    %224 = vector.broadcast %cst_95 : f32 to vector<20x40xf32>
    %225 = vector.broadcast %cst_96 : f32 to vector<20x40xf32>
    %226 = arith.select %223, %224, %225 : vector<20x40xi1>, vector<20x40xf32>
    %c2_i32_97 = arith.constant 2 : i32
    %227 = vector.broadcast %c2_i32_97 : i32 to vector<20x40xi32>
    %228 = arith.muli %227, %219 : vector<20x40xi32>
    %c1_i32_98 = arith.constant 1 : i32
    %229 = vector.broadcast %c1_i32_98 : i32 to vector<20x40xi32>
    %230 = arith.addi %228, %229 : vector<20x40xi32>
    %231 = arith.cmpi eq, %220, %230 : vector<20x40xi32>
    %cst_99 = arith.constant 1.000000e+00 : f32
    %cst_100 = arith.constant 0.000000e+00 : f32
    %232 = vector.broadcast %cst_99 : f32 to vector<20x40xf32>
    %233 = vector.broadcast %cst_100 : f32 to vector<20x40xf32>
    %234 = arith.select %231, %232, %233 : vector<20x40xi1>, vector<20x40xf32>
    %cst_101 = arith.constant dense<0.000000e+00> : vector<20x128xf32>
    %235 = tpu.matmul %226, %218, %cst_101 {dimension_numbers = #tpu.dot_dimension_numbers<[1], [0], [0], [1], [0, 0, 1, 1], [], []>} : vector<20x40xf32>, vector<40x128xf32>, vector<20x128xf32> -> vector<20x128xf32>
    %cst_102 = arith.constant dense<0.000000e+00> : vector<20x128xf32>
    %236 = tpu.matmul %234, %218, %cst_102 {dimension_numbers = #tpu.dot_dimension_numbers<[1], [0], [0], [1], [0, 0, 1, 1], [], []>} : vector<20x40xf32>, vector<40x128xf32>, vector<20x128xf32> -> vector<20x128xf32>
    %237 = arith.maximumf %235, %236 : vector<20x128xf32>
    %238 = tpu.iota {dimensions = array<i32: 0>} : vector<4x20xi32>
    %239 = tpu.iota {dimensions = array<i32: 1>} : vector<4x20xi32>
    %cst_103 = arith.constant 0.000000e+00 : f32
    %240 = vector.broadcast %cst_103 : f32 to vector<4x128xf32>
    %c5_i32 = arith.constant 5 : i32
    %241 = vector.broadcast %c5_i32 : i32 to vector<4x20xi32>
    %242 = arith.muli %241, %238 : vector<4x20xi32>
    %c0_i32_104 = arith.constant 0 : i32
    %243 = vector.broadcast %c0_i32_104 : i32 to vector<4x20xi32>
    %244 = arith.addi %242, %243 : vector<4x20xi32>
    %245 = arith.cmpi eq, %239, %244 : vector<4x20xi32>
    %cst_105 = arith.constant 1.000000e+00 : f32
    %cst_106 = arith.constant 0.000000e+00 : f32
    %246 = vector.broadcast %cst_105 : f32 to vector<4x20xf32>
    %247 = vector.broadcast %cst_106 : f32 to vector<4x20xf32>
    %248 = arith.select %245, %246, %247 : vector<4x20xi1>, vector<4x20xf32>
    %cst_107 = arith.constant dense<0.000000e+00> : vector<4x128xf32>
    %249 = tpu.matmul %248, %237, %cst_107 {dimension_numbers = #tpu.dot_dimension_numbers<[1], [0], [0], [1], [0, 0, 1, 1], [], []>} : vector<4x20xf32>, vector<20x128xf32>, vector<4x128xf32> -> vector<4x128xf32>
    %c0_108 = arith.constant 0 : index
    %c0_109 = arith.constant 0 : index
    %c0_110 = arith.constant 0 : index
    %250 = vector.load %arg9[%c0_108, %c0_109, %c0_110] : memref<5x128x128xf32, #tpu.memory_space<vmem>>, vector<1x128x128xf32>
    %251 = vector.shape_cast %250 : vector<1x128x128xf32> to vector<128x128xf32>
    %cst_111 = arith.constant dense<0.000000e+00> : vector<4x128xf32>
    %252 = tpu.matmul %249, %251, %cst_111 {dimension_numbers = #tpu.dot_dimension_numbers<[1], [0], [0], [1], [0, 0, 1, 1], [], []>} : vector<4x128xf32>, vector<128x128xf32>, vector<4x128xf32> -> vector<4x128xf32>
    %253 = arith.addf %240, %252 : vector<4x128xf32>
    %c5_i32_112 = arith.constant 5 : i32
    %254 = vector.broadcast %c5_i32_112 : i32 to vector<4x20xi32>
    %255 = arith.muli %254, %238 : vector<4x20xi32>
    %c1_i32_113 = arith.constant 1 : i32
    %256 = vector.broadcast %c1_i32_113 : i32 to vector<4x20xi32>
    %257 = arith.addi %255, %256 : vector<4x20xi32>
    %258 = arith.cmpi eq, %239, %257 : vector<4x20xi32>
    %cst_114 = arith.constant 1.000000e+00 : f32
    %cst_115 = arith.constant 0.000000e+00 : f32
    %259 = vector.broadcast %cst_114 : f32 to vector<4x20xf32>
    %260 = vector.broadcast %cst_115 : f32 to vector<4x20xf32>
    %261 = arith.select %258, %259, %260 : vector<4x20xi1>, vector<4x20xf32>
    %cst_116 = arith.constant dense<0.000000e+00> : vector<4x128xf32>
    %262 = tpu.matmul %261, %237, %cst_116 {dimension_numbers = #tpu.dot_dimension_numbers<[1], [0], [0], [1], [0, 0, 1, 1], [], []>} : vector<4x20xf32>, vector<20x128xf32>, vector<4x128xf32> -> vector<4x128xf32>
    %c1_117 = arith.constant 1 : index
    %c0_118 = arith.constant 0 : index
    %c0_119 = arith.constant 0 : index
    %263 = vector.load %arg9[%c1_117, %c0_118, %c0_119] : memref<5x128x128xf32, #tpu.memory_space<vmem>>, vector<1x128x128xf32>
    %264 = vector.shape_cast %263 : vector<1x128x128xf32> to vector<128x128xf32>
    %cst_120 = arith.constant dense<0.000000e+00> : vector<4x128xf32>
    %265 = tpu.matmul %262, %264, %cst_120 {dimension_numbers = #tpu.dot_dimension_numbers<[1], [0], [0], [1], [0, 0, 1, 1], [], []>} : vector<4x128xf32>, vector<128x128xf32>, vector<4x128xf32> -> vector<4x128xf32>
    %266 = arith.addf %253, %265 : vector<4x128xf32>
    %c5_i32_121 = arith.constant 5 : i32
    %267 = vector.broadcast %c5_i32_121 : i32 to vector<4x20xi32>
    %268 = arith.muli %267, %238 : vector<4x20xi32>
    %c2_i32_122 = arith.constant 2 : i32
    %269 = vector.broadcast %c2_i32_122 : i32 to vector<4x20xi32>
    %270 = arith.addi %268, %269 : vector<4x20xi32>
    %271 = arith.cmpi eq, %239, %270 : vector<4x20xi32>
    %cst_123 = arith.constant 1.000000e+00 : f32
    %cst_124 = arith.constant 0.000000e+00 : f32
    %272 = vector.broadcast %cst_123 : f32 to vector<4x20xf32>
    %273 = vector.broadcast %cst_124 : f32 to vector<4x20xf32>
    %274 = arith.select %271, %272, %273 : vector<4x20xi1>, vector<4x20xf32>
    %cst_125 = arith.constant dense<0.000000e+00> : vector<4x128xf32>
    %275 = tpu.matmul %274, %237, %cst_125 {dimension_numbers = #tpu.dot_dimension_numbers<[1], [0], [0], [1], [0, 0, 1, 1], [], []>} : vector<4x20xf32>, vector<20x128xf32>, vector<4x128xf32> -> vector<4x128xf32>
    %c2_126 = arith.constant 2 : index
    %c0_127 = arith.constant 0 : index
    %c0_128 = arith.constant 0 : index
    %276 = vector.load %arg9[%c2_126, %c0_127, %c0_128] : memref<5x128x128xf32, #tpu.memory_space<vmem>>, vector<1x128x128xf32>
    %277 = vector.shape_cast %276 : vector<1x128x128xf32> to vector<128x128xf32>
    %cst_129 = arith.constant dense<0.000000e+00> : vector<4x128xf32>
    %278 = tpu.matmul %275, %277, %cst_129 {dimension_numbers = #tpu.dot_dimension_numbers<[1], [0], [0], [1], [0, 0, 1, 1], [], []>} : vector<4x128xf32>, vector<128x128xf32>, vector<4x128xf32> -> vector<4x128xf32>
    %279 = arith.addf %266, %278 : vector<4x128xf32>
    %c5_i32_130 = arith.constant 5 : i32
    %280 = vector.broadcast %c5_i32_130 : i32 to vector<4x20xi32>
    %281 = arith.muli %280, %238 : vector<4x20xi32>
    %c3_i32 = arith.constant 3 : i32
    %282 = vector.broadcast %c3_i32 : i32 to vector<4x20xi32>
    %283 = arith.addi %281, %282 : vector<4x20xi32>
    %284 = arith.cmpi eq, %239, %283 : vector<4x20xi32>
    %cst_131 = arith.constant 1.000000e+00 : f32
    %cst_132 = arith.constant 0.000000e+00 : f32
    %285 = vector.broadcast %cst_131 : f32 to vector<4x20xf32>
    %286 = vector.broadcast %cst_132 : f32 to vector<4x20xf32>
    %287 = arith.select %284, %285, %286 : vector<4x20xi1>, vector<4x20xf32>
    %cst_133 = arith.constant dense<0.000000e+00> : vector<4x128xf32>
    %288 = tpu.matmul %287, %237, %cst_133 {dimension_numbers = #tpu.dot_dimension_numbers<[1], [0], [0], [1], [0, 0, 1, 1], [], []>} : vector<4x20xf32>, vector<20x128xf32>, vector<4x128xf32> -> vector<4x128xf32>
    %c3 = arith.constant 3 : index
    %c0_134 = arith.constant 0 : index
    %c0_135 = arith.constant 0 : index
    %289 = vector.load %arg9[%c3, %c0_134, %c0_135] : memref<5x128x128xf32, #tpu.memory_space<vmem>>, vector<1x128x128xf32>
    %290 = vector.shape_cast %289 : vector<1x128x128xf32> to vector<128x128xf32>
    %cst_136 = arith.constant dense<0.000000e+00> : vector<4x128xf32>
    %291 = tpu.matmul %288, %290, %cst_136 {dimension_numbers = #tpu.dot_dimension_numbers<[1], [0], [0], [1], [0, 0, 1, 1], [], []>} : vector<4x128xf32>, vector<128x128xf32>, vector<4x128xf32> -> vector<4x128xf32>
    %292 = arith.addf %279, %291 : vector<4x128xf32>
    %c5_i32_137 = arith.constant 5 : i32
    %293 = vector.broadcast %c5_i32_137 : i32 to vector<4x20xi32>
    %294 = arith.muli %293, %238 : vector<4x20xi32>
    %c4_i32 = arith.constant 4 : i32
    %295 = vector.broadcast %c4_i32 : i32 to vector<4x20xi32>
    %296 = arith.addi %294, %295 : vector<4x20xi32>
    %297 = arith.cmpi eq, %239, %296 : vector<4x20xi32>
    %cst_138 = arith.constant 1.000000e+00 : f32
    %cst_139 = arith.constant 0.000000e+00 : f32
    %298 = vector.broadcast %cst_138 : f32 to vector<4x20xf32>
    %299 = vector.broadcast %cst_139 : f32 to vector<4x20xf32>
    %300 = arith.select %297, %298, %299 : vector<4x20xi1>, vector<4x20xf32>
    %cst_140 = arith.constant dense<0.000000e+00> : vector<4x128xf32>
    %301 = tpu.matmul %300, %237, %cst_140 {dimension_numbers = #tpu.dot_dimension_numbers<[1], [0], [0], [1], [0, 0, 1, 1], [], []>} : vector<4x20xf32>, vector<20x128xf32>, vector<4x128xf32> -> vector<4x128xf32>
    %c4 = arith.constant 4 : index
    %c0_141 = arith.constant 0 : index
    %c0_142 = arith.constant 0 : index
    %302 = vector.load %arg9[%c4, %c0_141, %c0_142] : memref<5x128x128xf32, #tpu.memory_space<vmem>>, vector<1x128x128xf32>
    %303 = vector.shape_cast %302 : vector<1x128x128xf32> to vector<128x128xf32>
    %cst_143 = arith.constant dense<0.000000e+00> : vector<4x128xf32>
    %304 = tpu.matmul %301, %303, %cst_143 {dimension_numbers = #tpu.dot_dimension_numbers<[1], [0], [0], [1], [0, 0, 1, 1], [], []>} : vector<4x128xf32>, vector<128x128xf32>, vector<4x128xf32> -> vector<4x128xf32>
    %305 = arith.addf %292, %304 : vector<4x128xf32>
    %c0_144 = arith.constant 0 : index
    %c0_145 = arith.constant 0 : index
    %306 = vector.load %arg10[%c0_144, %c0_145] : memref<1x128xf32, #tpu.memory_space<vmem>>, vector<1x128xf32>
    %307 = vector.broadcast %306 : vector<1x128xf32> to vector<4x128xf32>
    %308 = arith.addf %305, %307 : vector<4x128xf32>
    %cst_146 = arith.constant 0.000000e+00 : f32
    %309 = vector.broadcast %cst_146 : f32 to vector<4x128xf32>
    %310 = arith.maximumf %308, %309 : vector<4x128xf32>
    %c0_147 = arith.constant 0 : index
    %c0_148 = arith.constant 0 : index
    %311 = memref.load %arg0[%c0_147, %c0_148] : memref<1x1xf32, #tpu.memory_space<smem>>
    %312 = math.absf %310 : vector<4x128xf32>
    %313 = vector.shape_cast %312 : vector<4x128xf32> to vector<1x4x128xf32>
    %cst_149 = arith.constant dense<0.000000e+00> : vector<1xf32>
    %314 = vector.multi_reduction <add>, %313, %cst_149 [1, 2] : vector<1x4x128xf32> to vector<1xf32>
    %315 = vector.shape_cast %314 : vector<1xf32> to vector<1x1x1xf32>
    %316 = vector.extract %315[0, 0, 0] : f32 from vector<1x1x1xf32>
    %317 = vector.broadcast %316 : f32 to vector<1x1xf32>
    %cst_150 = arith.constant 5.120000e+02 : f32
    %318 = vector.broadcast %cst_150 : f32 to vector<1x1xf32>
    %319 = arith.divf %317, %318 : vector<1x1xf32>
    %320 = vector.broadcast %311 : f32 to vector<1x1xf32>
    %321 = arith.mulf %320, %319 : vector<1x1xf32>
    %c0_151 = arith.constant 0 : index
    %c0_152 = arith.constant 0 : index
    %322 = vector.load %arg2[%c0_151, %c0_152] : memref<4x128xf32, #tpu.memory_space<vmem>>, vector<4x128xf32>
    %323 = vector.broadcast %321 : vector<1x1xf32> to vector<4x128xf32>
    %324 = arith.mulf %323, %322 : vector<4x128xf32>
    %325 = arith.addf %310, %324 : vector<4x128xf32>
    %c0_153 = arith.constant 0 : index
    %c0_154 = arith.constant 0 : index
    %326 = vector.load %arg11[%c0_153, %c0_154] : memref<128x128xf32, #tpu.memory_space<vmem>>, vector<128x128xf32>
    %cst_155 = arith.constant dense<0.000000e+00> : vector<4x128xf32>
    %327 = tpu.matmul %325, %326, %cst_155 {dimension_numbers = #tpu.dot_dimension_numbers<[1], [0], [0], [1], [0, 0, 1, 1], [], []>} : vector<4x128xf32>, vector<128x128xf32>, vector<4x128xf32> -> vector<4x128xf32>
    %c0_156 = arith.constant 0 : index
    %c0_157 = arith.constant 0 : index
    %328 = vector.load %arg12[%c0_156, %c0_157] : memref<1x128xf32, #tpu.memory_space<vmem>>, vector<1x128xf32>
    %329 = vector.broadcast %328 : vector<1x128xf32> to vector<4x128xf32>
    %330 = arith.addf %327, %329 : vector<4x128xf32>
    %cst_158 = arith.constant 0.000000e+00 : f32
    %331 = vector.broadcast %cst_158 : f32 to vector<4x128xf32>
    %332 = arith.maximumf %330, %331 : vector<4x128xf32>
    %c0_159 = arith.constant 0 : index
    %c0_160 = arith.constant 0 : index
    %333 = vector.load %arg13[%c0_159, %c0_160] : memref<128x8xf32, #tpu.memory_space<vmem>>, vector<128x8xf32>
    %cst_161 = arith.constant dense<0.000000e+00> : vector<4x8xf32>
    %334 = tpu.matmul %332, %333, %cst_161 {dimension_numbers = #tpu.dot_dimension_numbers<[1], [0], [0], [1], [0, 0, 1, 1], [], []>} : vector<4x128xf32>, vector<128x8xf32>, vector<4x8xf32> -> vector<4x8xf32>
    %c0_162 = arith.constant 0 : index
    %c0_163 = arith.constant 0 : index
    %335 = vector.load %arg14[%c0_162, %c0_163] : memref<1x8xf32, #tpu.memory_space<vmem>>, vector<1x8xf32>
    %336 = vector.broadcast %335 : vector<1x8xf32> to vector<4x8xf32>
    %337 = arith.addf %334, %336 : vector<4x8xf32>
    %c0_164 = arith.constant 0 : index
    %c0_165 = arith.constant 0 : index
    %338 = vector.load %arg15[%c0_164, %c0_165] : memref<4x8xf32, #tpu.memory_space<vmem>>, vector<4x8xf32>
    tpu.vector_store %arg15[%c0_164, %c0_165], %337 {strides = array<i32>} : memref<4x8xf32, #tpu.memory_space<vmem>>, vector<4x8xf32>,
    return
  }
}

</mosaic_0001>

<llo_original>
// kernel: umt_audio_forward.1
$region0: #{umt_audio_forward.1}
  #allocation0 [shape = 'u32[]', space=smem, size = 0x4, offset = 0x4, fixed_abs, tag = 'smem constant byte address 0x4 - core index']
  #allocation1 [shape = 'u32[72,128]{1,0:T(1,128)}', space=vmem, size = 0x9000, scoped, tag = 'internal scratch']
  #allocation2 [shape = 'f32[1,1]{1,0:T(1,128)S(6)}', space=smem, size = 0x200, scoped, tag = 'scoped memory for umt_audio_forward.1']
  %s0 = inlined_call_operand.<no memory space> [shape: f32[1,1], index: 0, kind: input, shape index: {}]
  %s1 = inlined_call_operand.vmem [shape: f32[160,1], index: 1, kind: input, shape index: {}]
  %s2 = inlined_call_operand.vmem [shape: f32[4,128], index: 2, kind: input, shape index: {}]
  %s3 = inlined_call_operand.vmem [shape: f32[3,1,32], index: 3, kind: input, shape index: {}]
  %s4 = inlined_call_operand.vmem [shape: f32[1,32], index: 4, kind: input, shape index: {}]
  %s5 = inlined_call_operand.vmem [shape: f32[3,32,64], index: 5, kind: input, shape index: {}]
  %s6 = inlined_call_operand.vmem [shape: f32[1,64], index: 6, kind: input, shape index: {}]
  %s7 = inlined_call_operand.vmem [shape: f32[3,64,128], index: 7, kind: input, shape index: {}]
  %s8 = inlined_call_operand.vmem [shape: f32[1,128], index: 8, kind: input, shape index: {}]
  %s9 = inlined_call_operand.hbm [shape: f32[5,128,128], index: 9, kind: input, shape index: {}]
  %s10 = inlined_call_operand.hbm [shape: f32[1,128], index: 10, kind: input, shape index: {}]
  %s11 = inlined_call_operand.hbm [shape: f32[128,128], index: 11, kind: input, shape index: {}]
  %s12 = inlined_call_operand.vmem [shape: f32[1,128], index: 12, kind: input, shape index: {}]
  %s13 = inlined_call_operand.vmem [shape: f32[128,8], index: 13, kind: input, shape index: {}]
  %s14 = inlined_call_operand.hbm [shape: f32[1,8], index: 14, kind: input, shape index: {}]
  %s15 = inlined_call_operand.hbm [shape: f32[4,8], index: 15, kind: output, shape index: {}]
  %s16 = sld [smem:[#allocation0]]
  $region86: #{umt_audio_forward.1} parent=0
    _
  %s18 = ssub.s32 1, %s16
  %s19 = scalar_select 0, %s18, %s16
  %20 = sst [smem:[#allocation2]] %s0
  $region1: #{umt_audio_forward.1} parent=0
    #allocation3 [shape = 'u8[327680]{0}', space=vmem, size = 0x50000, scoped, tag = 'input window, operand 9, single buffered']
    #allocation4 [shape = 's32[1]{0}', space=sflag, size = 0x4, scoped, tag = 'scoped memory for umt_audio_forward.1']
    #allocation5 [shape = 's32[1]{0}', space=sflag, size = 0x4, scoped, tag = 'scoped memory for umt_audio_forward.1']
    #allocation6 [shape = 'u8[512]{0}', space=vmem, size = 0x400, scoped, tag = 'input window, operand 10, single buffered']
    #allocation7 [shape = 's32[1]{0}', space=sflag, size = 0x4, scoped, tag = 'scoped memory for umt_audio_forward.1']
    #allocation8 [shape = 'u8[65536]{0}', space=vmem, size = 0x10000, scoped, tag = 'input window, operand 11, single buffered']
    #allocation9 [shape = 'u8[512]{0}', space=vmem, size = 0x400, scoped, tag = 'input window, operand 14, single buffered']
    #allocation10 [shape = 's32[1]{0}', space=sflag, size = 0x4, scoped, tag = 'scoped memory for umt_audio_forward.1']
    #allocation11 [shape = 'u8[2048]{0}', space=vmem, size = 0x800, scoped, tag = 'output window, operand 0, single buffered']
    %21 = vsyncpa [#allocation4], 0
    %22 = vsyncpa [#allocation7], 0
    %23 = vsyncpa [#allocation10], 0
    %24 = vsyncpa [#allocation5], 0
    // Predicated region
    $region2: #{umt_audio_forward.1} parent=1 // pred_check
      _
    $region3: #{umt_audio_forward.1} parent=1 // pred_check_branch
      %26 = sbr.rel (0) target = $region5
    $region4: #{umt_audio_forward.1} parent=1 // pred_region
      _
    $region5: #{umt_audio_forward.1} parent=1 // pred_fallthru
      _
    // Predicated region
    $region6: #{umt_audio_forward.1} parent=1 // pred_check
      _
    $region7: #{umt_audio_forward.1} parent=1 // pred_check_branch
      %28 = sbr.rel (0) target = $region9
    $region8: #{umt_audio_forward.1} parent=1 // pred_region
      _
    $region9: #{umt_audio_forward.1} parent=1 // pred_fallthru
      _
    // Predicated region
    $region10: #{umt_audio_forward.1} parent=1 // pred_check
      _
    $region11: #{umt_audio_forward.1} parent=1 // pred_check_branch
      %30 = sbr.rel (0) target = $region13
    $region12: #{umt_audio_forward.1} parent=1 // pred_region
      _
    $region13: #{umt_audio_forward.1} parent=1 // pred_fallthru
      _
    // Predicated region
    $region14: #{umt_audio_forward.1} parent=1 // pred_check
      _
    $region15: #{umt_audio_forward.1} parent=1 // pred_check_branch
      %32 = sbr.rel (0) target = $region17
    $region16: #{umt_audio_forward.1} parent=1 // pred_region
      _
    $region17: #{umt_audio_forward.1} parent=1 // pred_fallthru
      _
    // Predicated region
    $region18: #{umt_audio_forward.1} parent=1 // pred_check
      _
    $region19: #{umt_audio_forward.1} parent=1 // pred_check_branch
      %34 = sbr.rel (0) target = $region21
    $region20: #{umt_audio_forward.1} parent=1 // pred_region
      _
    $region21: #{umt_audio_forward.1} parent=1 // pred_fallthru
      _
    // Predicated region
    $region22: #{umt_audio_forward.1} parent=1 // pred_check
      _
    $region23: #{umt_audio_forward.1} parent=1 // pred_check_branch
      %36 = sbr.rel (0) target = $region25
    $region24: #{umt_audio_forward.1} parent=1 // pred_region
      _
    $region25: #{umt_audio_forward.1} parent=1 // pred_fallthru
      _
    // Predicated region
    $region26: #{umt_audio_forward.1} parent=1 // pred_check
      _
    $region27: #{umt_audio_forward.1} parent=1 // pred_check_branch
      %38 = sbr.rel (0) target = $region29
    $region28: #{umt_audio_forward.1} parent=1 // pred_region
      _
    $region29: #{umt_audio_forward.1} parent=1 // pred_fallthru
      _
    // Predicated region
    $region30: #{umt_audio_forward.1} parent=1 // pred_check
      _
    $region31: #{umt_audio_forward.1} parent=1 // pred_check_branch
      %40 = sbr.rel (0) target = $region33
    $region32: #{umt_audio_forward.1} parent=1 // pred_region
      _
    $region33: #{umt_audio_forward.1} parent=1 // pred_fallthru
      _
    // Predicated region
    $region34: #{umt_audio_forward.1} parent=1 // pred_check
      _
    $region35: #{umt_audio_forward.1} parent=1 // pred_check_branch
      %42 = sbr.rel (0) target = $region37
    $region36: #{umt_audio_forward.1} parent=1 // pred_region
      _
    $region37: #{umt_audio_forward.1} parent=1 // pred_fallthru
      _
    // Predicated region
    $region38: #{umt_audio_forward.1} parent=1 // pred_check
      _
    $region39: #{umt_audio_forward.1} parent=1 // pred_check_branch
      %44 = sbr.rel (0) target = $region41
    $region40: #{umt_audio_forward.1} parent=1 // pred_region
      %46 = vsyncadd [#allocation4], 0
      %s47 = sshll.u32 %s9, 4
      %s48 = int_to_ptr.hbm [resolvable:$true] %s47
      %s49 = sshll.u32 [#allocation3], 4
      %s50 = int_to_ptr.vmem [resolvable:$true] %s49
      %55 = dma.hbm_to_vmem [thread:$0]  %s48, 10240, %s50, [#allocation4], 128, 128, 8
    $region41: #{umt_audio_forward.1} parent=1 // pred_fallthru
      _
    // Predicated region
    $region42: #{umt_audio_forward.1} parent=1 // pred_check
      _
    $region43: #{umt_audio_forward.1} parent=1 // pred_check_branch
      %57 = sbr.rel (0) target = $region45
    $region44: #{umt_audio_forward.1} parent=1 // pred_region
      %59 = vsyncadd [#allocation7], 0
      %s61 = sshll.u32 %s10, 4
      %s62 = int_to_ptr.hbm [resolvable:$true] %s61
      %s63 = sshll.u32 [#allocation6], 4
      %s64 = int_to_ptr.vmem [resolvable:$true] %s63
      %66 = dma.hbm_to_vmem [thread:$0]  %s62, 16, %s64, [#allocation7]
    $region45: #{umt_audio_forward.1} parent=1 // pred_fallthru
      _
    // Predicated region
    $region46: #{umt_audio_forward.1} parent=1 // pred_check
      _
    $region47: #{umt_audio_forward.1} parent=1 // pred_check_branch
      %68 = sbr.rel (0) target = $region49
    $region48: #{umt_audio_forward.1} parent=1 // pred_region
      %70 = vsyncadd [#allocation7], 0
      %s71 = sshll.u32 %s11, 4
      %s72 = int_to_ptr.hbm [resolvable:$true] %s71
      %s73 = sshll.u32 [#allocation8], 4
      %s74 = int_to_ptr.vmem [resolvable:$true] %s73
      %79 = dma.hbm_to_vmem [thread:$0]  %s72, 2048, %s74, [#allocation7], 128, 128, 8
    $region49: #{umt_audio_forward.1} parent=1 // pred_fallthru
      _
    // Predicated region
    $region50: #{umt_audio_forward.1} parent=1 // pred_check
      _
    $region51: #{umt_audio_forward.1} parent=1 // pred_check_branch
      %81 = sbr.rel (0) target = $region53
    $region52: #{umt_audio_forward.1} parent=1 // pred_region
      _
    $region53: #{umt_audio_forward.1} parent=1 // pred_fallthru
      _
    // Predicated region
    $region54: #{umt_audio_forward.1} parent=1 // pred_check
      _
    $region55: #{umt_audio_forward.1} parent=1 // pred_check_branch
      %83 = sbr.rel (0) target = $region57
    $region56: #{umt_audio_forward.1} parent=1 // pred_region
      _
    $region57: #{umt_audio_forward.1} parent=1 // pred_fallthru
      _
    // Predicated region
    $region58: #{umt_audio_forward.1} parent=1 // pred_check
      _
    $region59: #{umt_audio_forward.1} parent=1 // pred_check_branch
      %85 = sbr.rel (0) target = $region61
    $region60: #{umt_audio_forward.1} parent=1 // pred_region
      %87 = vsyncadd [#allocation10], 0
      %s89 = sshll.u32 %s14, 4
      %s90 = int_to_ptr.hbm [resolvable:$true] %s89
      %s91 = sshll.u32 [#allocation9], 4
      %s92 = int_to_ptr.vmem [resolvable:$true] %s91
      %94 = dma.hbm_to_vmem [thread:$0]  %s90, 16, %s92, [#allocation10]
    $region61: #{umt_audio_forward.1} parent=1 // pred_fallthru
      _
    // Predicated region
    $region62: #{umt_audio_forward.1} parent=1 // pred_check
      _
    $region63: #{umt_audio_forward.1} parent=1 // pred_check_branch
      %96 = sbr.rel (0) target = $region65
    $region64: #{umt_audio_forward.1} parent=1 // pred_region
      %98 = dma.done [#allocation4], 10240
    $region65: #{umt_audio_forward.1} parent=1 // pred_fallthru
      _
    // Predicated region
    $region66: #{umt_audio_forward.1} parent=1 // pred_check
      _
    $region67: #{umt_audio_forward.1} parent=1 // pred_check_branch
      %100 = sbr.rel (0) target = $region69
    $region68: #{umt_audio_forward.1} parent=1 // pred_region
      %102 = dma.done [#allocation7], 16
    $region69: #{umt_audio_forward.1} parent=1 // pred_fallthru
      _
    // Predicated region
    $region70: #{umt_audio_forward.1} parent=1 // pred_check
      _
    $region71: #{umt_audio_forward.1} parent=1 // pred_check_branch
      %104 = sbr.rel (0) target = $region73
    $region72: #{umt_audio_forward.1} parent=1 // pred_region
      %106 = dma.done [#allocation7], 2048
    $region73: #{umt_audio_forward.1} parent=1 // pred_fallthru
      _
    // Predicated region
    $region74: #{umt_audio_forward.1} parent=1 // pred_check
      _
    $region75: #{umt_audio_forward.1} parent=1 // pred_check_branch
      %108 = sbr.rel (0) target = $region77
    $region76: #{umt_audio_forward.1} parent=1 // pred_region
      %110 = dma.done [#allocation10], 16
    $region77: #{umt_audio_forward.1} parent=1 // pred_fallthru
      _
    %v111 = vld [vmem:[%s1] sm:$0xff]
    %v112 = vld [vmem:[%s1 + $0x8] sm:$0xff]
    %v113 = vld [vmem:[%s1 + $0x10] sm:$0xff]
    %v114 = vld [vmem:[%s1 + $0x18] sm:$0xff]
    %v115 = vld [vmem:[%s1 + $0x20] sm:$0xff]
    %v116 = vld [vmem:[%s1 + $0x28] sm:$0xff]
    %v117 = vld [vmem:[%s1 + $0x30] sm:$0xff]
    %v118 = vld [vmem:[%s1 + $0x38] sm:$0xff]
    %v119 = vld [vmem:[%s1 + $0x40] sm:$0xff]
    %v120 = vld [vmem:[%s1 + $0x48] sm:$0xff]
    %v121 = vld [vmem:[%s1 + $0x50] sm:$0xff]
    %v122 = vld [vmem:[%s1 + $0x58] sm:$0xff]
    %v123 = vld [vmem:[%s1 + $0x60] sm:$0xff]
    %v124 = vld [vmem:[%s1 + $0x68] sm:$0xff]
    %v125 = vld [vmem:[%s1 + $0x70] sm:$0xff]
    %v126 = vld [vmem:[%s1 + $0x78] sm:$0xff]
    %v127 = vld [vmem:[%s1 + $0x80] sm:$0xff]
    %v128 = vld [vmem:[%s1 + $0x88] sm:$0xff]
    %v129 = vld [vmem:[%s1 + $0x90] sm:$0xff]
    %v130 = vld [vmem:[%s1 + $0x98] sm:$0xff]
    %v131 = vlaneseq
    %v132 = vshrl.u32 %v131, 7
    %v133 = vadd.s32 %v132, 8
    %v134 = vadd.s32 %v132, 16
    %v135 = vadd.s32 %v132, 24
    %v136 = vadd.s32 %v132, 32
    %v137 = vadd.s32 %v132, 40
    %v138 = vadd.s32 %v132, 48
    %v139 = vadd.s32 %v132, 56
    %v140 = vadd.s32 %v132, 64
    %v141 = vadd.s32 %v132, 72
    %v142 = vadd.s32 %v132, 80
    %v143 = vadd.s32 %v132, 88
    %v144 = vadd.s32 %v132, 96
    %v145 = vadd.s32 %v132, 104
    %v146 = vadd.s32 %v132, 112
    %v147 = vadd.s32 %v132, 120
    %v148 = vadd.s32 %v132, 128
    %v149 = vadd.s32 %v132, 136
    %v150 = vadd.s32 %v132, 144
    %v151 = vadd.s32 %v132, 152
    %v152 = vlaneseq
    %v153 = vand.u32 %v152, 127
    %v154 = vadd.s32 %v153, 128
    %vm155 = vcmp.eq.s32.totalorder %v132, 0
    %vm156 = vcmp.eq.s32.totalorder %v133, 0
    %vm157 = vcmp.eq.s32.totalorder %v134, 0
    %vm158 = vcmp.eq.s32.totalorder %v135, 0
    %vm159 = vcmp.eq.s32.totalorder %v136, 0
    %vm160 = vcmp.eq.s32.totalorder %v137, 0
    %vm161 = vcmp.eq.s32.totalorder %v138, 0
    %vm162 = vcmp.eq.s32.totalorder %v139, 0
    %vm163 = vcmp.eq.s32.totalorder %v140, 0
    %vm164 = vcmp.eq.s32.totalorder %v141, 0
    %vm165 = vcmp.eq.s32.totalorder %v142, 0
    %vm166 = vcmp.eq.s32.totalorder %v143, 0
    %vm167 = vcmp.eq.s32.totalorder %v144, 0
    %vm168 = vcmp.eq.s32.totalorder %v145, 0
    %vm169 = vcmp.eq.s32.totalorder %v146, 0
    %vm170 = vcmp.eq.s32.totalorder %v147, 0
    %vm171 = vcmp.eq.s32.totalorder %v148, 0
    %vm172 = vcmp.eq.s32.totalorder %v149, 0
    %vm173 = vcmp.eq.s32.totalorder %v150, 0
    %vm174 = vcmp.eq.s32.totalorder %v151, 0
    %vm175 = vcmp.eq.s32.totalorder %v132, 39
    %vm176 = vcmp.eq.s32.totalorder %v133, 39
    %vm177 = vcmp.eq.s32.totalorder %v134, 39
    %vm178 = vcmp.eq.s32.totalorder %v135, 39
    %vm179 = vcmp.eq.s32.totalorder %v136, 39
    %vm180 = vcmp.eq.s32.totalorder %v137, 39
    %vm181 = vcmp.eq.s32.totalorder %v138, 39
    %vm182 = vcmp.eq.s32.totalorder %v139, 39
    %vm183 = vcmp.eq.s32.totalorder %v140, 39
    %vm184 = vcmp.eq.s32.totalorder %v141, 39
    %vm185 = vcmp.eq.s32.totalorder %v142, 39
    %vm186 = vcmp.eq.s32.totalorder %v143, 39
    %vm187 = vcmp.eq.s32.totalorder %v144, 39
    %vm188 = vcmp.eq.s32.totalorder %v145, 39
    %vm189 = vcmp.eq.s32.totalorder %v146, 39
    %vm190 = vcmp.eq.s32.totalorder %v147, 39
    %vm191 = vcmp.eq.s32.totalorder %v148, 39
    %vm192 = vcmp.eq.s32.totalorder %v149, 39
    %vm193 = vcmp.eq.s32.totalorder %v150, 39
    %vm194 = vcmp.eq.s32.totalorder %v151, 39
    %vm195 = vcmp.eq.s32.totalorder %v132, 40
    %vm196 = vcmp.eq.s32.totalorder %v133, 40
    %vm197 = vcmp.eq.s32.totalorder %v134, 40
    %vm198 = vcmp.eq.s32.totalorder %v135, 40
    %vm199 = vcmp.eq.s32.totalorder %v136, 40
    %vm200 = vcmp.eq.s32.totalorder %v137, 40
    %vm201 = vcmp.eq.s32.totalorder %v138, 40
    %vm202 = vcmp.eq.s32.totalorder %v139, 40
    %vm203 = vcmp.eq.s32.totalorder %v140, 40
    %vm204 = vcmp.eq.s32.totalorder %v141, 40
    %vm205 = vcmp.eq.s32.totalorder %v142, 40
    %vm206 = vcmp.eq.s32.totalorder %v143, 40
    %vm207 = vcmp.eq.s32.totalorder %v144, 40
    %vm208 = vcmp.eq.s32.totalorder %v145, 40
    %vm209 = vcmp.eq.s32.totalorder %v146, 40
    %vm210 = vcmp.eq.s32.totalorder %v147, 40
    %vm211 = vcmp.eq.s32.totalorder %v148, 40
    %vm212 = vcmp.eq.s32.totalorder %v149, 40
    %vm213 = vcmp.eq.s32.totalorder %v150, 40
    %vm214 = vcmp.eq.s32.totalorder %v151, 40
    %vm215 = vmor %vm155, %vm195
    %vm216 = vmor %vm156, %vm196
    %vm217 = vmor %vm157, %vm197
    %vm218 = vmor %vm158, %vm198
    %vm219 = vmor %vm159, %vm199
    %vm220 = vmor %vm160, %vm200
    %vm221 = vmor %vm161, %vm201
    %vm222 = vmor %vm162, %vm202
    %vm223 = vmor %vm163, %vm203
    %vm224 = vmor %vm164, %vm204
    %vm225 = vmor %vm165, %vm205
    %vm226 = vmor %vm166, %vm206
    %vm227 = vmor %vm167, %vm207
    %vm228 = vmor %vm168, %vm208
    %vm229 = vmor %vm169, %vm209
    %vm230 = vmor %vm170, %vm210
    %vm231 = vmor %vm171, %vm211
    %vm232 = vmor %vm172, %vm212
    %vm233 = vmor %vm173, %vm213
    %vm234 = vmor %vm174, %vm214
    %vm235 = vcmp.eq.s32.totalorder %v132, 79
    %vm236 = vcmp.eq.s32.totalorder %v133, 79
    %vm237 = vcmp.eq.s32.totalorder %v134, 79
    %vm238 = vcmp.eq.s32.totalorder %v135, 79
    %vm239 = vcmp.eq.s32.totalorder %v136, 79
    %vm240 = vcmp.eq.s32.totalorder %v137, 79
    %vm241 = vcmp.eq.s32.totalorder %v138, 79
    %vm242 = vcmp.eq.s32.totalorder %v139, 79
    %vm243 = vcmp.eq.s32.totalorder %v140, 79
    %vm244 = vcmp.eq.s32.totalorder %v141, 79
    %vm245 = vcmp.eq.s32.totalorder %v142, 79
    %vm246 = vcmp.eq.s32.totalorder %v143, 79
    %vm247 = vcmp.eq.s32.totalorder %v144, 79
    %vm248 = vcmp.eq.s32.totalorder %v145, 79
    %vm249 = vcmp.eq.s32.totalorder %v146, 79
    %vm250 = vcmp.eq.s32.totalorder %v147, 79
    %vm251 = vcmp.eq.s32.totalorder %v148, 79
    %vm252 = vcmp.eq.s32.totalorder %v149, 79
    %vm253 = vcmp.eq.s32.totalorder %v150, 79
    %vm254 = vcmp.eq.s32.totalorder %v151, 79
    %vm255 = vmor %vm175, %vm235
    %vm256 = vmor %vm176, %vm236
    %vm257 = vmor %vm177, %vm237
    %vm258 = vmor %vm178, %vm238
    %vm259 = vmor %vm179, %vm239
    %vm260 = vmor %vm180, %vm240
    %vm261 = vmor %vm181, %vm241
    %vm262 = vmor %vm182, %vm242
    %vm263 = vmor %vm183, %vm243
    %vm264 = vmor %vm184, %vm244
    %vm265 = vmor %vm185, %vm245
    %vm266 = vmor %vm186, %vm246
    %vm267 = vmor %vm187, %vm247
    %vm268 = vmor %vm188, %vm248
    %vm269 = vmor %vm189, %vm249
    %vm270 = vmor %vm190, %vm250
    %vm271 = vmor %vm191, %vm251
    %vm272 = vmor %vm192, %vm252
    %vm273 = vmor %vm193, %vm253
    %vm274 = vmor %vm194, %vm254
    %vm275 = vcmp.eq.s32.totalorder %v132, 80
    %vm276 = vcmp.eq.s32.totalorder %v133, 80
    %vm277 = vcmp.eq.s32.totalorder %v134, 80
    %vm278 = vcmp.eq.s32.totalorder %v135, 80
    %vm279 = vcmp.eq.s32.totalorder %v136, 80
    %vm280 = vcmp.eq.s32.totalorder %v137, 80
    %vm281 = vcmp.eq.s32.totalorder %v138, 80
    %vm282 = vcmp.eq.s32.totalorder %v139, 80
    %vm283 = vcmp.eq.s32.totalorder %v140, 80
    %vm284 = vcmp.eq.s32.totalorder %v141, 80
    %vm285 = vcmp.eq.s32.totalorder %v142, 80
    %vm286 = vcmp.eq.s32.totalorder %v143, 80
    %vm287 = vcmp.eq.s32.totalorder %v144, 80
    %vm288 = vcmp.eq.s32.totalorder %v145, 80
    %vm289 = vcmp.eq.s32.totalorder %v146, 80
    %vm290 = vcmp.eq.s32.totalorder %v147, 80
    %vm291 = vcmp.eq.s32.totalorder %v148, 80
    %vm292 = vcmp.eq.s32.totalorder %v149, 80
    %vm293 = vcmp.eq.s32.totalorder %v150, 80
    %vm294 = vcmp.eq.s32.totalorder %v151, 80
    %vm295 = vmor %vm215, %vm275
    %vm296 = vmor %vm216, %vm276
    %vm297 = vmor %vm217, %vm277
    %vm298 = vmor %vm218, %vm278
    %vm299 = vmor %vm219, %vm279
    %vm300 = vmor %vm220, %vm280
    %vm301 = vmor %vm221, %vm281
    %vm302 = vmor %vm222, %vm282
    %vm303 = vmor %vm223, %vm283
    %vm304 = vmor %vm224, %vm284
    %vm305 = vmor %vm225, %vm285
    %vm306 = vmor %vm226, %vm286
    %vm307 = vmor %vm227, %vm287
    %vm308 = vmor %vm228, %vm288
    %vm309 = vmor %vm229, %vm289
    %vm310 = vmor %vm230, %vm290
    %vm311 = vmor %vm231, %vm291
    %vm312 = vmor %vm232, %vm292
    %vm313 = vmor %vm233, %vm293
    %vm314 = vmor %vm234, %vm294
    %vm315 = vcmp.eq.s32.totalorder %v132, 119
    %vm316 = vcmp.eq.s32.totalorder %v133, 119
    %vm317 = vcmp.eq.s32.totalorder %v134, 119
    %vm318 = vcmp.eq.s32.totalorder %v135, 119
    %vm319 = vcmp.eq.s32.totalorder %v136, 119
    %vm320 = vcmp.eq.s32.totalorder %v137, 119
    %vm321 = vcmp.eq.s32.totalorder %v138, 119
    %vm322 = vcmp.eq.s32.totalorder %v139, 119
    %vm323 = vcmp.eq.s32.totalorder %v140, 119
    %vm324 = vcmp.eq.s32.totalorder %v141, 119
    %vm325 = vcmp.eq.s32.totalorder %v142, 119
    %vm326 = vcmp.eq.s32.totalorder %v143, 119
    %vm327 = vcmp.eq.s32.totalorder %v144, 119
    %vm328 = vcmp.eq.s32.totalorder %v145, 119
    %vm329 = vcmp.eq.s32.totalorder %v146, 119
    %vm330 = vcmp.eq.s32.totalorder %v147, 119
    %vm331 = vcmp.eq.s32.totalorder %v148, 119
    %vm332 = vcmp.eq.s32.totalorder %v149, 119
    %vm333 = vcmp.eq.s32.totalorder %v150, 119
    %vm334 = vcmp.eq.s32.totalorder %v151, 119
    %vm335 = vmor %vm255, %vm315
    %vm336 = vmor %vm256, %vm316
    %vm337 = vmor %vm257, %vm317
    %vm338 = vmor %vm258, %vm318
    %vm339 = vmor %vm259, %vm319
    %vm340 = vmor %vm260, %vm320
    %vm341 = vmor %vm261, %vm321
    %vm342 = vmor %vm262, %vm322
    %vm343 = vmor %vm263, %vm323
    %vm344 = vmor %vm264, %vm324
    %vm345 = vmor %vm265, %vm325
    %vm346 = vmor %vm266, %vm326
    %vm347 = vmor %vm267, %vm327
    %vm348 = vmor %vm268, %vm328
    %vm349 = vmor %vm269, %vm329
    %vm350 = vmor %vm270, %vm330
    %vm351 = vmor %vm271, %vm331
    %vm352 = vmor %vm272, %vm332
    %vm353 = vmor %vm273, %vm333
    %vm354 = vmor %vm274, %vm334
    %vm355 = vcmp.eq.s32.totalorder %v132, 120
    %vm356 = vcmp.eq.s32.totalorder %v133, 120
    %vm357 = vcmp.eq.s32.totalorder %v134, 120
    %vm358 = vcmp.eq.s32.totalorder %v135, 120
    %vm359 = vcmp.eq.s32.totalorder %v136, 120
    %vm360 = vcmp.eq.s32.totalorder %v137, 120
    %vm361 = vcmp.eq.s32.totalorder %v138, 120
    %vm362 = vcmp.eq.s32.totalorder %v139, 120
    %vm363 = vcmp.eq.s32.totalorder %v140, 120
    %vm364 = vcmp.eq.s32.totalorder %v141, 120
    %vm365 = vcmp.eq.s32.totalorder %v142, 120
    %vm366 = vcmp.eq.s32.totalorder %v143, 120
    %vm367 = vcmp.eq.s32.totalorder %v144, 120
    %vm368 = vcmp.eq.s32.totalorder %v145, 120
    %vm369 = vcmp.eq.s32.totalorder %v146, 120
    %vm370 = vcmp.eq.s32.totalorder %v147, 120
    %vm371 = vcmp.eq.s32.totalorder %v148, 120
    %vm372 = vcmp.eq.s32.totalorder %v149, 120
    %vm373 = vcmp.eq.s32.totalorder %v150, 120
    %vm374 = vcmp.eq.s32.totalorder %v151, 120
    %vm375 = vmor %vm295, %vm355
    %vm376 = vmor %vm296, %vm356
    %vm377 = vmor %vm297, %vm357
    %vm378 = vmor %vm298, %vm358
    %vm379 = vmor %vm299, %vm359
    %vm380 = vmor %vm300, %vm360
    %vm381 = vmor %vm301, %vm361
    %vm382 = vmor %vm302, %vm362
    %vm383 = vmor %vm303, %vm363
    %vm384 = vmor %vm304, %vm364
    %vm385 = vmor %vm305, %vm365
    %vm386 = vmor %vm306, %vm366
    %vm387 = vmor %vm307, %vm367
    %vm388 = vmor %vm308, %vm368
    %vm389 = vmor %vm309, %vm369
    %vm390 = vmor %vm310, %vm370
    %vm391 = vmor %vm311, %vm371
    %vm392 = vmor %vm312, %vm372
    %vm393 = vmor %vm313, %vm373
    %vm394 = vmor %vm314, %vm374
    %vm395 = vcmp.eq.s32.totalorder %v132, 159
    %vm396 = vcmp.eq.s32.totalorder %v133, 159
    %vm397 = vcmp.eq.s32.totalorder %v134, 159
    %vm398 = vcmp.eq.s32.totalorder %v135, 159
    %vm399 = vcmp.eq.s32.totalorder %v136, 159
    %vm400 = vcmp.eq.s32.totalorder %v137, 159
    %vm401 = vcmp.eq.s32.totalorder %v138, 159
    %vm402 = vcmp.eq.s32.totalorder %v139, 159
    %vm403 = vcmp.eq.s32.totalorder %v140, 159
    %vm404 = vcmp.eq.s32.totalorder %v141, 159
    %vm405 = vcmp.eq.s32.totalorder %v142, 159
    %vm406 = vcmp.eq.s32.totalorder %v143, 159
    %vm407 = vcmp.eq.s32.totalorder %v144, 159
    %vm408 = vcmp.eq.s32.totalorder %v145, 159
    %vm409 = vcmp.eq.s32.totalorder %v146, 159
    %vm410 = vcmp.eq.s32.totalorder %v147, 159
    %vm411 = vcmp.eq.s32.totalorder %v148, 159
    %vm412 = vcmp.eq.s32.totalorder %v149, 159
    %vm413 = vcmp.eq.s32.totalorder %v150, 159
    %vm414 = vcmp.eq.s32.totalorder %v151, 159
    %vm415 = vmor %vm335, %vm395
    %vm416 = vmor %vm336, %vm396
    %vm417 = vmor %vm337, %vm397
    %vm418 = vmor %vm338, %vm398
    %vm419 = vmor %vm339, %vm399
    %vm420 = vmor %vm340, %vm400
    %vm421 = vmor %vm341, %vm401
    %vm422 = vmor %vm342, %vm402
    %vm423 = vmor %vm343, %vm403
    %vm424 = vmor %vm344, %vm404
    %vm425 = vmor %vm345, %vm405
    %vm426 = vmor %vm346, %vm406
    %vm427 = vmor %vm347, %vm407
    %vm428 = vmor %vm348, %vm408
    %vm429 = vmor %vm349, %vm409
    %vm430 = vmor %vm350, %vm410
    %vm431 = vmor %vm351, %vm411
    %vm432 = vmor %vm352, %vm412
    %vm433 = vmor %vm353, %vm413
    %vm434 = vmor %vm354, %vm414
    %v435 = vsub.s32 %v132, 1
    %v436 = vsub.s32 %v133, 1
    %v437 = vsub.s32 %v134, 1
    %v438 = vsub.s32 %v135, 1
    %v439 = vsub.s32 %v136, 1
    %v440 = vsub.s32 %v137, 1
    %v441 = vsub.s32 %v138, 1
    %v442 = vsub.s32 %v139, 1
    %v443 = vsub.s32 %v140, 1
    %v444 = vsub.s32 %v141, 1
    %v445 = vsub.s32 %v142, 1
    %v446 = vsub.s32 %v143, 1
    %v447 = vsub.s32 %v144, 1
    %v448 = vsub.s32 %v145, 1
    %v449 = vsub.s32 %v146, 1
    %v450 = vsub.s32 %v147, 1
    %v451 = vsub.s32 %v148, 1
    %v452 = vsub.s32 %v149, 1
    %v453 = vsub.s32 %v150, 1
    %v454 = vsub.s32 %v151, 1
    %vm455 = vcmp.eq.s32.totalorder %v153, %v435
    %vm456 = vcmp.eq.s32.totalorder %v154, %v435
    %vm457 = vcmp.eq.s32.totalorder %v153, %v436
    %vm458 = vcmp.eq.s32.totalorder %v154, %v436
    %vm459 = vcmp.eq.s32.totalorder %v153, %v437
    %vm460 = vcmp.eq.s32.totalorder %v154, %v437
    %vm461 = vcmp.eq.s32.totalorder %v153, %v438
    %vm462 = vcmp.eq.s32.totalorder %v154, %v438
    %vm463 = vcmp.eq.s32.totalorder %v153, %v439
    %vm464 = vcmp.eq.s32.totalorder %v154, %v439
    %vm465 = vcmp.eq.s32.totalorder %v153, %v440
    %vm466 = vcmp.eq.s32.totalorder %v154, %v440
    %vm467 = vcmp.eq.s32.totalorder %v153, %v441
    %vm468 = vcmp.eq.s32.totalorder %v154, %v441
    %vm469 = vcmp.eq.s32.totalorder %v153, %v442
    %vm470 = vcmp.eq.s32.totalorder %v154, %v442
    %vm471 = vcmp.eq.s32.totalorder %v153, %v443
    %vm472 = vcmp.eq.s32.totalorder %v154, %v443
    %vm473 = vcmp.eq.s32.totalorder %v153, %v444
    %vm474 = vcmp.eq.s32.totalorder %v154, %v444
    %vm475 = vcmp.eq.s32.totalorder %v153, %v445
    %vm476 = vcmp.eq.s32.totalorder %v154, %v445
    %vm477 = vcmp.eq.s32.totalorder %v153, %v446
    %vm478 = vcmp.eq.s32.totalorder %v154, %v446
    %vm479 = vcmp.eq.s32.totalorder %v153, %v447
    %vm480 = vcmp.eq.s32.totalorder %v154, %v447
    %vm481 = vcmp.eq.s32.totalorder %v153, %v448
    %vm482 = vcmp.eq.s32.totalorder %v154, %v448
    %vm483 = vcmp.eq.s32.totalorder %v153, %v449
    %vm484 = vcmp.eq.s32.totalorder %v154, %v449
    %vm485 = vcmp.eq.s32.totalorder %v153, %v450
    %vm486 = vcmp.eq.s32.totalorder %v154, %v450
    %vm487 = vcmp.eq.s32.totalorder %v153, %v451
    %vm488 = vcmp.eq.s32.totalorder %v154, %v451
    %vm489 = vcmp.eq.s32.totalorder %v153, %v452
    %vm490 = vcmp.eq.s32.totalorder %v154, %v452
    %vm491 = vcmp.eq.s32.totalorder %v153, %v453
    %vm492 = vcmp.eq.s32.totalorder %v154, %v453
    %vm493 = vcmp.eq.s32.totalorder %v153, %v454
    %vm494 = vcmp.eq.s32.totalorder %v154, %v454
    %vm495 = vmxor %vm375, 1
    %vm496 = vmxor %vm376, 1
    %vm497 = vmxor %vm377, 1
    %vm498 = vmxor %vm378, 1
    %vm499 = vmxor %vm379, 1
    %vm500 = vmxor %vm380, 1
    %vm501 = vmxor %vm381, 1
    %vm502 = vmxor %vm382, 1
    %vm503 = vmxor %vm383, 1
    %vm504 = vmxor %vm384, 1
    %vm505 = vmxor %vm385, 1
    %vm506 = vmxor %vm386, 1
    %vm507 = vmxor %vm387, 1
    %vm508 = vmxor %vm388, 1
    %vm509 = vmxor %vm389, 1
    %vm510 = vmxor %vm390, 1
    %vm511 = vmxor %vm391, 1
    %vm512 = vmxor %vm392, 1
    %vm513 = vmxor %vm393, 1
    %vm514 = vmxor %vm394, 1
    %vm515 = vmand %vm455, %vm495
    %vm516 = vmand %vm456, %vm495
    %vm517 = vmand %vm457, %vm496
    %vm518 = vmand %vm458, %vm496
    %vm519 = vmand %vm459, %vm497
    %vm520 = vmand %vm460, %vm497
    %vm521 = vmand %vm461, %vm498
    %vm522 = vmand %vm462, %vm498
    %vm523 = vmand %vm463, %vm499
    %vm524 = vmand %vm464, %vm499
    %vm525 = vmand %vm465, %vm500
    %vm526 = vmand %vm466, %vm500
    %vm527 = vmand %vm467, %vm501
    %vm528 = vmand %vm468, %vm501
    %vm529 = vmand %vm469, %vm502
    %vm530 = vmand %vm470, %vm502
    %vm531 = vmand %vm471, %vm503
    %vm532 = vmand %vm472, %vm503
    %vm533 = vmand %vm473, %vm504
    %vm534 = vmand %vm474, %vm504
    %vm535 = vmand %vm475, %vm505
    %vm536 = vmand %vm476, %vm505
    %vm537 = vmand %vm477, %vm506
    %vm538 = vmand %vm478, %vm506
    %vm539 = vmand %vm479, %vm507
    %vm540 = vmand %vm480, %vm507
    %vm541 = vmand %vm481, %vm508
    %vm542 = vmand %vm482, %vm508
    %vm543 = vmand %vm483, %vm509
    %vm544 = vmand %vm484, %vm509
    %vm545 = vmand %vm485, %vm510
    %vm546 = vmand %vm486, %vm510
    %vm547 = vmand %vm487, %vm511
    %vm548 = vmand %vm488, %vm511
    %vm549 = vmand %vm489, %vm512
    %vm550 = vmand %vm490, %vm512
    %vm551 = vmand %vm491, %vm513
    %vm552 = vmand %vm492, %vm513
    %vm553 = vmand %vm493, %vm514
    %vm554 = vmand %vm494, %vm514
    %v555 = vsel %vm515, 1.0, 0.0
    %v556 = vsel %vm516, 1.0, 0.0
    %v557 = vsel %vm517, 1.0, 0.0
    %v558 = vsel %vm518, 1.0, 0.0
    %v559 = vsel %vm519, 1.0, 0.0
    %v560 = vsel %vm520, 1.0, 0.0
    %v561 = vsel %vm521, 1.0, 0.0
    %v562 = vsel %vm522, 1.0, 0.0
    %v563 = vsel %vm523, 1.0, 0.0
    %v564 = vsel %vm524, 1.0, 0.0
    %v565 = vsel %vm525, 1.0, 0.0
    %v566 = vsel %vm526, 1.0, 0.0
    %v567 = vsel %vm527, 1.0, 0.0
    %v568 = vsel %vm528, 1.0, 0.0
    %v569 = vsel %vm529, 1.0, 0.0
    %v570 = vsel %vm530, 1.0, 0.0
    %v571 = vsel %vm531, 1.0, 0.0
    %v572 = vsel %vm532, 1.0, 0.0
    %v573 = vsel %vm533, 1.0, 0.0
    %v574 = vsel %vm534, 1.0, 0.0
    %v575 = vsel %vm535, 1.0, 0.0
    %v576 = vsel %vm536, 1.0, 0.0
    %v577 = vsel %vm537, 1.0, 0.0
    %v578 = vsel %vm538, 1.0, 0.0
    %v579 = vsel %vm539, 1.0, 0.0
    %v580 = vsel %vm540, 1.0, 0.0
    %v581 = vsel %vm541, 1.0, 0.0
    %v582 = vsel %vm542, 1.0, 0.0
    %v583 = vsel %vm543, 1.0, 0.0
    %v584 = vsel %vm544, 1.0, 0.0
    %v585 = vsel %vm545, 1.0, 0.0
    %v586 = vsel %vm546, 1.0, 0.0
    %v587 = vsel %vm547, 1.0, 0.0
    %v588 = vsel %vm548, 1.0, 0.0
    %v589 = vsel %vm549, 1.0, 0.0
    %v590 = vsel %vm550, 1.0, 0.0
    %v591 = vsel %vm551, 1.0, 0.0
    %v592 = vsel %vm552, 1.0, 0.0
    %v593 = vsel %vm553, 1.0, 0.0
    %v594 = vsel %vm554, 1.0, 0.0
    %v595 = vadd.s32 %v132, 1
    %v596 = vadd.s32 %v133, 1
    %v597 = vadd.s32 %v134, 1
    %v598 = vadd.s32 %v135, 1
    %v599 = vadd.s32 %v136, 1
    %v600 = vadd.s32 %v137, 1
    %v601 = vadd.s32 %v138, 1
    %v602 = vadd.s32 %v139, 1
    %v603 = vadd.s32 %v140, 1
    %v604 = vadd.s32 %v141, 1
    %v605 = vadd.s32 %v142, 1
    %v606 = vadd.s32 %v143, 1
    %v607 = vadd.s32 %v144, 1
    %v608 = vadd.s32 %v145, 1
    %v609 = vadd.s32 %v146, 1
    %v610 = vadd.s32 %v147, 1
    %v611 = vadd.s32 %v148, 1
    %v612 = vadd.s32 %v149, 1
    %v613 = vadd.s32 %v150, 1
    %v614 = vadd.s32 %v151, 1
    %vm615 = vcmp.eq.s32.totalorder %v153, %v595
    %vm616 = vcmp.eq.s32.totalorder %v154, %v595
    %vm617 = vcmp.eq.s32.totalorder %v153, %v596
    %vm618 = vcmp.eq.s32.totalorder %v154, %v596
    %vm619 = vcmp.eq.s32.totalorder %v153, %v597
    %vm620 = vcmp.eq.s32.totalorder %v154, %v597
    %vm621 = vcmp.eq.s32.totalorder %v153, %v598
    %vm622 = vcmp.eq.s32.totalorder %v154, %v598
    %vm623 = vcmp.eq.s32.totalorder %v153, %v599
    %vm624 = vcmp.eq.s32.totalorder %v154, %v599
    %vm625 = vcmp.eq.s32.totalorder %v153, %v600
    %vm626 = vcmp.eq.s32.totalorder %v154, %v600
    %vm627 = vcmp.eq.s32.totalorder %v153, %v601
    %vm628 = vcmp.eq.s32.totalorder %v154, %v601
    %vm629 = vcmp.eq.s32.totalorder %v153, %v602
    %vm630 = vcmp.eq.s32.totalorder %v154, %v602
    %vm631 = vcmp.eq.s32.totalorder %v153, %v603
    %vm632 = vcmp.eq.s32.totalorder %v154, %v603
    %vm633 = vcmp.eq.s32.totalorder %v153, %v604
    %vm634 = vcmp.eq.s32.totalorder %v154, %v604
    %vm635 = vcmp.eq.s32.totalorder %v153, %v605
    %vm636 = vcmp.eq.s32.totalorder %v154, %v605
    %vm637 = vcmp.eq.s32.totalorder %v153, %v606
    %vm638 = vcmp.eq.s32.totalorder %v154, %v606
    %vm639 = vcmp.eq.s32.totalorder %v153, %v607
    %vm640 = vcmp.eq.s32.totalorder %v154, %v607
    %vm641 = vcmp.eq.s32.totalorder %v153, %v608
    %vm642 = vcmp.eq.s32.totalorder %v154, %v608
    %vm643 = vcmp.eq.s32.totalorder %v153, %v609
    %vm644 = vcmp.eq.s32.totalorder %v154, %v609
    %vm645 = vcmp.eq.s32.totalorder %v153, %v610
    %vm646 = vcmp.eq.s32.totalorder %v154, %v610
    %vm647 = vcmp.eq.s32.totalorder %v153, %v611
    %vm648 = vcmp.eq.s32.totalorder %v154, %v611
    %vm649 = vcmp.eq.s32.totalorder %v153, %v612
    %vm650 = vcmp.eq.s32.totalorder %v154, %v612
    %vm651 = vcmp.eq.s32.totalorder %v153, %v613
    %vm652 = vcmp.eq.s32.totalorder %v154, %v613
    %vm653 = vcmp.eq.s32.totalorder %v153, %v614
    %vm654 = vcmp.eq.s32.totalorder %v154, %v614
    %vm655 = vmxor %vm415, 1
    %vm656 = vmxor %vm416, 1
    %vm657 = vmxor %vm417, 1
    %vm658 = vmxor %vm418, 1
    %vm659 = vmxor %vm419, 1
    %vm660 = vmxor %vm420, 1
    %vm661 = vmxor %vm421, 1
    %vm662 = vmxor %vm422, 1
    %vm663 = vmxor %vm423, 1
    %vm664 = vmxor %vm424, 1
    %vm665 = vmxor %vm425, 1
    %vm666 = vmxor %vm426, 1
    %vm667 = vmxor %vm427, 1
    %vm668 = vmxor %vm428, 1
    %vm669 = vmxor %vm429, 1
    %vm670 = vmxor %vm430, 1
    %vm671 = vmxor %vm431, 1
    %vm672 = vmxor %vm432, 1
    %vm673 = vmxor %vm433, 1
    %vm674 = vmxor %vm434, 1
    %vm675 = vmand %vm615, %vm655
    %vm676 = vmand %vm616, %vm655
    %vm677 = vmand %vm617, %vm656
    %vm678 = vmand %vm618, %vm656
    %vm679 = vmand %vm619, %vm657
    %vm680 = vmand %vm620, %vm657
    %vm681 = vmand %vm621, %vm658
    %vm682 = vmand %vm622, %vm658
    %vm683 = vmand %vm623, %vm659
    %vm684 = vmand %vm624, %vm659
    %vm685 = vmand %vm625, %vm660
    %vm686 = vmand %vm626, %vm660
    %vm687 = vmand %vm627, %vm661
    %vm688 = vmand %vm628, %vm661
    %vm689 = vmand %vm629, %vm662
    %vm690 = vmand %vm630, %vm662
    %vm691 = vmand %vm631, %vm663
    %vm692 = vmand %vm632, %vm663
    %vm693 = vmand %vm633, %vm664
    %vm694 = vmand %vm634, %vm664
    %vm695 = vmand %vm635, %vm665
    %vm696 = vmand %vm636, %vm665
    %vm697 = vmand %vm637, %vm666
    %vm698 = vmand %vm638, %vm666
    %vm699 = vmand %vm639, %vm667
    %vm700 = vmand %vm640, %vm667
    %vm701 = vmand %vm641, %vm668
    %vm702 = vmand %vm642, %vm668
    %vm703 = vmand %vm643, %vm669
    %vm704 = vmand %vm644, %vm669
    %vm705 = vmand %vm645, %vm670
    %vm706 = vmand %vm646, %vm670
    %vm707 = vmand %vm647, %vm671
    %vm708 = vmand %vm648, %vm671
    %vm709 = vmand %vm649, %vm672
    %vm710 = vmand %vm650, %vm672
    %vm711 = vmand %vm651, %vm673
    %vm712 = vmand %vm652, %vm673
    %vm713 = vmand %vm653, %vm674
    %vm714 = vmand %vm654, %vm674
    %v715 = vsel %vm675, 1.0, 0.0
    %v716 = vsel %vm676, 1.0, 0.0
    %v717 = vsel %vm677, 1.0, 0.0
    %v718 = vsel %vm678, 1.0, 0.0
    %v719 = vsel %vm679, 1.0, 0.0
    %v720 = vsel %vm680, 1.0, 0.0
    %v721 = vsel %vm681, 1.0, 0.0
    %v722 = vsel %vm682, 1.0, 0.0
    %v723 = vsel %vm683, 1.0, 0.0
    %v724 = vsel %vm684, 1.0, 0.0
    %v725 = vsel %vm685, 1.0, 0.0
    %v726 = vsel %vm686, 1.0, 0.0
    %v727 = vsel %vm687, 1.0, 0.0
    %v728 = vsel %vm688, 1.0, 0.0
    %v729 = vsel %vm689, 1.0, 0.0
    %v730 = vsel %vm690, 1.0, 0.0
    %v731 = vsel %vm691, 1.0, 0.0
    %v732 = vsel %vm692, 1.0, 0.0
    %v733 = vsel %vm693, 1.0, 0.0
    %v734 = vsel %vm694, 1.0, 0.0
    %v735 = vsel %vm695, 1.0, 0.0
    %v736 = vsel %vm696, 1.0, 0.0
    %v737 = vsel %vm697, 1.0, 0.0
    %v738 = vsel %vm698, 1.0, 0.0
    %v739 = vsel %vm699, 1.0, 0.0
    %v740 = vsel %vm700, 1.0, 0.0
    %v741 = vsel %vm701, 1.0, 0.0
    %v742 = vsel %vm702, 1.0, 0.0
    %v743 = vsel %vm703, 1.0, 0.0
    %v744 = vsel %vm704, 1.0, 0.0
    %v745 = vsel %vm705, 1.0, 0.0
    %v746 = vsel %vm706, 1.0, 0.0
    %v747 = vsel %vm707, 1.0, 0.0
    %v748 = vsel %vm708, 1.0, 0.0
    %v749 = vsel %vm709, 1.0, 0.0
    %v750 = vsel %vm710, 1.0, 0.0
    %v751 = vsel %vm711, 1.0, 0.0
    %v752 = vsel %vm712, 1.0, 0.0
    %v753 = vsel %vm713, 1.0, 0.0
    %v754 = vsel %vm714, 1.0, 0.0
    %vm755 = vcmask 261120
    %v757 = vsel %vm755, %v556, 0
    %v760 = vsel %vm755, %v558, 0
    %v763 = vsel %vm755, %v560, 0
    %v766 = vsel %vm755, %v562, 0
    %v769 = vsel %vm755, %v564, 0
    %v772 = vsel %vm755, %v566, 0
    %v775 = vsel %vm755, %v568, 0
    %v778 = vsel %vm755, %v570, 0
    %v781 = vsel %vm755, %v572, 0
    %v784 = vsel %vm755, %v574, 0
    %v787 = vsel %vm755, %v576, 0
    %v790 = vsel %vm755, %v578, 0
    %v793 = vsel %vm755, %v580, 0
    %v796 = vsel %vm755, %v582, 0
    %v799 = vsel %vm755, %v584, 0
    %v802 = vsel %vm755, %v586, 0
    %v805 = vsel %vm755, %v588, 0
    %v808 = vsel %vm755, %v590, 0
    %v811 = vsel %vm755, %v592, 0
    %v814 = vsel %vm755, %v594, 0
    %816 = vmatpush.msra.mxu0 %v126
    %817 = vmatpush.msra.mxu0 %v125
    %818 = vmatpush.msra.mxu0 %v124
    %819 = vmatpush.msra.mxu0 %v123
    %820 = vmatpush.msra.mxu0 %v122
    %821 = vmatpush.msra.mxu0 %v121
    %822 = vmatpush.msra.mxu0 %v120
    %823 = vmatpush.msra.mxu0 %v119
    %824 = vmatpush.msra.mxu0 %v118
    %825 = vmatpush.msra.mxu0 %v117
    %826 = vmatpush.msra.mxu0 %v116
    %827 = vmatpush.msra.mxu0 %v115
    %828 = vmatpush.msra.mxu0 %v114
    %829 = vmatpush.msra.mxu0 %v113
    %830 = vmatpush.msra.mxu0 %v112
    %831 = vmatpush.msra.mxu0 %v111
    %832 = vmatmul.f32.gmra.mxu0 %v555
    %v833 = vpop.f32.mrf.mxu0
    %v834 = vadd.f32 0.0, %v833
    %835 = vmatmul.f32.gmra.mxu0 %v557
    %v836 = vpop.f32.mrf.mxu0
    %v837 = vadd.f32 0.0, %v836
    %838 = vmatmul.f32.gmra.mxu0 %v559
    %v839 = vpop.f32.mrf.mxu0
    %v840 = vadd.f32 0.0, %v839
    %841 = vmatmul.f32.gmra.mxu0 %v561
    %v842 = vpop.f32.mrf.mxu0
    %v843 = vadd.f32 0.0, %v842
    %844 = vmatmul.f32.gmra.mxu0 %v563
    %v845 = vpop.f32.mrf.mxu0
    %v846 = vadd.f32 0.0, %v845
    %847 = vmatmul.f32.gmra.mxu0 %v565
    %v848 = vpop.f32.mrf.mxu0
    %v849 = vadd.f32 0.0, %v848
    %850 = vmatmul.f32.gmra.mxu0 %v567
    %v851 = vpop.f32.mrf.mxu0
    %v852 = vadd.f32 0.0, %v851
    %853 = vmatmul.f32.gmra.mxu0 %v569
    %v854 = vpop.f32.mrf.mxu0
    %v855 = vadd.f32 0.0, %v854
    %856 = vmatmul.f32.gmra.mxu0 %v571
    %v857 = vpop.f32.mrf.mxu0
    %v858 = vadd.f32 0.0, %v857
    %859 = vmatmul.f32.gmra.mxu0 %v573
    %v860 = vpop.f32.mrf.mxu0
    %v861 = vadd.f32 0.0, %v860
    %862 = vmatmul.f32.gmra.mxu0 %v575
    %v863 = vpop.f32.mrf.mxu0
    %v864 = vadd.f32 0.0, %v863
    %865 = vmatmul.f32.gmra.mxu0 %v577
    %v866 = vpop.f32.mrf.mxu0
    %v867 = vadd.f32 0.0, %v866
    %868 = vmatmul.f32.gmra.mxu0 %v579
    %v869 = vpop.f32.mrf.mxu0
    %v870 = vadd.f32 0.0, %v869
    %871 = vmatmul.f32.gmra.mxu0 %v581
    %v872 = vpop.f32.mrf.mxu0
    %v873 = vadd.f32 0.0, %v872
    %874 = vmatmul.f32.gmra.mxu0 %v583
    %v875 = vpop.f32.mrf.mxu0
    %v876 = vadd.f32 0.0, %v875
    %877 = vmatmul.f32.gmra.mxu0 %v585
    %v878 = vpop.f32.mrf.mxu0
    %v879 = vadd.f32 0.0, %v878
    %880 = vmatmul.f32.gmra.mxu0 %v587
    %v881 = vpop.f32.mrf.mxu0
    %v882 = vadd.f32 0.0, %v881
    %883 = vmatmul.f32.gmra.mxu0 %v589
    %v884 = vpop.f32.mrf.mxu0
    %v885 = vadd.f32 0.0, %v884
    %886 = vmatmul.f32.gmra.mxu0 %v591
    %v887 = vpop.f32.mrf.mxu0
    %v888 = vadd.f32 0.0, %v887
    %889 = vmatmul.f32.gmra.mxu0 %v593
    %v890 = vpop.f32.mrf.mxu0
    %v891 = vadd.f32 0.0, %v890
    %892 = vdwg.mxu0
    %893 = vmatpush.msra.mxu0 0.0
    %894 = vmatpush.msra.mxu0 0.0
    %895 = vmatpush.msra.mxu0 0.0
    %896 = vmatpush.msra.mxu0 0.0
    %897 = vmatpush.msra.mxu0 0.0
    %898 = vmatpush.msra.mxu0 0.0
    %899 = vmatpush.msra.mxu0 0.0
    %900 = vmatpush.msra.mxu0 0.0
    %901 = vmatpush.msra.mxu0 0.0
    %902 = vmatpush.msra.mxu0 0.0
    %903 = vmatpush.msra.mxu0 0.0
    %904 = vmatpush.msra.mxu0 0.0
    %905 = vmatpush.msra.mxu0 %v130
    %906 = vmatpush.msra.mxu0 %v129
    %907 = vmatpush.msra.mxu0 %v128
    %908 = vmatpush.msra.mxu0 %v127
    %909 = vmatmul.f32.gmra.mxu0 %v757
    %v910 = vpop.f32.mrf.mxu0
    %v911 = vadd.f32 %v834, %v910
    %912 = vmatmul.f32.gmra.mxu0 %v760
    %v913 = vpop.f32.mrf.mxu0
    %v914 = vadd.f32 %v837, %v913
    %915 = vmatmul.f32.gmra.mxu0 %v763
    %v916 = vpop.f32.mrf.mxu0
    %v917 = vadd.f32 %v840, %v916
    %918 = vmatmul.f32.gmra.mxu0 %v766
    %v919 = vpop.f32.mrf.mxu0
    %v920 = vadd.f32 %v843, %v919
    %921 = vmatmul.f32.gmra.mxu0 %v769
    %v922 = vpop.f32.mrf.mxu0
    %v923 = vadd.f32 %v846, %v922
    %924 = vmatmul.f32.gmra.mxu0 %v772
    %v925 = vpop.f32.mrf.mxu0
    %v926 = vadd.f32 %v849, %v925
    %927 = vmatmul.f32.gmra.mxu0 %v775
    %v928 = vpop.f32.mrf.mxu0
    %v929 = vadd.f32 %v852, %v928
    %930 = vmatmul.f32.gmra.mxu0 %v778
    %v931 = vpop.f32.mrf.mxu0
    %v932 = vadd.f32 %v855, %v931
    %933 = vmatmul.f32.gmra.mxu0 %v781
    %v934 = vpop.f32.mrf.mxu0
    %v935 = vadd.f32 %v858, %v934
    %936 = vmatmul.f32.gmra.mxu0 %v784
    %v937 = vpop.f32.mrf.mxu0
    %v938 = vadd.f32 %v861, %v937
    %939 = vmatmul.f32.gmra.mxu0 %v787
    %v940 = vpop.f32.mrf.mxu0
    %v941 = vadd.f32 %v864, %v940
    %942 = vmatmul.f32.gmra.mxu0 %v790
    %v943 = vpop.f32.mrf.mxu0
    %v944 = vadd.f32 %v867, %v943
    %945 = vmatmul.f32.gmra.mxu0 %v793
    %v946 = vpop.f32.mrf.mxu0
    %v947 = vadd.f32 %v870, %v946
    %948 = vmatmul.f32.gmra.mxu0 %v796
    %v949 = vpop.f32.mrf.mxu0
    %v950 = vadd.f32 %v873, %v949
    %951 = vmatmul.f32.gmra.mxu0 %v799
    %v952 = vpop.f32.mrf.mxu0
    %v953 = vadd.f32 %v876, %v952
    %954 = vmatmul.f32.gmra.mxu0 %v802
    %v955 = vpop.f32.mrf.mxu0
    %v956 = vadd.f32 %v879, %v955
    %957 = vmatmul.f32.gmra.mxu0 %v805
    %v958 = vpop.f32.mrf.mxu0
    %v959 = vadd.f32 %v882, %v958
    %960 = vmatmul.f32.gmra.mxu0 %v808
    %v961 = vpop.f32.mrf.mxu0
    %v962 = vadd.f32 %v885, %v961
    %963 = vmatmul.f32.gmra.mxu0 %v811
    %v964 = vpop.f32.mrf.mxu0
    %v965 = vadd.f32 %v888, %v964
    %966 = vmatmul.f32.gmra.mxu0 %v814
    %v967 = vpop.f32.mrf.mxu0
    %v968 = vadd.f32 %v891, %v967
    %969 = vdwg.mxu0
    %v971 = vsel %vm755, %v716, 0
    %v974 = vsel %vm755, %v718, 0
    %v977 = vsel %vm755, %v720, 0
    %v980 = vsel %vm755, %v722, 0
    %v983 = vsel %vm755, %v724, 0
    %v986 = vsel %vm755, %v726, 0
    %v989 = vsel %vm755, %v728, 0
    %v992 = vsel %vm755, %v730, 0
    %v995 = vsel %vm755, %v732, 0
    %v998 = vsel %vm755, %v734, 0
    %v1001 = vsel %vm755, %v736, 0
    %v1004 = vsel %vm755, %v738, 0
    %v1007 = vsel %vm755, %v740, 0
    %v1010 = vsel %vm755, %v742, 0
    %v1013 = vsel %vm755, %v744, 0
    %v1016 = vsel %vm755, %v746, 0
    %v1019 = vsel %vm755, %v748, 0
    %v1022 = vsel %vm755, %v750, 0
    %v1025 = vsel %vm755, %v752, 0
    %v1028 = vsel %vm755, %v754, 0
    %1030 = vmatpush.msra.mxu0 %v126
    %1031 = vmatpush.msra.mxu0 %v125
    %1032 = vmatpush.msra.mxu0 %v124
    %1033 = vmatpush.msra.mxu0 %v123
    %1034 = vmatpush.msra.mxu0 %v122
    %1035 = vmatpush.msra.mxu0 %v121
    %1036 = vmatpush.msra.mxu0 %v120
    %1037 = vmatpush.msra.mxu0 %v119
    %1038 = vmatpush.msra.mxu0 %v118
    %1039 = vmatpush.msra.mxu0 %v117
    %1040 = vmatpush.msra.mxu0 %v116
    %1041 = vmatpush.msra.mxu0 %v115
    %1042 = vmatpush.msra.mxu0 %v114
    %1043 = vmatpush.msra.mxu0 %v113
    %1044 = vmatpush.msra.mxu0 %v112
    %1045 = vmatpush.msra.mxu0 %v111
    %1046 = vmatmul.f32.gmra.mxu0 %v715
    %v1047 = vpop.f32.mrf.mxu0
    %v1048 = vadd.f32 0.0, %v1047
    %1049 = vmatmul.f32.gmra.mxu0 %v717
    %v1050 = vpop.f32.mrf.mxu0
    %v1051 = vadd.f32 0.0, %v1050
    %1052 = vmatmul.f32.gmra.mxu0 %v719
    %v1053 = vpop.f32.mrf.mxu0
    %v1054 = vadd.f32 0.0, %v1053
    %1055 = vmatmul.f32.gmra.mxu0 %v721
    %v1056 = vpop.f32.mrf.mxu0
    %v1057 = vadd.f32 0.0, %v1056
    %1058 = vmatmul.f32.gmra.mxu0 %v723
    %v1059 = vpop.f32.mrf.mxu0
    %v1060 = vadd.f32 0.0, %v1059
    %1061 = vmatmul.f32.gmra.mxu0 %v725
    %v1062 = vpop.f32.mrf.mxu0
    %v1063 = vadd.f32 0.0, %v1062
    %1064 = vmatmul.f32.gmra.mxu0 %v727
    %v1065 = vpop.f32.mrf.mxu0
    %v1066 = vadd.f32 0.0, %v1065
    %1067 = vmatmul.f32.gmra.mxu0 %v729
    %v1068 = vpop.f32.mrf.mxu0
    %v1069 = vadd.f32 0.0, %v1068
    %1070 = vmatmul.f32.gmra.mxu0 %v731
    %v1071 = vpop.f32.mrf.mxu0
    %v1072 = vadd.f32 0.0, %v1071
    %1073 = vmatmul.f32.gmra.mxu0 %v733
    %v1074 = vpop.f32.mrf.mxu0
    %v1075 = vadd.f32 0.0, %v1074
    %1076 = vmatmul.f32.gmra.mxu0 %v735
    %v1077 = vpop.f32.mrf.mxu0
    %v1078 = vadd.f32 0.0, %v1077
    %1079 = vmatmul.f32.gmra.mxu0 %v737
    %v1080 = vpop.f32.mrf.mxu0
    %v1081 = vadd.f32 0.0, %v1080
    %1082 = vmatmul.f32.gmra.mxu0 %v739
    %v1083 = vpop.f32.mrf.mxu0
    %v1084 = vadd.f32 0.0, %v1083
    %1085 = vmatmul.f32.gmra.mxu0 %v741
    %v1086 = vpop.f32.mrf.mxu0
    %v1087 = vadd.f32 0.0, %v1086
    %1088 = vmatmul.f32.gmra.mxu0 %v743
    %v1089 = vpop.f32.mrf.mxu0
    %v1090 = vadd.f32 0.0, %v1089
    %1091 = vmatmul.f32.gmra.mxu0 %v745
    %v1092 = vpop.f32.mrf.mxu0
    %v1093 = vadd.f32 0.0, %v1092
    %1094 = vmatmul.f32.gmra.mxu0 %v747
    %v1095 = vpop.f32.mrf.mxu0
    %v1096 = vadd.f32 0.0, %v1095
    %1097 = vmatmul.f32.gmra.mxu0 %v749
    %v1098 = vpop.f32.mrf.mxu0
    %v1099 = vadd.f32 0.0, %v1098
    %1100 = vmatmul.f32.gmra.mxu0 %v751
    %v1101 = vpop.f32.mrf.mxu0
    %v1102 = vadd.f32 0.0, %v1101
    %1103 = vmatmul.f32.gmra.mxu0 %v753
    %v1104 = vpop.f32.mrf.mxu0
    %v1105 = vadd.f32 0.0, %v1104
    %1106 = vdwg.mxu0
    %1107 = vmatpush.msra.mxu0 0.0
    %1108 = vmatpush.msra.mxu0 0.0
    %1109 = vmatpush.msra.mxu0 0.0
    %1110 = vmatpush.msra.mxu0 0.0
    %1111 = vmatpush.msra.mxu0 0.0
    %1112 = vmatpush.msra.mxu0 0.0
    %1113 = vmatpush.msra.mxu0 0.0
    %1114 = vmatpush.msra.mxu0 0.0
    %1115 = vmatpush.msra.mxu0 0.0
    %1116 = vmatpush.msra.mxu0 0.0
    %1117 = vmatpush.msra.mxu0 0.0
    %1118 = vmatpush.msra.mxu0 0.0
    %1119 = vmatpush.msra.mxu0 %v130
    %1120 = vmatpush.msra.mxu0 %v129
    %1121 = vmatpush.msra.mxu0 %v128
    %1122 = vmatpush.msra.mxu0 %v127
    %1123 = vmatmul.f32.gmra.mxu0 %v971
    %v1124 = vpop.f32.mrf.mxu0
    %v1125 = vadd.f32 %v1048, %v1124
    %1126 = vmatmul.f32.gmra.mxu0 %v974
    %v1127 = vpop.f32.mrf.mxu0
    %v1128 = vadd.f32 %v1051, %v1127
    %1129 = vmatmul.f32.gmra.mxu0 %v977
    %v1130 = vpop.f32.mrf.mxu0
    %v1131 = vadd.f32 %v1054, %v1130
    %1132 = vmatmul.f32.gmra.mxu0 %v980
    %v1133 = vpop.f32.mrf.mxu0
    %v1134 = vadd.f32 %v1057, %v1133
    %1135 = vmatmul.f32.gmra.mxu0 %v983
    %v1136 = vpop.f32.mrf.mxu0
    %v1137 = vadd.f32 %v1060, %v1136
    %1138 = vmatmul.f32.gmra.mxu0 %v986
    %v1139 = vpop.f32.mrf.mxu0
    %v1140 = vadd.f32 %v1063, %v1139
    %1141 = vmatmul.f32.gmra.mxu0 %v989
    %v1142 = vpop.f32.mrf.mxu0
    %v1143 = vadd.f32 %v1066, %v1142
    %1144 = vmatmul.f32.gmra.mxu0 %v992
    %v1145 = vpop.f32.mrf.mxu0
    %v1146 = vadd.f32 %v1069, %v1145
    %1147 = vmatmul.f32.gmra.mxu0 %v995
    %v1148 = vpop.f32.mrf.mxu0
    %v1149 = vadd.f32 %v1072, %v1148
    %1150 = vmatmul.f32.gmra.mxu0 %v998
    %v1151 = vpop.f32.mrf.mxu0
    %v1152 = vadd.f32 %v1075, %v1151
    %1153 = vmatmul.f32.gmra.mxu0 %v1001
    %v1154 = vpop.f32.mrf.mxu0
    %v1155 = vadd.f32 %v1078, %v1154
    %1156 = vmatmul.f32.gmra.mxu0 %v1004
    %v1157 = vpop.f32.mrf.mxu0
    %v1158 = vadd.f32 %v1081, %v1157
    %1159 = vmatmul.f32.gmra.mxu0 %v1007
    %v1160 = vpop.f32.mrf.mxu0
    %v1161 = vadd.f32 %v1084, %v1160
    %1162 = vmatmul.f32.gmra.mxu0 %v1010
    %v1163 = vpop.f32.mrf.mxu0
    %v1164 = vadd.f32 %v1087, %v1163
    %1165 = vmatmul.f32.gmra.mxu0 %v1013
    %v1166 = vpop.f32.mrf.mxu0
    %v1167 = vadd.f32 %v1090, %v1166
    %1168 = vmatmul.f32.gmra.mxu0 %v1016
    %v1169 = vpop.f32.mrf.mxu0
    %v1170 = vadd.f32 %v1093, %v1169
    %1171 = vmatmul.f32.gmra.mxu0 %v1019
    %v1172 = vpop.f32.mrf.mxu0
    %v1173 = vadd.f32 %v1096, %v1172
    %1174 = vmatmul.f32.gmra.mxu0 %v1022
    %v1175 = vpop.f32.mrf.mxu0
    %v1176 = vadd.f32 %v1099, %v1175
    %1177 = vmatmul.f32.gmra.mxu0 %v1025
    %v1178 = vpop.f32.mrf.mxu0
    %v1179 = vadd.f32 %v1102, %v1178
    %1180 = vmatmul.f32.gmra.mxu0 %v1028
    %v1181 = vpop.f32.mrf.mxu0
    %v1182 = vadd.f32 %v1105, %v1181
    %1183 = vdwg.mxu0
    %v1184 = vld [vmem:[%s3] sm:$0x1]
    %1186 = vset.pattern.permute.xlu0 0
    %1187 = vperm.xlu0 %1186, %v911
    %v1188 = vpop.permute.xlu0 %1187
    %1191 = vset.pattern.permute.xlu0 0
    %1192 = vperm.xlu0 %1191, %v914
    %v1193 = vpop.permute.xlu0 %1192
    %1196 = vset.pattern.permute.xlu0 0
    %1197 = vperm.xlu0 %1196, %v917
    %v1198 = vpop.permute.xlu0 %1197
    %1201 = vset.pattern.permute.xlu0 0
    %1202 = vperm.xlu0 %1201, %v920
    %v1203 = vpop.permute.xlu0 %1202
    %1206 = vset.pattern.permute.xlu0 0
    %1207 = vperm.xlu0 %1206, %v923
    %v1208 = vpop.permute.xlu0 %1207
    %1211 = vset.pattern.permute.xlu0 0
    %1212 = vperm.xlu0 %1211, %v926
    %v1213 = vpop.permute.xlu0 %1212
    %1216 = vset.pattern.permute.xlu0 0
    %1217 = vperm.xlu0 %1216, %v929
    %v1218 = vpop.permute.xlu0 %1217
    %1221 = vset.pattern.permute.xlu0 0
    %1222 = vperm.xlu0 %1221, %v932
    %v1223 = vpop.permute.xlu0 %1222
    %1226 = vset.pattern.permute.xlu0 0
    %1227 = vperm.xlu0 %1226, %v935
    %v1228 = vpop.permute.xlu0 %1227
    %1231 = vset.pattern.permute.xlu0 0
    %1232 = vperm.xlu0 %1231, %v938
    %v1233 = vpop.permute.xlu0 %1232
    %1236 = vset.pattern.permute.xlu0 0
    %1237 = vperm.xlu0 %1236, %v941
    %v1238 = vpop.permute.xlu0 %1237
    %1241 = vset.pattern.permute.xlu0 0
    %1242 = vperm.xlu0 %1241, %v944
    %v1243 = vpop.permute.xlu0 %1242
    %1246 = vset.pattern.permute.xlu0 0
    %1247 = vperm.xlu0 %1246, %v947
    %v1248 = vpop.permute.xlu0 %1247
    %1251 = vset.pattern.permute.xlu0 0
    %1252 = vperm.xlu0 %1251, %v950
    %v1253 = vpop.permute.xlu0 %1252
    %1256 = vset.pattern.permute.xlu0 0
    %1257 = vperm.xlu0 %1256, %v953
    %v1258 = vpop.permute.xlu0 %1257
    %1261 = vset.pattern.permute.xlu0 0
    %1262 = vperm.xlu0 %1261, %v956
    %v1263 = vpop.permute.xlu0 %1262
    %1266 = vset.pattern.permute.xlu0 0
    %1267 = vperm.xlu0 %1266, %v959
    %v1268 = vpop.permute.xlu0 %1267
    %1271 = vset.pattern.permute.xlu0 0
    %1272 = vperm.xlu0 %1271, %v962
    %v1273 = vpop.permute.xlu0 %1272
    %1276 = vset.pattern.permute.xlu0 0
    %1277 = vperm.xlu0 %1276, %v965
    %v1278 = vpop.permute.xlu0 %1277
    %1281 = vset.pattern.permute.xlu0 0
    %1282 = vperm.xlu0 %1281, %v968
    %v1283 = vpop.permute.xlu0 %1282
    %v1286 = vperm.slane %v1184, 0
    %v1288 = vmul.f32 %v1188, %v1286
    %v1289 = vmul.f32 %v1193, %v1286
    %v1290 = vmul.f32 %v1198, %v1286
    %v1291 = vmul.f32 %v1203, %v1286
    %v1292 = vmul.f32 %v1208, %v1286
    %v1293 = vmul.f32 %v1213, %v1286
    %v1294 = vmul.f32 %v1218, %v1286
    %v1295 = vmul.f32 %v1223, %v1286
    %v1296 = vmul.f32 %v1228, %v1286
    %v1297 = vmul.f32 %v1233, %v1286
    %v1298 = vmul.f32 %v1238, %v1286
    %v1299 = vmul.f32 %v1243, %v1286
    %v1300 = vmul.f32 %v1248, %v1286
    %v1301 = vmul.f32 %v1253, %v1286
    %v1302 = vmul.f32 %v1258, %v1286
    %v1303 = vmul.f32 %v1263, %v1286
    %v1304 = vmul.f32 %v1268, %v1286
    %v1305 = vmul.f32 %v1273, %v1286
    %v1306 = vmul.f32 %v1278, %v1286
    %v1307 = vmul.f32 %v1283, %v1286
    %s1308 = scalar_lea.vmem %s3, 1
    %v1309 = vld [vmem:[%s1308] sm:$0x1]
    %1311 = vset.pattern.permute.xlu0 0
    %1312 = vperm.xlu0 %1311, %v111
    %v1313 = vpop.permute.xlu0 %1312
    %1316 = vset.pattern.permute.xlu0 0
    %1317 = vperm.xlu0 %1316, %v112
    %v1318 = vpop.permute.xlu0 %1317
    %1321 = vset.pattern.permute.xlu0 0
    %1322 = vperm.xlu0 %1321, %v113
    %v1323 = vpop.permute.xlu0 %1322
    %1326 = vset.pattern.permute.xlu0 0
    %1327 = vperm.xlu0 %1326, %v114
    %v1328 = vpop.permute.xlu0 %1327
    %1331 = vset.pattern.permute.xlu0 0
    %1332 = vperm.xlu0 %1331, %v115
    %v1333 = vpop.permute.xlu0 %1332
    %1336 = vset.pattern.permute.xlu0 0
    %1337 = vperm.xlu0 %1336, %v116
    %v1338 = vpop.permute.xlu0 %1337
    %1341 = vset.pattern.permute.xlu0 0
    %1342 = vperm.xlu0 %1341, %v117
    %v1343 = vpop.permute.xlu0 %1342
    %1346 = vset.pattern.permute.xlu0 0
    %1347 = vperm.xlu0 %1346, %v118
    %v1348 = vpop.permute.xlu0 %1347
    %1351 = vset.pattern.permute.xlu0 0
    %1352 = vperm.xlu0 %1351, %v119
    %v1353 = vpop.permute.xlu0 %1352
    %1356 = vset.pattern.permute.xlu0 0
    %1357 = vperm.xlu0 %1356, %v120
    %v1358 = vpop.permute.xlu0 %1357
    %1361 = vset.pattern.permute.xlu0 0
    %1362 = vperm.xlu0 %1361, %v121
    %v1363 = vpop.permute.xlu0 %1362
    %1366 = vset.pattern.permute.xlu0 0
    %1367 = vperm.xlu0 %1366, %v122
    %v1368 = vpop.permute.xlu0 %1367
    %1371 = vset.pattern.permute.xlu0 0
    %1372 = vperm.xlu0 %1371, %v123
    %v1373 = vpop.permute.xlu0 %1372
    %1376 = vset.pattern.permute.xlu0 0
    %1377 = vperm.xlu0 %1376, %v124
    %v1378 = vpop.permute.xlu0 %1377
    %1381 = vset.pattern.permute.xlu0 0
    %1382 = vperm.xlu0 %1381, %v125
    %v1383 = vpop.permute.xlu0 %1382
    %1386 = vset.pattern.permute.xlu0 0
    %1387 = vperm.xlu0 %1386, %v126
    %v1388 = vpop.permute.xlu0 %1387
    %1391 = vset.pattern.permute.xlu0 0
    %1392 = vperm.xlu0 %1391, %v127
    %v1393 = vpop.permute.xlu0 %1392
    %1396 = vset.pattern.permute.xlu0 0
    %1397 = vperm.xlu0 %1396, %v128
    %v1398 = vpop.permute.xlu0 %1397
    %1401 = vset.pattern.permute.xlu0 0
    %1402 = vperm.xlu0 %1401, %v129
    %v1403 = vpop.permute.xlu0 %1402
    %1406 = vset.pattern.permute.xlu0 0
    %1407 = vperm.xlu0 %1406, %v130
    %v1408 = vpop.permute.xlu0 %1407
    %v1411 = vperm.slane %v1309, 0
    %v1413 = vmul.f32 %v1313, %v1411
    %v1414 = vmul.f32 %v1318, %v1411
    %v1415 = vmul.f32 %v1323, %v1411
    %v1416 = vmul.f32 %v1328, %v1411
    %v1417 = vmul.f32 %v1333, %v1411
    %v1418 = vmul.f32 %v1338, %v1411
    %v1419 = vmul.f32 %v1343, %v1411
    %v1420 = vmul.f32 %v1348, %v1411
    %v1421 = vmul.f32 %v1353, %v1411
    %v1422 = vmul.f32 %v1358, %v1411
    %v1423 = vmul.f32 %v1363, %v1411
    %v1424 = vmul.f32 %v1368, %v1411
    %v1425 = vmul.f32 %v1373, %v1411
    %v1426 = vmul.f32 %v1378, %v1411
    %v1427 = vmul.f32 %v1383, %v1411
    %v1428 = vmul.f32 %v1388, %v1411
    %v1429 = vmul.f32 %v1393, %v1411
    %v1430 = vmul.f32 %v1398, %v1411
    %v1431 = vmul.f32 %v1403, %v1411
    %v1432 = vmul.f32 %v1408, %v1411
    %v1433 = vadd.f32 %v1288, %v1413
    %v1434 = vadd.f32 %v1289, %v1414
    %v1435 = vadd.f32 %v1290, %v1415
    %v1436 = vadd.f32 %v1291, %v1416
    %v1437 = vadd.f32 %v1292, %v1417
    %v1438 = vadd.f32 %v1293, %v1418
    %v1439 = vadd.f32 %v1294, %v1419
    %v1440 = vadd.f32 %v1295, %v1420
    %v1441 = vadd.f32 %v1296, %v1421
    %v1442 = vadd.f32 %v1297, %v1422
    %v1443 = vadd.f32 %v1298, %v1423
    %v1444 = vadd.f32 %v1299, %v1424
    %v1445 = vadd.f32 %v1300, %v1425
    %v1446 = vadd.f32 %v1301, %v1426
    %v1447 = vadd.f32 %v1302, %v1427
    %v1448 = vadd.f32 %v1303, %v1428
    %v1449 = vadd.f32 %v1304, %v1429
    %v1450 = vadd.f32 %v1305, %v1430
    %v1451 = vadd.f32 %v1306, %v1431
    %v1452 = vadd.f32 %v1307, %v1432
    %s1453 = scalar_lea.vmem %s3, 2
    %v1454 = vld [vmem:[%s1453] sm:$0x1]
    %1456 = vset.pattern.permute.xlu0 0
    %1457 = vperm.xlu0 %1456, %v1125
    %v1458 = vpop.permute.xlu0 %1457
    %1461 = vset.pattern.permute.xlu0 0
    %1462 = vperm.xlu0 %1461, %v1128
    %v1463 = vpop.permute.xlu0 %1462
    %1466 = vset.pattern.permute.xlu0 0
    %1467 = vperm.xlu0 %1466, %v1131
    %v1468 = vpop.permute.xlu0 %1467
    %1471 = vset.pattern.permute.xlu0 0
    %1472 = vperm.xlu0 %1471, %v1134
    %v1473 = vpop.permute.xlu0 %1472
    %1476 = vset.pattern.permute.xlu0 0
    %1477 = vperm.xlu0 %1476, %v1137
    %v1478 = vpop.permute.xlu0 %1477
    %1481 = vset.pattern.permute.xlu0 0
    %1482 = vperm.xlu0 %1481, %v1140
    %v1483 = vpop.permute.xlu0 %1482
    %1486 = vset.pattern.permute.xlu0 0
    %1487 = vperm.xlu0 %1486, %v1143
    %v1488 = vpop.permute.xlu0 %1487
    %1491 = vset.pattern.permute.xlu0 0
    %1492 = vperm.xlu0 %1491, %v1146
    %v1493 = vpop.permute.xlu0 %1492
    %1496 = vset.pattern.permute.xlu0 0
    %1497 = vperm.xlu0 %1496, %v1149
    %v1498 = vpop.permute.xlu0 %1497
    %1501 = vset.pattern.permute.xlu0 0
    %1502 = vperm.xlu0 %1501, %v1152
    %v1503 = vpop.permute.xlu0 %1502
    %1506 = vset.pattern.permute.xlu0 0
    %1507 = vperm.xlu0 %1506, %v1155
    %v1508 = vpop.permute.xlu0 %1507
    %1511 = vset.pattern.permute.xlu0 0
    %1512 = vperm.xlu0 %1511, %v1158
    %v1513 = vpop.permute.xlu0 %1512
    %1516 = vset.pattern.permute.xlu0 0
    %1517 = vperm.xlu0 %1516, %v1161
    %v1518 = vpop.permute.xlu0 %1517
    %1521 = vset.pattern.permute.xlu0 0
    %1522 = vperm.xlu0 %1521, %v1164
    %v1523 = vpop.permute.xlu0 %1522
    %1526 = vset.pattern.permute.xlu0 0
    %1527 = vperm.xlu0 %1526, %v1167
    %v1528 = vpop.permute.xlu0 %1527
    %1531 = vset.pattern.permute.xlu0 0
    %1532 = vperm.xlu0 %1531, %v1170
    %v1533 = vpop.permute.xlu0 %1532
    %1536 = vset.pattern.permute.xlu0 0
    %1537 = vperm.xlu0 %1536, %v1173
    %v1538 = vpop.permute.xlu0 %1537
    %1541 = vset.pattern.permute.xlu0 0
    %1542 = vperm.xlu0 %1541, %v1176
    %v1543 = vpop.permute.xlu0 %1542
    %1546 = vset.pattern.permute.xlu0 0
    %1547 = vperm.xlu0 %1546, %v1179
    %v1548 = vpop.permute.xlu0 %1547
    %1551 = vset.pattern.permute.xlu0 0
    %1552 = vperm.xlu0 %1551, %v1182
    %v1553 = vpop.permute.xlu0 %1552
    %v1556 = vperm.slane %v1454, 0
    %v1558 = vmul.f32 %v1458, %v1556
    %v1559 = vmul.f32 %v1463, %v1556
    %v1560 = vmul.f32 %v1468, %v1556
    %v1561 = vmul.f32 %v1473, %v1556
    %v1562 = vmul.f32 %v1478, %v1556
    %v1563 = vmul.f32 %v1483, %v1556
    %v1564 = vmul.f32 %v1488, %v1556
    %v1565 = vmul.f32 %v1493, %v1556
    %v1566 = vmul.f32 %v1498, %v1556
    %v1567 = vmul.f32 %v1503, %v1556
    %v1568 = vmul.f32 %v1508, %v1556
    %v1569 = vmul.f32 %v1513, %v1556
    %v1570 = vmul.f32 %v1518, %v1556
    %v1571 = vmul.f32 %v1523, %v1556
    %v1572 = vmul.f32 %v1528, %v1556
    %v1573 = vmul.f32 %v1533, %v1556
    %v1574 = vmul.f32 %v1538, %v1556
    %v1575 = vmul.f32 %v1543, %v1556
    %v1576 = vmul.f32 %v1548, %v1556
    %v1577 = vmul.f32 %v1553, %v1556
    %v1578 = vadd.f32 %v1433, %v1558
    %v1579 = vadd.f32 %v1434, %v1559
    %v1580 = vadd.f32 %v1435, %v1560
    %v1581 = vadd.f32 %v1436, %v1561
    %v1582 = vadd.f32 %v1437, %v1562
    %v1583 = vadd.f32 %v1438, %v1563
    %v1584 = vadd.f32 %v1439, %v1564
    %v1585 = vadd.f32 %v1440, %v1565
    %v1586 = vadd.f32 %v1441, %v1566
    %v1587 = vadd.f32 %v1442, %v1567
    %v1588 = vadd.f32 %v1443, %v1568
    %v1589 = vadd.f32 %v1444, %v1569
    %v1590 = vadd.f32 %v1445, %v1570
    %v1591 = vadd.f32 %v1446, %v1571
    %v1592 = vadd.f32 %v1447, %v1572
    %v1593 = vadd.f32 %v1448, %v1573
    %v1594 = vadd.f32 %v1449, %v1574
    %v1595 = vadd.f32 %v1450, %v1575
    %v1596 = vadd.f32 %v1451, %v1576
    %v1597 = vadd.f32 %v1452, %v1577
    %v1598 = vld [vmem:[%s4] sm:$0x1]
    %v1600 = vperm.slane %v1598, 0
    %v1602 = vadd.f32 %v1578, %v1600
    %v1603 = vadd.f32 %v1579, %v1600
    %v1604 = vadd.f32 %v1580, %v1600
    %v1605 = vadd.f32 %v1581, %v1600
    %v1606 = vadd.f32 %v1582, %v1600
    %v1607 = vadd.f32 %v1583, %v1600
    %v1608 = vadd.f32 %v1584, %v1600
    %v1609 = vadd.f32 %v1585, %v1600
    %v1610 = vadd.f32 %v1586, %v1600
    %v1611 = vadd.f32 %v1587, %v1600
    %v1612 = vadd.f32 %v1588, %v1600
    %v1613 = vadd.f32 %v1589, %v1600
    %v1614 = vadd.f32 %v1590, %v1600
    %v1615 = vadd.f32 %v1591, %v1600
    %v1616 = vadd.f32 %v1592, %v1600
    %v1617 = vadd.f32 %v1593, %v1600
    %v1618 = vadd.f32 %v1594, %v1600
    %v1619 = vadd.f32 %v1595, %v1600
    %v1620 = vadd.f32 %v1596, %v1600
    %v1621 = vadd.f32 %v1597, %v1600
    %v1622 = vmax.f32 %v1602, 0.0
    %v1623 = vmax.f32 %v1603, 0.0
    %v1624 = vmax.f32 %v1604, 0.0
    %v1625 = vmax.f32 %v1605, 0.0
    %v1626 = vmax.f32 %v1606, 0.0
    %v1627 = vmax.f32 %v1607, 0.0
    %v1628 = vmax.f32 %v1608, 0.0
    %v1629 = vmax.f32 %v1609, 0.0
    %v1630 = vmax.f32 %v1610, 0.0
    %v1631 = vmax.f32 %v1611, 0.0
    %v1632 = vmax.f32 %v1612, 0.0
    %v1633 = vmax.f32 %v1613, 0.0
    %v1634 = vmax.f32 %v1614, 0.0
    %v1635 = vmax.f32 %v1615, 0.0
    %v1636 = vmax.f32 %v1616, 0.0
    %v1637 = vmax.f32 %v1617, 0.0
    %v1638 = vmax.f32 %v1618, 0.0
    %v1639 = vmax.f32 %v1619, 0.0
    %v1640 = vmax.f32 %v1620, 0.0
    %v1641 = vmax.f32 %v1621, 0.0
    %v1642 = vmul.u32 %v132, 2
    %v1643 = vmul.u32 %v133, 2
    %v1644 = vmul.u32 %v134, 2
    %v1645 = vmul.u32 %v135, 2
    %v1646 = vmul.u32 %v136, 2
    %v1647 = vmul.u32 %v137, 2
    %v1648 = vmul.u32 %v138, 2
    %v1649 = vmul.u32 %v139, 2
    %v1650 = vmul.u32 %v140, 2
    %v1651 = vmul.u32 %v141, 2
    %vm1652 = vcmp.eq.s32.totalorder %v153, %v1642
    %vm1653 = vcmp.eq.s32.totalorder %v154, %v1642
    %vm1654 = vcmp.eq.s32.totalorder %v153, %v1643
    %vm1655 = vcmp.eq.s32.totalorder %v154, %v1643
    %vm1656 = vcmp.eq.s32.totalorder %v153, %v1644
    %vm1657 = vcmp.eq.s32.totalorder %v154, %v1644
    %vm1658 = vcmp.eq.s32.totalorder %v153, %v1645
    %vm1659 = vcmp.eq.s32.totalorder %v154, %v1645
    %vm1660 = vcmp.eq.s32.totalorder %v153, %v1646
    %vm1661 = vcmp.eq.s32.totalorder %v154, %v1646
    %vm1662 = vcmp.eq.s32.totalorder %v153, %v1647
    %vm1663 = vcmp.eq.s32.totalorder %v154, %v1647
    %vm1664 = vcmp.eq.s32.totalorder %v153, %v1648
    %vm1665 = vcmp.eq.s32.totalorder %v154, %v1648
    %vm1666 = vcmp.eq.s32.totalorder %v153, %v1649
    %vm1667 = vcmp.eq.s32.totalorder %v154, %v1649
    %vm1668 = vcmp.eq.s32.totalorder %v153, %v1650
    %vm1669 = vcmp.eq.s32.totalorder %v154, %v1650
    %vm1670 = vcmp.eq.s32.totalorder %v153, %v1651
    %vm1671 = vcmp.eq.s32.totalorder %v154, %v1651
    %v1672 = vsel %vm1652, 1.0, 0.0
    %v1673 = vsel %vm1653, 1.0, 0.0
    %v1674 = vsel %vm1654, 1.0, 0.0
    %v1675 = vsel %vm1655, 1.0, 0.0
    %v1676 = vsel %vm1656, 1.0, 0.0
    %v1677 = vsel %vm1657, 1.0, 0.0
    %v1678 = vsel %vm1658, 1.0, 0.0
    %v1679 = vsel %vm1659, 1.0, 0.0
    %v1680 = vsel %vm1660, 1.0, 0.0
    %v1681 = vsel %vm1661, 1.0, 0.0
    %v1682 = vsel %vm1662, 1.0, 0.0
    %v1683 = vsel %vm1663, 1.0, 0.0
    %v1684 = vsel %vm1664, 1.0, 0.0
    %v1685 = vsel %vm1665, 1.0, 0.0
    %v1686 = vsel %vm1666, 1.0, 0.0
    %v1687 = vsel %vm1667, 1.0, 0.0
    %v1688 = vsel %vm1668, 1.0, 0.0
    %v1689 = vsel %vm1669, 1.0, 0.0
    %v1690 = vsel %vm1670, 1.0, 0.0
    %v1691 = vsel %vm1671, 1.0, 0.0
    %v1692 = vadd.s32 %v1642, 1
    %v1693 = vadd.s32 %v1643, 1
    %v1694 = vadd.s32 %v1644, 1
    %v1695 = vadd.s32 %v1645, 1
    %v1696 = vadd.s32 %v1646, 1
    %v1697 = vadd.s32 %v1647, 1
    %v1698 = vadd.s32 %v1648, 1
    %v1699 = vadd.s32 %v1649, 1
    %v1700 = vadd.s32 %v1650, 1
    %v1701 = vadd.s32 %v1651, 1
    %vm1702 = vcmp.eq.s32.totalorder %v153, %v1692
    %vm1703 = vcmp.eq.s32.totalorder %v154, %v1692
    %vm1704 = vcmp.eq.s32.totalorder %v153, %v1693
    %vm1705 = vcmp.eq.s32.totalorder %v154, %v1693
    %vm1706 = vcmp.eq.s32.totalorder %v153, %v1694
    %vm1707 = vcmp.eq.s32.totalorder %v154, %v1694
    %vm1708 = vcmp.eq.s32.totalorder %v153, %v1695
    %vm1709 = vcmp.eq.s32.totalorder %v154, %v1695
    %vm1710 = vcmp.eq.s32.totalorder %v153, %v1696
    %vm1711 = vcmp.eq.s32.totalorder %v154, %v1696
    %vm1712 = vcmp.eq.s32.totalorder %v153, %v1697
    %vm1713 = vcmp.eq.s32.totalorder %v154, %v1697
    %vm1714 = vcmp.eq.s32.totalorder %v153, %v1698
    %vm1715 = vcmp.eq.s32.totalorder %v154, %v1698
    %vm1716 = vcmp.eq.s32.totalorder %v153, %v1699
    %vm1717 = vcmp.eq.s32.totalorder %v154, %v1699
    %vm1718 = vcmp.eq.s32.totalorder %v153, %v1700
    %vm1719 = vcmp.eq.s32.totalorder %v154, %v1700
    %vm1720 = vcmp.eq.s32.totalorder %v153, %v1701
    %vm1721 = vcmp.eq.s32.totalorder %v154, %v1701
    %v1722 = vsel %vm1702, 1.0, 0.0
    %v1723 = vsel %vm1703, 1.0, 0.0
    %v1724 = vsel %vm1704, 1.0, 0.0
    %v1725 = vsel %vm1705, 1.0, 0.0
    %v1726 = vsel %vm1706, 1.0, 0.0
    %v1727 = vsel %vm1707, 1.0, 0.0
    %v1728 = vsel %vm1708, 1.0, 0.0
    %v1729 = vsel %vm1709, 1.0, 0.0
    %v1730 = vsel %vm1710, 1.0, 0.0
    %v1731 = vsel %vm1711, 1.0, 0.0
    %v1732 = vsel %vm1712, 1.0, 0.0
    %v1733 = vsel %vm1713, 1.0, 0.0
    %v1734 = vsel %vm1714, 1.0, 0.0
    %v1735 = vsel %vm1715, 1.0, 0.0
    %v1736 = vsel %vm1716, 1.0, 0.0
    %v1737 = vsel %vm1717, 1.0, 0.0
    %v1738 = vsel %vm1718, 1.0, 0.0
    %v1739 = vsel %vm1719, 1.0, 0.0
    %v1740 = vsel %vm1720, 1.0, 0.0
    %v1741 = vsel %vm1721, 1.0, 0.0
    %v1743 = vsel %vm755, %v1673, 0
    %v1746 = vsel %vm755, %v1675, 0
    %v1749 = vsel %vm755, %v1677, 0
    %v1752 = vsel %vm755, %v1679, 0
    %v1755 = vsel %vm755, %v1681, 0
    %v1758 = vsel %vm755, %v1683, 0
    %v1761 = vsel %vm755, %v1685, 0
    %v1764 = vsel %vm755, %v1687, 0
    %v1767 = vsel %vm755, %v1689, 0
    %v1770 = vsel %vm755, %v1691, 0
    %1772 = vmatpush.msra.mxu0 %v1637
    %1773 = vmatpush.msra.mxu0 %v1636
    %1774 = vmatpush.msra.mxu0 %v1635
    %1775 = vmatpush.msra.mxu0 %v1634
    %1776 = vmatpush.msra.mxu0 %v1633
    %1777 = vmatpush.msra.mxu0 %v1632
    %1778 = vmatpush.msra.mxu0 %v1631
    %1779 = vmatpush.msra.mxu0 %v1630
    %1780 = vmatpush.msra.mxu0 %v1629
    %1781 = vmatpush.msra.mxu0 %v1628
    %1782 = vmatpush.msra.mxu0 %v1627
    %1783 = vmatpush.msra.mxu0 %v1626
    %1784 = vmatpush.msra.mxu0 %v1625
    %1785 = vmatpush.msra.mxu0 %v1624
    %1786 = vmatpush.msra.mxu0 %v1623
    %1787 = vmatpush.msra.mxu0 %v1622
    %1788 = vmatmul.f32.gmra.mxu0 %v1672
    %v1789 = vpop.f32.mrf.mxu0
    %v1790 = vadd.f32 0.0, %v1789
    %1791 = vmatmul.f32.gmra.mxu0 %v1674
    %v1792 = vpop.f32.mrf.mxu0
    %v1793 = vadd.f32 0.0, %v1792
    %1794 = vmatmul.f32.gmra.mxu0 %v1676
    %v1795 = vpop.f32.mrf.mxu0
    %v1796 = vadd.f32 0.0, %v1795
    %1797 = vmatmul.f32.gmra.mxu0 %v1678
    %v1798 = vpop.f32.mrf.mxu0
    %v1799 = vadd.f32 0.0, %v1798
    %1800 = vmatmul.f32.gmra.mxu0 %v1680
    %v1801 = vpop.f32.mrf.mxu0
    %v1802 = vadd.f32 0.0, %v1801
    %1803 = vmatmul.f32.gmra.mxu0 %v1682
    %v1804 = vpop.f32.mrf.mxu0
    %v1805 = vadd.f32 0.0, %v1804
    %1806 = vmatmul.f32.gmra.mxu0 %v1684
    %v1807 = vpop.f32.mrf.mxu0
    %v1808 = vadd.f32 0.0, %v1807
    %1809 = vmatmul.f32.gmra.mxu0 %v1686
    %v1810 = vpop.f32.mrf.mxu0
    %v1811 = vadd.f32 0.0, %v1810
    %1812 = vmatmul.f32.gmra.mxu0 %v1688
    %v1813 = vpop.f32.mrf.mxu0
    %v1814 = vadd.f32 0.0, %v1813
    %1815 = vmatmul.f32.gmra.mxu0 %v1690
    %v1816 = vpop.f32.mrf.mxu0
    %v1817 = vadd.f32 0.0, %v1816
    %1818 = vdwg.mxu0
    %1819 = vmatpush.msra.mxu0 0.0
    %1820 = vmatpush.msra.mxu0 0.0
    %1821 = vmatpush.msra.mxu0 0.0
    %1822 = vmatpush.msra.mxu0 0.0
    %1823 = vmatpush.msra.mxu0 0.0
    %1824 = vmatpush.msra.mxu0 0.0
    %1825 = vmatpush.msra.mxu0 0.0
    %1826 = vmatpush.msra.mxu0 0.0
    %1827 = vmatpush.msra.mxu0 0.0
    %1828 = vmatpush.msra.mxu0 0.0
    %1829 = vmatpush.msra.mxu0 0.0
    %1830 = vmatpush.msra.mxu0 0.0
    %1831 = vmatpush.msra.mxu0 %v1641
    %1832 = vmatpush.msra.mxu0 %v1640
    %1833 = vmatpush.msra.mxu0 %v1639
    %1834 = vmatpush.msra.mxu0 %v1638
    %1835 = vmatmul.f32.gmra.mxu0 %v1743
    %v1836 = vpop.f32.mrf.mxu0
    %v1837 = vadd.f32 %v1790, %v1836
    %1838 = vmatmul.f32.gmra.mxu0 %v1746
    %v1839 = vpop.f32.mrf.mxu0
    %v1840 = vadd.f32 %v1793, %v1839
    %1841 = vmatmul.f32.gmra.mxu0 %v1749
    %v1842 = vpop.f32.mrf.mxu0
    %v1843 = vadd.f32 %v1796, %v1842
    %1844 = vmatmul.f32.gmra.mxu0 %v1752
    %v1845 = vpop.f32.mrf.mxu0
    %v1846 = vadd.f32 %v1799, %v1845
    %1847 = vmatmul.f32.gmra.mxu0 %v1755
    %v1848 = vpop.f32.mrf.mxu0
    %v1849 = vadd.f32 %v1802, %v1848
    %1850 = vmatmul.f32.gmra.mxu0 %v1758
    %v1851 = vpop.f32.mrf.mxu0
    %v1852 = vadd.f32 %v1805, %v1851
    %1853 = vmatmul.f32.gmra.mxu0 %v1761
    %v1854 = vpop.f32.mrf.mxu0
    %v1855 = vadd.f32 %v1808, %v1854
    %1856 = vmatmul.f32.gmra.mxu0 %v1764
    %v1857 = vpop.f32.mrf.mxu0
    %v1858 = vadd.f32 %v1811, %v1857
    %1859 = vmatmul.f32.gmra.mxu0 %v1767
    %v1860 = vpop.f32.mrf.mxu0
    %v1861 = vadd.f32 %v1814, %v1860
    %1862 = vmatmul.f32.gmra.mxu0 %v1770
    %v1863 = vpop.f32.mrf.mxu0
    %v1864 = vadd.f32 %v1817, %v1863
    %1865 = vdwg.mxu0
    %v1867 = vsel %vm755, %v1723, 0
    %v1870 = vsel %vm755, %v1725, 0
    %v1873 = vsel %vm755, %v1727, 0
    %v1876 = vsel %vm755, %v1729, 0
    %v1879 = vsel %vm755, %v1731, 0
    %v1882 = vsel %vm755, %v1733, 0
    %v1885 = vsel %vm755, %v1735, 0
    %v1888 = vsel %vm755, %v1737, 0
    %v1891 = vsel %vm755, %v1739, 0
    %v1894 = vsel %vm755, %v1741, 0
    %1896 = vmatpush.msra.mxu0 %v1637
    %1897 = vmatpush.msra.mxu0 %v1636
    %1898 = vmatpush.msra.mxu0 %v1635
    %1899 = vmatpush.msra.mxu0 %v1634
    %1900 = vmatpush.msra.mxu0 %v1633
    %1901 = vmatpush.msra.mxu0 %v1632
    %1902 = vmatpush.msra.mxu0 %v1631
    %1903 = vmatpush.msra.mxu0 %v1630
    %1904 = vmatpush.msra.mxu0 %v1629
    %1905 = vmatpush.msra.mxu0 %v1628
    %1906 = vmatpush.msra.mxu0 %v1627
    %1907 = vmatpush.msra.mxu0 %v1626
    %1908 = vmatpush.msra.mxu0 %v1625
    %1909 = vmatpush.msra.mxu0 %v1624
    %1910 = vmatpush.msra.mxu0 %v1623
    %1911 = vmatpush.msra.mxu0 %v1622
    %1912 = vmatmul.f32.gmra.mxu0 %v1722
    %v1913 = vpop.f32.mrf.mxu0
    %v1914 = vadd.f32 0.0, %v1913
    %1915 = vmatmul.f32.gmra.mxu0 %v1724
    %v1916 = vpop.f32.mrf.mxu0
    %v1917 = vadd.f32 0.0, %v1916
    %1918 = vmatmul.f32.gmra.mxu0 %v1726
    %v1919 = vpop.f32.mrf.mxu0
    %v1920 = vadd.f32 0.0, %v1919
    %1921 = vmatmul.f32.gmra.mxu0 %v1728
    %v1922 = vpop.f32.mrf.mxu0
    %v1923 = vadd.f32 0.0, %v1922
    %1924 = vmatmul.f32.gmra.mxu0 %v1730
    %v1925 = vpop.f32.mrf.mxu0
    %v1926 = vadd.f32 0.0, %v1925
    %1927 = vmatmul.f32.gmra.mxu0 %v1732
    %v1928 = vpop.f32.mrf.mxu0
    %v1929 = vadd.f32 0.0, %v1928
    %1930 = vmatmul.f32.gmra.mxu0 %v1734
    %v1931 = vpop.f32.mrf.mxu0
    %v1932 = vadd.f32 0.0, %v1931
    %1933 = vmatmul.f32.gmra.mxu0 %v1736
    %v1934 = vpop.f32.mrf.mxu0
    %v1935 = vadd.f32 0.0, %v1934
    %1936 = vmatmul.f32.gmra.mxu0 %v1738
    %v1937 = vpop.f32.mrf.mxu0
    %v1938 = vadd.f32 0.0, %v1937
    %1939 = vmatmul.f32.gmra.mxu0 %v1740
    %v1940 = vpop.f32.mrf.mxu0
    %v1941 = vadd.f32 0.0, %v1940
    %1942 = vdwg.mxu0
    %1943 = vmatpush.msra.mxu0 0.0
    %1944 = vmatpush.msra.mxu0 0.0
    %1945 = vmatpush.msra.mxu0 0.0
    %1946 = vmatpush.msra.mxu0 0.0
    %1947 = vmatpush.msra.mxu0 0.0
    %1948 = vmatpush.msra.mxu0 0.0
    %1949 = vmatpush.msra.mxu0 0.0
    %1950 = vmatpush.msra.mxu0 0.0
    %1951 = vmatpush.msra.mxu0 0.0
    %1952 = vmatpush.msra.mxu0 0.0
    %1953 = vmatpush.msra.mxu0 0.0
    %1954 = vmatpush.msra.mxu0 0.0
    %1955 = vmatpush.msra.mxu0 %v1641
    %1956 = vmatpush.msra.mxu0 %v1640
    %1957 = vmatpush.msra.mxu0 %v1639
    %1958 = vmatpush.msra.mxu0 %v1638
    %1959 = vmatmul.f32.gmra.mxu0 %v1867
    %v1960 = vpop.f32.mrf.mxu0
    %v1961 = vadd.f32 %v1914, %v1960
    %1962 = vmatmul.f32.gmra.mxu0 %v1870
    %v1963 = vpop.f32.mrf.mxu0
    %v1964 = vadd.f32 %v1917, %v1963
    %1965 = vmatmul.f32.gmra.mxu0 %v1873
    %v1966 = vpop.f32.mrf.mxu0
    %v1967 = vadd.f32 %v1920, %v1966
    %1968 = vmatmul.f32.gmra.mxu0 %v1876
    %v1969 = vpop.f32.mrf.mxu0
    %v1970 = vadd.f32 %v1923, %v1969
    %1971 = vmatmul.f32.gmra.mxu0 %v1879
    %v1972 = vpop.f32.mrf.mxu0
    %v1973 = vadd.f32 %v1926, %v1972
    %1974 = vmatmul.f32.gmra.mxu0 %v1882
    %v1975 = vpop.f32.mrf.mxu0
    %v1976 = vadd.f32 %v1929, %v1975
    %1977 = vmatmul.f32.gmra.mxu0 %v1885
    %v1978 = vpop.f32.mrf.mxu0
    %v1979 = vadd.f32 %v1932, %v1978
    %1980 = vmatmul.f32.gmra.mxu0 %v1888
    %v1981 = vpop.f32.mrf.mxu0
    %v1982 = vadd.f32 %v1935, %v1981
    %1983 = vmatmul.f32.gmra.mxu0 %v1891
    %v1984 = vpop.f32.mrf.mxu0
    %v1985 = vadd.f32 %v1938, %v1984
    %1986 = vmatmul.f32.gmra.mxu0 %v1894
    %v1987 = vpop.f32.mrf.mxu0
    %v1988 = vadd.f32 %v1941, %v1987
    %1989 = vdwg.mxu0
    %v1990 = vmax.f32 %v1837, %v1961
    %v1991 = vmax.f32 %v1840, %v1964
    %v1992 = vmax.f32 %v1843, %v1967
    %v1993 = vmax.f32 %v1846, %v1970
    %v1994 = vmax.f32 %v1849, %v1973
    %v1995 = vmax.f32 %v1852, %v1976
    %v1996 = vmax.f32 %v1855, %v1979
    %v1997 = vmax.f32 %v1858, %v1982
    %v1998 = vmax.f32 %v1861, %v1985
    %v1999 = vmax.f32 %v1864, %v1988
    %vm2000 = vcmp.eq.s32.totalorder %v132, 19
    %vm2001 = vcmp.eq.s32.totalorder %v133, 19
    %vm2002 = vcmp.eq.s32.totalorder %v134, 19
    %vm2003 = vcmp.eq.s32.totalorder %v135, 19
    %vm2004 = vcmp.eq.s32.totalorder %v136, 19
    %vm2005 = vcmp.eq.s32.totalorder %v137, 19
    %vm2006 = vcmp.eq.s32.totalorder %v138, 19
    %vm2007 = vcmp.eq.s32.totalorder %v139, 19
    %vm2008 = vcmp.eq.s32.totalorder %v140, 19
    %vm2009 = vcmp.eq.s32.totalorder %v141, 19
    %vm2010 = vcmp.eq.s32.totalorder %v132, 20
    %vm2011 = vcmp.eq.s32.totalorder %v133, 20
    %vm2012 = vcmp.eq.s32.totalorder %v134, 20
    %vm2013 = vcmp.eq.s32.totalorder %v135, 20
    %vm2014 = vcmp.eq.s32.totalorder %v136, 20
    %vm2015 = vcmp.eq.s32.totalorder %v137, 20
    %vm2016 = vcmp.eq.s32.totalorder %v138, 20
    %vm2017 = vcmp.eq.s32.totalorder %v139, 20
    %vm2018 = vcmp.eq.s32.totalorder %v140, 20
    %vm2019 = vcmp.eq.s32.totalorder %v141, 20
    %vm2020 = vmor %vm155, %vm2010
    %vm2021 = vmor %vm156, %vm2011
    %vm2022 = vmor %vm157, %vm2012
    %vm2023 = vmor %vm158, %vm2013
    %vm2024 = vmor %vm159, %vm2014
    %vm2025 = vmor %vm160, %vm2015
    %vm2026 = vmor %vm161, %vm2016
    %vm2027 = vmor %vm162, %vm2017
    %vm2028 = vmor %vm163, %vm2018
    %vm2029 = vmor %vm164, %vm2019
    %vm2030 = vmor %vm2000, %vm175
    %vm2031 = vmor %vm2001, %vm176
    %vm2032 = vmor %vm2002, %vm177
    %vm2033 = vmor %vm2003, %vm178
    %vm2034 = vmor %vm2004, %vm179
    %vm2035 = vmor %vm2005, %vm180
    %vm2036 = vmor %vm2006, %vm181
    %vm2037 = vmor %vm2007, %vm182
    %vm2038 = vmor %vm2008, %vm183
    %vm2039 = vmor %vm2009, %vm184
    %vm2040 = vmor %vm2020, %vm195
    %vm2041 = vmor %vm2021, %vm196
    %vm2042 = vmor %vm2022, %vm197
    %vm2043 = vmor %vm2023, %vm198
    %vm2044 = vmor %vm2024, %vm199
    %vm2045 = vmor %vm2025, %vm200
    %vm2046 = vmor %vm2026, %vm201
    %vm2047 = vmor %vm2027, %vm202
    %vm2048 = vmor %vm2028, %vm203
    %vm2049 = vmor %vm2029, %vm204
    %vm2050 = vcmp.eq.s32.totalorder %v132, 59
    %vm2051 = vcmp.eq.s32.totalorder %v133, 59
    %vm2052 = vcmp.eq.s32.totalorder %v134, 59
    %vm2053 = vcmp.eq.s32.totalorder %v135, 59
    %vm2054 = vcmp.eq.s32.totalorder %v136, 59
    %vm2055 = vcmp.eq.s32.totalorder %v137, 59
    %vm2056 = vcmp.eq.s32.totalorder %v138, 59
    %vm2057 = vcmp.eq.s32.totalorder %v139, 59
    %vm2058 = vcmp.eq.s32.totalorder %v140, 59
    %vm2059 = vcmp.eq.s32.totalorder %v141, 59
    %vm2060 = vmor %vm2030, %vm2050
    %vm2061 = vmor %vm2031, %vm2051
    %vm2062 = vmor %vm2032, %vm2052
    %vm2063 = vmor %vm2033, %vm2053
    %vm2064 = vmor %vm2034, %vm2054
    %vm2065 = vmor %vm2035, %vm2055
    %vm2066 = vmor %vm2036, %vm2056
    %vm2067 = vmor %vm2037, %vm2057
    %vm2068 = vmor %vm2038, %vm2058
    %vm2069 = vmor %vm2039, %vm2059
    %vm2070 = vcmp.eq.s32.totalorder %v132, 60
    %vm2071 = vcmp.eq.s32.totalorder %v133, 60
    %vm2072 = vcmp.eq.s32.totalorder %v134, 60
    %vm2073 = vcmp.eq.s32.totalorder %v135, 60
    %vm2074 = vcmp.eq.s32.totalorder %v136, 60
    %vm2075 = vcmp.eq.s32.totalorder %v137, 60
    %vm2076 = vcmp.eq.s32.totalorder %v138, 60
    %vm2077 = vcmp.eq.s32.totalorder %v139, 60
    %vm2078 = vcmp.eq.s32.totalorder %v140, 60
    %vm2079 = vcmp.eq.s32.totalorder %v141, 60
    %vm2080 = vmor %vm2040, %vm2070
    %vm2081 = vmor %vm2041, %vm2071
    %vm2082 = vmor %vm2042, %vm2072
    %vm2083 = vmor %vm2043, %vm2073
    %vm2084 = vmor %vm2044, %vm2074
    %vm2085 = vmor %vm2045, %vm2075
    %vm2086 = vmor %vm2046, %vm2076
    %vm2087 = vmor %vm2047, %vm2077
    %vm2088 = vmor %vm2048, %vm2078
    %vm2089 = vmor %vm2049, %vm2079
    %vm2090 = vmor %vm2060, %vm235
    %vm2091 = vmor %vm2061, %vm236
    %vm2092 = vmor %vm2062, %vm237
    %vm2093 = vmor %vm2063, %vm238
    %vm2094 = vmor %vm2064, %vm239
    %vm2095 = vmor %vm2065, %vm240
    %vm2096 = vmor %vm2066, %vm241
    %vm2097 = vmor %vm2067, %vm242
    %vm2098 = vmor %vm2068, %vm243
    %vm2099 = vmor %vm2069, %vm244
    %vm2100 = vmxor %vm2080, 1
    %vm2101 = vmxor %vm2081, 1
    %vm2102 = vmxor %vm2082, 1
    %vm2103 = vmxor %vm2083, 1
    %vm2104 = vmxor %vm2084, 1
    %vm2105 = vmxor %vm2085, 1
    %vm2106 = vmxor %vm2086, 1
    %vm2107 = vmxor %vm2087, 1
    %vm2108 = vmxor %vm2088, 1
    %vm2109 = vmxor %vm2089, 1
    %vm2110 = vmand %vm455, %vm2100
    %vm2111 = vmand %vm457, %vm2101
    %vm2112 = vmand %vm459, %vm2102
    %vm2113 = vmand %vm461, %vm2103
    %vm2114 = vmand %vm463, %vm2104
    %vm2115 = vmand %vm465, %vm2105
    %vm2116 = vmand %vm467, %vm2106
    %vm2117 = vmand %vm469, %vm2107
    %vm2118 = vmand %vm471, %vm2108
    %vm2119 = vmand %vm473, %vm2109
    %v2120 = vsel %vm2110, 1.0, 0.0
    %v2121 = vsel %vm2111, 1.0, 0.0
    %v2122 = vsel %vm2112, 1.0, 0.0
    %v2123 = vsel %vm2113, 1.0, 0.0
    %v2124 = vsel %vm2114, 1.0, 0.0
    %v2125 = vsel %vm2115, 1.0, 0.0
    %v2126 = vsel %vm2116, 1.0, 0.0
    %v2127 = vsel %vm2117, 1.0, 0.0
    %v2128 = vsel %vm2118, 1.0, 0.0
    %v2129 = vsel %vm2119, 1.0, 0.0
    %vm2130 = vmxor %vm2090, 1
    %vm2131 = vmxor %vm2091, 1
    %vm2132 = vmxor %vm2092, 1
    %vm2133 = vmxor %vm2093, 1
    %vm2134 = vmxor %vm2094, 1
    %vm2135 = vmxor %vm2095, 1
    %vm2136 = vmxor %vm2096, 1
    %vm2137 = vmxor %vm2097, 1
    %vm2138 = vmxor %vm2098, 1
    %vm2139 = vmxor %vm2099, 1
    %vm2140 = vmand %vm615, %vm2130
    %vm2141 = vmand %vm617, %vm2131
    %vm2142 = vmand %vm619, %vm2132
    %vm2143 = vmand %vm621, %vm2133
    %vm2144 = vmand %vm623, %vm2134
    %vm2145 = vmand %vm625, %vm2135
    %vm2146 = vmand %vm627, %vm2136
    %vm2147 = vmand %vm629, %vm2137
    %vm2148 = vmand %vm631, %vm2138
    %vm2149 = vmand %vm633, %vm2139
    %v2150 = vsel %vm2140, 1.0, 0.0
    %v2151 = vsel %vm2141, 1.0, 0.0
    %v2152 = vsel %vm2142, 1.0, 0.0
    %v2153 = vsel %vm2143, 1.0, 0.0
    %v2154 = vsel %vm2144, 1.0, 0.0
    %v2155 = vsel %vm2145, 1.0, 0.0
    %v2156 = vsel %vm2146, 1.0, 0.0
    %v2157 = vsel %vm2147, 1.0, 0.0
    %v2158 = vsel %vm2148, 1.0, 0.0
    %v2159 = vsel %vm2149, 1.0, 0.0
    %vm2160 = vcmask 654336
    %v2162 = vsel %vm2160, %v2120, 0
    %v2165 = vsel %vm2160, %v2121, 0
    %v2168 = vsel %vm2160, %v2122, 0
    %v2171 = vsel %vm2160, %v2123, 0
    %v2174 = vsel %vm2160, %v2124, 0
    %v2177 = vsel %vm2160, %v2125, 0
    %v2180 = vsel %vm2160, %v2126, 0
    %v2183 = vsel %vm2160, %v2127, 0
    %v2186 = vsel %vm2160, %v2128, 0
    %v2189 = vsel %vm2160, %v2129, 0
    %2191 = vmatpush.msra.mxu0 0.0
    %2192 = vmatpush.msra.mxu0 0.0
    %2193 = vmatpush.msra.mxu0 0.0
    %2194 = vmatpush.msra.mxu0 0.0
    %2195 = vmatpush.msra.mxu0 0.0
    %2196 = vmatpush.msra.mxu0 0.0
    %2197 = vmatpush.msra.mxu0 %v1999
    %2198 = vmatpush.msra.mxu0 %v1998
    %2199 = vmatpush.msra.mxu0 %v1997
    %2200 = vmatpush.msra.mxu0 %v1996
    %2201 = vmatpush.msra.mxu0 %v1995
    %2202 = vmatpush.msra.mxu0 %v1994
    %2203 = vmatpush.msra.mxu0 %v1993
    %2204 = vmatpush.msra.mxu0 %v1992
    %2205 = vmatpush.msra.mxu0 %v1991
    %2206 = vmatpush.msra.mxu0 %v1990
    %2207 = vmatmul.f32.gmra.mxu0 %v2162
    %v2208 = vpop.f32.mrf.mxu0
    %v2209 = vadd.f32 0.0, %v2208
    %2210 = vmatmul.f32.gmra.mxu0 %v2165
    %v2211 = vpop.f32.mrf.mxu0
    %v2212 = vadd.f32 0.0, %v2211
    %2213 = vmatmul.f32.gmra.mxu0 %v2168
    %v2214 = vpop.f32.mrf.mxu0
    %v2215 = vadd.f32 0.0, %v2214
    %2216 = vmatmul.f32.gmra.mxu0 %v2171
    %v2217 = vpop.f32.mrf.mxu0
    %v2218 = vadd.f32 0.0, %v2217
    %2219 = vmatmul.f32.gmra.mxu0 %v2174
    %v2220 = vpop.f32.mrf.mxu0
    %v2221 = vadd.f32 0.0, %v2220
    %2222 = vmatmul.f32.gmra.mxu0 %v2177
    %v2223 = vpop.f32.mrf.mxu0
    %v2224 = vadd.f32 0.0, %v2223
    %2225 = vmatmul.f32.gmra.mxu0 %v2180
    %v2226 = vpop.f32.mrf.mxu0
    %v2227 = vadd.f32 0.0, %v2226
    %2228 = vmatmul.f32.gmra.mxu0 %v2183
    %v2229 = vpop.f32.mrf.mxu0
    %v2230 = vadd.f32 0.0, %v2229
    %2231 = vmatmul.f32.gmra.mxu0 %v2186
    %v2232 = vpop.f32.mrf.mxu0
    %v2233 = vadd.f32 0.0, %v2232
    %2234 = vmatmul.f32.gmra.mxu0 %v2189
    %v2235 = vpop.f32.mrf.mxu0
    %v2236 = vadd.f32 0.0, %v2235
    %2237 = vdwg.mxu0
    %v2239 = vsel %vm2160, %v2150, 0
    %v2242 = vsel %vm2160, %v2151, 0
    %v2245 = vsel %vm2160, %v2152, 0
    %v2248 = vsel %vm2160, %v2153, 0
    %v2251 = vsel %vm2160, %v2154, 0
    %v2254 = vsel %vm2160, %v2155, 0
    %v2257 = vsel %vm2160, %v2156, 0
    %v2260 = vsel %vm2160, %v2157, 0
    %v2263 = vsel %vm2160, %v2158, 0
    %v2266 = vsel %vm2160, %v2159, 0
    %2268 = vmatpush.msra.mxu0 0.0
    %2269 = vmatpush.msra.mxu0 0.0
    %2270 = vmatpush.msra.mxu0 0.0
    %2271 = vmatpush.msra.mxu0 0.0
    %2272 = vmatpush.msra.mxu0 0.0
    %2273 = vmatpush.msra.mxu0 0.0
    %2274 = vmatpush.msra.mxu0 %v1999
    %2275 = vmatpush.msra.mxu0 %v1998
    %2276 = vmatpush.msra.mxu0 %v1997
    %2277 = vmatpush.msra.mxu0 %v1996
    %2278 = vmatpush.msra.mxu0 %v1995
    %2279 = vmatpush.msra.mxu0 %v1994
    %2280 = vmatpush.msra.mxu0 %v1993
    %2281 = vmatpush.msra.mxu0 %v1992
    %2282 = vmatpush.msra.mxu0 %v1991
    %2283 = vmatpush.msra.mxu0 %v1990
    %2284 = vmatmul.f32.gmra.mxu0 %v2239
    %v2285 = vpop.f32.mrf.mxu0
    %v2286 = vadd.f32 0.0, %v2285
    %2287 = vmatmul.f32.gmra.mxu0 %v2242
    %v2288 = vpop.f32.mrf.mxu0
    %v2289 = vadd.f32 0.0, %v2288
    %2290 = vmatmul.f32.gmra.mxu0 %v2245
    %v2291 = vpop.f32.mrf.mxu0
    %v2292 = vadd.f32 0.0, %v2291
    %2293 = vmatmul.f32.gmra.mxu0 %v2248
    %v2294 = vpop.f32.mrf.mxu0
    %v2295 = vadd.f32 0.0, %v2294
    %2296 = vmatmul.f32.gmra.mxu0 %v2251
    %v2297 = vpop.f32.mrf.mxu0
    %v2298 = vadd.f32 0.0, %v2297
    %2299 = vmatmul.f32.gmra.mxu0 %v2254
    %v2300 = vpop.f32.mrf.mxu0
    %v2301 = vadd.f32 0.0, %v2300
    %2302 = vmatmul.f32.gmra.mxu0 %v2257
    %v2303 = vpop.f32.mrf.mxu0
    %v2304 = vadd.f32 0.0, %v2303
    %2305 = vmatmul.f32.gmra.mxu0 %v2260
    %v2306 = vpop.f32.mrf.mxu0
    %v2307 = vadd.f32 0.0, %v2306
    %2308 = vmatmul.f32.gmra.mxu0 %v2263
    %v2309 = vpop.f32.mrf.mxu0
    %v2310 = vadd.f32 0.0, %v2309
    %2311 = vmatmul.f32.gmra.mxu0 %v2266
    %v2312 = vpop.f32.mrf.mxu0
    %v2313 = vadd.f32 0.0, %v2312
    %2314 = vdwg.mxu0
    %v2315 = vld [vmem:[%s5] sm:$0xff]
    %v2316 = vld [vmem:[%s5 + $0x8] sm:$0xff]
    %v2317 = vld [vmem:[%s5 + $0x10] sm:$0xff]
    %v2318 = vld [vmem:[%s5 + $0x18] sm:$0xff]
    %s2319 = scalar_lea.vmem %s5, 32
    %v2320 = vld [vmem:[%s2319] sm:$0xff]
    %v2321 = vld [vmem:[%s2319 + $0x8] sm:$0xff]
    %v2322 = vld [vmem:[%s2319 + $0x10] sm:$0xff]
    %v2323 = vld [vmem:[%s2319 + $0x18] sm:$0xff]
    %v2325 = vsel %vm755, %v1990, 0
    %v2328 = vsel %vm755, %v1991, 0
    %v2331 = vsel %vm755, %v1992, 0
    %v2334 = vsel %vm755, %v1993, 0
    %v2337 = vsel %vm755, %v1994, 0
    %v2340 = vsel %vm755, %v1995, 0
    %v2343 = vsel %vm755, %v1996, 0
    %v2346 = vsel %vm755, %v1997, 0
    %v2349 = vsel %vm755, %v1998, 0
    %v2352 = vsel %vm755, %v1999, 0
    %2354 = vmatpush.msra.mxu0 0.0
    %2355 = vmatpush.msra.mxu0 0.0
    %2356 = vmatpush.msra.mxu0 0.0
    %2357 = vmatpush.msra.mxu0 0.0
    %2358 = vmatpush.msra.mxu0 0.0
    %2359 = vmatpush.msra.mxu0 0.0
    %2360 = vmatpush.msra.mxu0 0.0
    %2361 = vmatpush.msra.mxu0 0.0
    %2362 = vmatpush.msra.mxu0 0.0
    %2363 = vmatpush.msra.mxu0 0.0
    %2364 = vmatpush.msra.mxu0 0.0
    %2365 = vmatpush.msra.mxu0 0.0
    %2366 = vmatpush.msra.mxu0 %v2323
    %2367 = vmatpush.msra.mxu0 %v2322
    %2368 = vmatpush.msra.mxu0 %v2321
    %2369 = vmatpush.msra.mxu0 %v2320
    %2370 = vmatmul.f32.gmra.mxu0 %v2325
    %v2371 = vpop.f32.mrf.mxu0
    %v2372 = vadd.f32 0.0, %v2371
    %2373 = vmatmul.f32.gmra.mxu0 %v2328
    %v2374 = vpop.f32.mrf.mxu0
    %v2375 = vadd.f32 0.0, %v2374
    %2376 = vmatmul.f32.gmra.mxu0 %v2331
    %v2377 = vpop.f32.mrf.mxu0
    %v2378 = vadd.f32 0.0, %v2377
    %2379 = vmatmul.f32.gmra.mxu0 %v2334
    %v2380 = vpop.f32.mrf.mxu0
    %v2381 = vadd.f32 0.0, %v2380
    %2382 = vmatmul.f32.gmra.mxu0 %v2337
    %v2383 = vpop.f32.mrf.mxu0
    %v2384 = vadd.f32 0.0, %v2383
    %2385 = vmatmul.f32.gmra.mxu0 %v2340
    %v2386 = vpop.f32.mrf.mxu0
    %v2387 = vadd.f32 0.0, %v2386
    %2388 = vmatmul.f32.gmra.mxu0 %v2343
    %v2389 = vpop.f32.mrf.mxu0
    %v2390 = vadd.f32 0.0, %v2389
    %2391 = vmatmul.f32.gmra.mxu0 %v2346
    %v2392 = vpop.f32.mrf.mxu0
    %v2393 = vadd.f32 0.0, %v2392
    %2394 = vmatmul.f32.gmra.mxu0 %v2349
    %v2395 = vpop.f32.mrf.mxu0
    %v2396 = vadd.f32 0.0, %v2395
    %2397 = vmatmul.f32.gmra.mxu0 %v2352
    %v2398 = vpop.f32.mrf.mxu0
    %v2399 = vadd.f32 0.0, %v2398
    %2400 = vdwg.mxu0
    %v2402 = vsel %vm755, %v2209, 0
    %v2405 = vsel %vm755, %v2212, 0
    %v2408 = vsel %vm755, %v2215, 0
    %v2411 = vsel %vm755, %v2218, 0
    %v2414 = vsel %vm755, %v2221, 0
    %v2417 = vsel %vm755, %v2224, 0
    %v2420 = vsel %vm755, %v2227, 0
    %v2423 = vsel %vm755, %v2230, 0
    %v2426 = vsel %vm755, %v2233, 0
    %v2429 = vsel %vm755, %v2236, 0
    %2431 = vmatpush.msra.mxu0 0.0
    %2432 = vmatpush.msra.mxu0 0.0
    %2433 = vmatpush.msra.mxu0 0.0
    %2434 = vmatpush.msra.mxu0 0.0
    %2435 = vmatpush.msra.mxu0 0.0
    %2436 = vmatpush.msra.mxu0 0.0
    %2437 = vmatpush.msra.mxu0 0.0
    %2438 = vmatpush.msra.mxu0 0.0
    %2439 = vmatpush.msra.mxu0 0.0
    %2440 = vmatpush.msra.mxu0 0.0
    %2441 = vmatpush.msra.mxu0 0.0
    %2442 = vmatpush.msra.mxu0 0.0
    %2443 = vmatpush.msra.mxu0 %v2318
    %2444 = vmatpush.msra.mxu0 %v2317
    %2445 = vmatpush.msra.mxu0 %v2316
    %2446 = vmatpush.msra.mxu0 %v2315
    %2447 = vmatmul.f32.gmra.mxu0 %v2402
    %v2448 = vpop.f32.mrf.mxu0
    %v2449 = vadd.f32 %v2372, %v2448
    %2450 = vmatmul.f32.gmra.mxu0 %v2405
    %v2451 = vpop.f32.mrf.mxu0
    %v2452 = vadd.f32 %v2375, %v2451
    %2453 = vmatmul.f32.gmra.mxu0 %v2408
    %v2454 = vpop.f32.mrf.mxu0
    %v2455 = vadd.f32 %v2378, %v2454
    %2456 = vmatmul.f32.gmra.mxu0 %v2411
    %v2457 = vpop.f32.mrf.mxu0
    %v2458 = vadd.f32 %v2381, %v2457
    %2459 = vmatmul.f32.gmra.mxu0 %v2414
    %v2460 = vpop.f32.mrf.mxu0
    %v2461 = vadd.f32 %v2384, %v2460
    %2462 = vmatmul.f32.gmra.mxu0 %v2417
    %v2463 = vpop.f32.mrf.mxu0
    %v2464 = vadd.f32 %v2387, %v2463
    %2465 = vmatmul.f32.gmra.mxu0 %v2420
    %v2466 = vpop.f32.mrf.mxu0
    %v2467 = vadd.f32 %v2390, %v2466
    %2468 = vmatmul.f32.gmra.mxu0 %v2423
    %v2469 = vpop.f32.mrf.mxu0
    %v2470 = vadd.f32 %v2393, %v2469
    %2471 = vmatmul.f32.gmra.mxu0 %v2426
    %v2472 = vpop.f32.mrf.mxu0
    %v2473 = vadd.f32 %v2396, %v2472
    %2474 = vmatmul.f32.gmra.mxu0 %v2429
    %v2475 = vpop.f32.mrf.mxu0
    %v2476 = vadd.f32 %v2399, %v2475
    %2477 = vdwg.mxu0
    %s2478 = scalar_lea.vmem %s5, 64
    %v2479 = vld [vmem:[%s2478] sm:$0xff]
    %v2480 = vld [vmem:[%s2478 + $0x8] sm:$0xff]
    %v2481 = vld [vmem:[%s2478 + $0x10] sm:$0xff]
    %v2482 = vld [vmem:[%s2478 + $0x18] sm:$0xff]
    %v2484 = vsel %vm755, %v2286, 0
    %v2487 = vsel %vm755, %v2289, 0
    %v2490 = vsel %vm755, %v2292, 0
    %v2493 = vsel %vm755, %v2295, 0
    %v2496 = vsel %vm755, %v2298, 0
    %v2499 = vsel %vm755, %v2301, 0
    %v2502 = vsel %vm755, %v2304, 0
    %v2505 = vsel %vm755, %v2307, 0
    %v2508 = vsel %vm755, %v2310, 0
    %v2511 = vsel %vm755, %v2313, 0
    %2513 = vmatpush.msra.mxu0 0.0
    %2514 = vmatpush.msra.mxu0 0.0
    %2515 = vmatpush.msra.mxu0 0.0
    %2516 = vmatpush.msra.mxu0 0.0
    %2517 = vmatpush.msra.mxu0 0.0
    %2518 = vmatpush.msra.mxu0 0.0
    %2519 = vmatpush.msra.mxu0 0.0
    %2520 = vmatpush.msra.mxu0 0.0
    %2521 = vmatpush.msra.mxu0 0.0
    %2522 = vmatpush.msra.mxu0 0.0
    %2523 = vmatpush.msra.mxu0 0.0
    %2524 = vmatpush.msra.mxu0 0.0
    %2525 = vmatpush.msra.mxu0 %v2482
    %2526 = vmatpush.msra.mxu0 %v2481
    %2527 = vmatpush.msra.mxu0 %v2480
    %2528 = vmatpush.msra.mxu0 %v2479
    %2529 = vmatmul.f32.gmra.mxu0 %v2484
    %v2530 = vpop.f32.mrf.mxu0
    %v2531 = vadd.f32 0.0, %v2530
    %2532 = vmatmul.f32.gmra.mxu0 %v2487
    %v2533 = vpop.f32.mrf.mxu0
    %v2534 = vadd.f32 0.0, %v2533
    %2535 = vmatmul.f32.gmra.mxu0 %v2490
    %v2536 = vpop.f32.mrf.mxu0
    %v2537 = vadd.f32 0.0, %v2536
    %2538 = vmatmul.f32.gmra.mxu0 %v2493
    %v2539 = vpop.f32.mrf.mxu0
    %v2540 = vadd.f32 0.0, %v2539
    %2541 = vmatmul.f32.gmra.mxu0 %v2496
    %v2542 = vpop.f32.mrf.mxu0
    %v2543 = vadd.f32 0.0, %v2542
    %2544 = vmatmul.f32.gmra.mxu0 %v2499
    %v2545 = vpop.f32.mrf.mxu0
    %v2546 = vadd.f32 0.0, %v2545
    %2547 = vmatmul.f32.gmra.mxu0 %v2502
    %v2548 = vpop.f32.mrf.mxu0
    %v2549 = vadd.f32 0.0, %v2548
    %2550 = vmatmul.f32.gmra.mxu0 %v2505
    %v2551 = vpop.f32.mrf.mxu0
    %v2552 = vadd.f32 0.0, %v2551
    %2553 = vmatmul.f32.gmra.mxu0 %v2508
    %v2554 = vpop.f32.mrf.mxu0
    %v2555 = vadd.f32 0.0, %v2554
    %2556 = vmatmul.f32.gmra.mxu0 %v2511
    %v2557 = vpop.f32.mrf.mxu0
    %v2558 = vadd.f32 0.0, %v2557
    %2559 = vdwg.mxu0
    %v2560 = vadd.f32 %v2449, %v2531
    %v2561 = vadd.f32 %v2452, %v2534
    %v2562 = vadd.f32 %v2455, %v2537
    %v2563 = vadd.f32 %v2458, %v2540
    %v2564 = vadd.f32 %v2461, %v2543
    %v2565 = vadd.f32 %v2464, %v2546
    %v2566 = vadd.f32 %v2467, %v2549
    %v2567 = vadd.f32 %v2470, %v2552
    %v2568 = vadd.f32 %v2473, %v2555
    %v2569 = vadd.f32 %v2476, %v2558
    %v2570 = vld [vmem:[%s6] sm:$0x1]
    %v2572 = vperm.slane %v2570, 0
    %v2574 = vadd.f32 %v2560, %v2572
    %v2575 = vadd.f32 %v2561, %v2572
    %v2576 = vadd.f32 %v2562, %v2572
    %v2577 = vadd.f32 %v2563, %v2572
    %v2578 = vadd.f32 %v2564, %v2572
    %v2579 = vadd.f32 %v2565, %v2572
    %v2580 = vadd.f32 %v2566, %v2572
    %v2581 = vadd.f32 %v2567, %v2572
    %v2582 = vadd.f32 %v2568, %v2572
    %v2583 = vadd.f32 %v2569, %v2572
    %v2584 = vmax.f32 %v2574, 0.0
    %v2585 = vmax.f32 %v2575, 0.0
    %v2586 = vmax.f32 %v2576, 0.0
    %v2587 = vmax.f32 %v2577, 0.0
    %v2588 = vmax.f32 %v2578, 0.0
    %v2589 = vmax.f32 %v2579, 0.0
    %v2590 = vmax.f32 %v2580, 0.0
    %v2591 = vmax.f32 %v2581, 0.0
    %v2592 = vmax.f32 %v2582, 0.0
    %v2593 = vmax.f32 %v2583, 0.0
    %v2595 = vsel %vm2160, %v1672, 0
    %v2598 = vsel %vm2160, %v1674, 0
    %v2601 = vsel %vm2160, %v1676, 0
    %v2604 = vsel %vm2160, %v1678, 0
    %v2607 = vsel %vm2160, %v1680, 0
    %2609 = vmatpush.msra.mxu0 0.0
    %2610 = vmatpush.msra.mxu0 0.0
    %2611 = vmatpush.msra.mxu0 0.0
    %2612 = vmatpush.msra.mxu0 0.0
    %2613 = vmatpush.msra.mxu0 0.0
    %2614 = vmatpush.msra.mxu0 0.0
    %2615 = vmatpush.msra.mxu0 %v2593
    %2616 = vmatpush.msra.mxu0 %v2592
    %2617 = vmatpush.msra.mxu0 %v2591
    %2618 = vmatpush.msra.mxu0 %v2590
    %2619 = vmatpush.msra.mxu0 %v2589
    %2620 = vmatpush.msra.mxu0 %v2588
    %2621 = vmatpush.msra.mxu0 %v2587
    %2622 = vmatpush.msra.mxu0 %v2586
    %2623 = vmatpush.msra.mxu0 %v2585
    %2624 = vmatpush.msra.mxu0 %v2584
    %2625 = vmatmul.f32.gmra.mxu0 %v2595
    %v2626 = vpop.f32.mrf.mxu0
    %v2627 = vadd.f32 0.0, %v2626
    %2628 = vmatmul.f32.gmra.mxu0 %v2598
    %v2629 = vpop.f32.mrf.mxu0
    %v2630 = vadd.f32 0.0, %v2629
    %2631 = vmatmul.f32.gmra.mxu0 %v2601
    %v2632 = vpop.f32.mrf.mxu0
    %v2633 = vadd.f32 0.0, %v2632
    %2634 = vmatmul.f32.gmra.mxu0 %v2604
    %v2635 = vpop.f32.mrf.mxu0
    %v2636 = vadd.f32 0.0, %v2635
    %2637 = vmatmul.f32.gmra.mxu0 %v2607
    %v2638 = vpop.f32.mrf.mxu0
    %v2639 = vadd.f32 0.0, %v2638
    %2640 = vdwg.mxu0
    %v2642 = vsel %vm2160, %v1722, 0
    %v2645 = vsel %vm2160, %v1724, 0
    %v2648 = vsel %vm2160, %v1726, 0
    %v2651 = vsel %vm2160, %v1728, 0
    %v2654 = vsel %vm2160, %v1730, 0
    %2656 = vmatpush.msra.mxu0 0.0
    %2657 = vmatpush.msra.mxu0 0.0
    %2658 = vmatpush.msra.mxu0 0.0
    %2659 = vmatpush.msra.mxu0 0.0
    %2660 = vmatpush.msra.mxu0 0.0
    %2661 = vmatpush.msra.mxu0 0.0
    %2662 = vmatpush.msra.mxu0 %v2593
    %2663 = vmatpush.msra.mxu0 %v2592
    %2664 = vmatpush.msra.mxu0 %v2591
    %2665 = vmatpush.msra.mxu0 %v2590
    %2666 = vmatpush.msra.mxu0 %v2589
    %2667 = vmatpush.msra.mxu0 %v2588
    %2668 = vmatpush.msra.mxu0 %v2587
    %2669 = vmatpush.msra.mxu0 %v2586
    %2670 = vmatpush.msra.mxu0 %v2585
    %2671 = vmatpush.msra.mxu0 %v2584
    %2672 = vmatmul.f32.gmra.mxu0 %v2642
    %v2673 = vpop.f32.mrf.mxu0
    %v2674 = vadd.f32 0.0, %v2673
    %2675 = vmatmul.f32.gmra.mxu0 %v2645
    %v2676 = vpop.f32.mrf.mxu0
    %v2677 = vadd.f32 0.0, %v2676
    %2678 = vmatmul.f32.gmra.mxu0 %v2648
    %v2679 = vpop.f32.mrf.mxu0
    %v2680 = vadd.f32 0.0, %v2679
    %2681 = vmatmul.f32.gmra.mxu0 %v2651
    %v2682 = vpop.f32.mrf.mxu0
    %v2683 = vadd.f32 0.0, %v2682
    %2684 = vmatmul.f32.gmra.mxu0 %v2654
    %v2685 = vpop.f32.mrf.mxu0
    %v2686 = vadd.f32 0.0, %v2685
    %2687 = vdwg.mxu0
    %v2688 = vmax.f32 %v2627, %v2674
    %v2689 = vmax.f32 %v2630, %v2677
    %v2690 = vmax.f32 %v2633, %v2680
    %v2691 = vmax.f32 %v2636, %v2683
    %v2692 = vmax.f32 %v2639, %v2686
    %vm2693 = vcmp.eq.s32.totalorder %v132, 9
    %vm2694 = vcmp.eq.s32.totalorder %v133, 9
    %vm2695 = vcmp.eq.s32.totalorder %v134, 9
    %vm2696 = vcmp.eq.s32.totalorder %v135, 9
    %vm2697 = vcmp.eq.s32.totalorder %v136, 9
    %vm2698 = vcmp.eq.s32.totalorder %v132, 10
    %vm2699 = vcmp.eq.s32.totalorder %v133, 10
    %vm2700 = vcmp.eq.s32.totalorder %v134, 10
    %vm2701 = vcmp.eq.s32.totalorder %v135, 10
    %vm2702 = vcmp.eq.s32.totalorder %v136, 10
    %vm2703 = vmor %vm155, %vm2698
    %vm2704 = vmor %vm156, %vm2699
    %vm2705 = vmor %vm157, %vm2700
    %vm2706 = vmor %vm158, %vm2701
    %vm2707 = vmor %vm159, %vm2702
    %vm2708 = vmor %vm2693, %vm2000
    %vm2709 = vmor %vm2694, %vm2001
    %vm2710 = vmor %vm2695, %vm2002
    %vm2711 = vmor %vm2696, %vm2003
    %vm2712 = vmor %vm2697, %vm2004
    %vm2713 = vmor %vm2703, %vm2010
    %vm2714 = vmor %vm2704, %vm2011
    %vm2715 = vmor %vm2705, %vm2012
    %vm2716 = vmor %vm2706, %vm2013
    %vm2717 = vmor %vm2707, %vm2014
    %vm2718 = vcmp.eq.s32.totalorder %v132, 29
    %vm2719 = vcmp.eq.s32.totalorder %v133, 29
    %vm2720 = vcmp.eq.s32.totalorder %v134, 29
    %vm2721 = vcmp.eq.s32.totalorder %v135, 29
    %vm2722 = vcmp.eq.s32.totalorder %v136, 29
    %vm2723 = vmor %vm2708, %vm2718
    %vm2724 = vmor %vm2709, %vm2719
    %vm2725 = vmor %vm2710, %vm2720
    %vm2726 = vmor %vm2711, %vm2721
    %vm2727 = vmor %vm2712, %vm2722
    %vm2728 = vcmp.eq.s32.totalorder %v132, 30
    %vm2729 = vcmp.eq.s32.totalorder %v133, 30
    %vm2730 = vcmp.eq.s32.totalorder %v134, 30
    %vm2731 = vcmp.eq.s32.totalorder %v135, 30
    %vm2732 = vcmp.eq.s32.totalorder %v136, 30
    %vm2733 = vmor %vm2713, %vm2728
    %vm2734 = vmor %vm2714, %vm2729
    %vm2735 = vmor %vm2715, %vm2730
    %vm2736 = vmor %vm2716, %vm2731
    %vm2737 = vmor %vm2717, %vm2732
    %vm2738 = vmor %vm2723, %vm175
    %vm2739 = vmor %vm2724, %vm176
    %vm2740 = vmor %vm2725, %vm177
    %vm2741 = vmor %vm2726, %vm178
    %vm2742 = vmor %vm2727, %vm179
    %vm2743 = vmxor %vm2733, 1
    %vm2744 = vmxor %vm2734, 1
    %vm2745 = vmxor %vm2735, 1
    %vm2746 = vmxor %vm2736, 1
    %vm2747 = vmxor %vm2737, 1
    %vm2748 = vmand %vm455, %vm2743
    %vm2749 = vmand %vm457, %vm2744
    %vm2750 = vmand %vm459, %vm2745
    %vm2751 = vmand %vm461, %vm2746
    %vm2752 = vmand %vm463, %vm2747
    %v2753 = vsel %vm2748, 1.0, 0.0
    %v2754 = vsel %vm2749, 1.0, 0.0
    %v2755 = vsel %vm2750, 1.0, 0.0
    %v2756 = vsel %vm2751, 1.0, 0.0
    %v2757 = vsel %vm2752, 1.0, 0.0
    %vm2758 = vmxor %vm2738, 1
    %vm2759 = vmxor %vm2739, 1
    %vm2760 = vmxor %vm2740, 1
    %vm2761 = vmxor %vm2741, 1
    %vm2762 = vmxor %vm2742, 1
    %vm2763 = vmand %vm615, %vm2758
    %vm2764 = vmand %vm617, %vm2759
    %vm2765 = vmand %vm619, %vm2760
    %vm2766 = vmand %vm621, %vm2761
    %vm2767 = vmand %vm623, %vm2762
    %v2768 = vsel %vm2763, 1.0, 0.0
    %v2769 = vsel %vm2764, 1.0, 0.0
    %v2770 = vsel %vm2765, 1.0, 0.0
    %v2771 = vsel %vm2766, 1.0, 0.0
    %v2772 = vsel %vm2767, 1.0, 0.0
    %vm2773 = vcmask 326656
    %v2775 = vsel %vm2773, %v2753, 0
    %v2778 = vsel %vm2773, %v2754, 0
    %v2781 = vsel %vm2773, %v2755, 0
    %v2784 = vsel %vm2773, %v2756, 0
    %v2787 = vsel %vm2773, %v2757, 0
    %2789 = vmatpush.msra.mxu0 0.0
    %2790 = vmatpush.msra.mxu0 0.0
    %2791 = vmatpush.msra.mxu0 0.0
    %2792 = vmatpush.msra.mxu0 0.0
    %2793 = vmatpush.msra.mxu0 0.0
    %2794 = vmatpush.msra.mxu0 0.0
    %2795 = vmatpush.msra.mxu0 0.0
    %2796 = vmatpush.msra.mxu0 0.0
    %2797 = vmatpush.msra.mxu0 0.0
    %2798 = vmatpush.msra.mxu0 0.0
    %2799 = vmatpush.msra.mxu0 0.0
    %2800 = vmatpush.msra.mxu0 %v2692
    %2801 = vmatpush.msra.mxu0 %v2691
    %2802 = vmatpush.msra.mxu0 %v2690
    %2803 = vmatpush.msra.mxu0 %v2689
    %2804 = vmatpush.msra.mxu0 %v2688
    %2805 = vmatmul.f32.gmra.mxu0 %v2775
    %v2806 = vpop.f32.mrf.mxu0
    %v2807 = vadd.f32 0.0, %v2806
    %2808 = vmatmul.f32.gmra.mxu0 %v2778
    %v2809 = vpop.f32.mrf.mxu0
    %v2810 = vadd.f32 0.0, %v2809
    %2811 = vmatmul.f32.gmra.mxu0 %v2781
    %v2812 = vpop.f32.mrf.mxu0
    %v2813 = vadd.f32 0.0, %v2812
    %2814 = vmatmul.f32.gmra.mxu0 %v2784
    %v2815 = vpop.f32.mrf.mxu0
    %v2816 = vadd.f32 0.0, %v2815
    %2817 = vmatmul.f32.gmra.mxu0 %v2787
    %v2818 = vpop.f32.mrf.mxu0
    %v2819 = vadd.f32 0.0, %v2818
    %2820 = vdwg.mxu0
    %v2822 = vsel %vm2773, %v2768, 0
    %v2825 = vsel %vm2773, %v2769, 0
    %v2828 = vsel %vm2773, %v2770, 0
    %v2831 = vsel %vm2773, %v2771, 0
    %v2834 = vsel %vm2773, %v2772, 0
    %2836 = vmatpush.msra.mxu0 0.0
    %2837 = vmatpush.msra.mxu0 0.0
    %2838 = vmatpush.msra.mxu0 0.0
    %2839 = vmatpush.msra.mxu0 0.0
    %2840 = vmatpush.msra.mxu0 0.0
    %2841 = vmatpush.msra.mxu0 0.0
    %2842 = vmatpush.msra.mxu0 0.0
    %2843 = vmatpush.msra.mxu0 0.0
    %2844 = vmatpush.msra.mxu0 0.0
    %2845 = vmatpush.msra.mxu0 0.0
    %2846 = vmatpush.msra.mxu0 0.0
    %2847 = vmatpush.msra.mxu0 %v2692
    %2848 = vmatpush.msra.mxu0 %v2691
    %2849 = vmatpush.msra.mxu0 %v2690
    %2850 = vmatpush.msra.mxu0 %v2689
    %2851 = vmatpush.msra.mxu0 %v2688
    %2852 = vmatmul.f32.gmra.mxu0 %v2822
    %v2853 = vpop.f32.mrf.mxu0
    %v2854 = vadd.f32 0.0, %v2853
    %2855 = vmatmul.f32.gmra.mxu0 %v2825
    %v2856 = vpop.f32.mrf.mxu0
    %v2857 = vadd.f32 0.0, %v2856
    %2858 = vmatmul.f32.gmra.mxu0 %v2828
    %v2859 = vpop.f32.mrf.mxu0
    %v2860 = vadd.f32 0.0, %v2859
    %2861 = vmatmul.f32.gmra.mxu0 %v2831
    %v2862 = vpop.f32.mrf.mxu0
    %v2863 = vadd.f32 0.0, %v2862
    %2864 = vmatmul.f32.gmra.mxu0 %v2834
    %v2865 = vpop.f32.mrf.mxu0
    %v2866 = vadd.f32 0.0, %v2865
    %2867 = vdwg.mxu0
    %v2868 = vld [vmem:[%s7] sm:$0xff]
    %v2869 = vld [vmem:[%s7 + $0x8] sm:$0xff]
    %v2870 = vld [vmem:[%s7 + $0x10] sm:$0xff]
    %v2871 = vld [vmem:[%s7 + $0x18] sm:$0xff]
    %v2872 = vld [vmem:[%s7 + $0x20] sm:$0xff]
    %v2873 = vld [vmem:[%s7 + $0x28] sm:$0xff]
    %v2874 = vld [vmem:[%s7 + $0x30] sm:$0xff]
    %v2875 = vld [vmem:[%s7 + $0x38] sm:$0xff]
    %s2876 = scalar_lea.vmem %s7, 64
    %v2877 = vld [vmem:[%s2876] sm:$0xff]
    %v2878 = vld [vmem:[%s2876 + $0x8] sm:$0xff]
    %v2879 = vld [vmem:[%s2876 + $0x10] sm:$0xff]
    %v2880 = vld [vmem:[%s2876 + $0x18] sm:$0xff]
    %v2881 = vld [vmem:[%s2876 + $0x20] sm:$0xff]
    %v2882 = vld [vmem:[%s2876 + $0x28] sm:$0xff]
    %v2883 = vld [vmem:[%s2876 + $0x30] sm:$0xff]
    %v2884 = vld [vmem:[%s2876 + $0x38] sm:$0xff]
    %vm2885 = vcmask 523264
    %v2887 = vsel %vm2885, %v2688, 0
    %v2890 = vsel %vm2885, %v2689, 0
    %v2893 = vsel %vm2885, %v2690, 0
    %v2896 = vsel %vm2885, %v2691, 0
    %v2899 = vsel %vm2885, %v2692, 0
    %2901 = vmatpush.msra.mxu0 0.0
    %2902 = vmatpush.msra.mxu0 0.0
    %2903 = vmatpush.msra.mxu0 0.0
    %2904 = vmatpush.msra.mxu0 0.0
    %2905 = vmatpush.msra.mxu0 0.0
    %2906 = vmatpush.msra.mxu0 0.0
    %2907 = vmatpush.msra.mxu0 0.0
    %2908 = vmatpush.msra.mxu0 0.0
    %2909 = vmatpush.msra.mxu0 %v2884
    %2910 = vmatpush.msra.mxu0 %v2883
    %2911 = vmatpush.msra.mxu0 %v2882
    %2912 = vmatpush.msra.mxu0 %v2881
    %2913 = vmatpush.msra.mxu0 %v2880
    %2914 = vmatpush.msra.mxu0 %v2879
    %2915 = vmatpush.msra.mxu0 %v2878
    %2916 = vmatpush.msra.mxu0 %v2877
    %2917 = vmatmul.f32.gmra.mxu0 %v2887
    %v2918 = vpop.f32.mrf.mxu0
    %v2919 = vadd.f32 0.0, %v2918
    %2920 = vmatmul.f32.gmra.mxu0 %v2890
    %v2921 = vpop.f32.mrf.mxu0
    %v2922 = vadd.f32 0.0, %v2921
    %2923 = vmatmul.f32.gmra.mxu0 %v2893
    %v2924 = vpop.f32.mrf.mxu0
    %v2925 = vadd.f32 0.0, %v2924
    %2926 = vmatmul.f32.gmra.mxu0 %v2896
    %v2927 = vpop.f32.mrf.mxu0
    %v2928 = vadd.f32 0.0, %v2927
    %2929 = vmatmul.f32.gmra.mxu0 %v2899
    %v2930 = vpop.f32.mrf.mxu0
    %v2931 = vadd.f32 0.0, %v2930
    %2932 = vdwg.mxu0
    %v2934 = vsel %vm2885, %v2807, 0
    %v2937 = vsel %vm2885, %v2810, 0
    %v2940 = vsel %vm2885, %v2813, 0
    %v2943 = vsel %vm2885, %v2816, 0
    %v2946 = vsel %vm2885, %v2819, 0
    %2948 = vmatpush.msra.mxu0 0.0
    %2949 = vmatpush.msra.mxu0 0.0
    %2950 = vmatpush.msra.mxu0 0.0
    %2951 = vmatpush.msra.mxu0 0.0
    %2952 = vmatpush.msra.mxu0 0.0
    %2953 = vmatpush.msra.mxu0 0.0
    %2954 = vmatpush.msra.mxu0 0.0
    %2955 = vmatpush.msra.mxu0 0.0
    %2956 = vmatpush.msra.mxu0 %v2875
    %2957 = vmatpush.msra.mxu0 %v2874
    %2958 = vmatpush.msra.mxu0 %v2873
    %2959 = vmatpush.msra.mxu0 %v2872
    %2960 = vmatpush.msra.mxu0 %v2871
    %2961 = vmatpush.msra.mxu0 %v2870
    %2962 = vmatpush.msra.mxu0 %v2869
    %2963 = vmatpush.msra.mxu0 %v2868
    %2964 = vmatmul.f32.gmra.mxu0 %v2934
    %v2965 = vpop.f32.mrf.mxu0
    %v2966 = vadd.f32 %v2919, %v2965
    %2967 = vmatmul.f32.gmra.mxu0 %v2937
    %v2968 = vpop.f32.mrf.mxu0
    %v2969 = vadd.f32 %v2922, %v2968
    %2970 = vmatmul.f32.gmra.mxu0 %v2940
    %v2971 = vpop.f32.mrf.mxu0
    %v2972 = vadd.f32 %v2925, %v2971
    %2973 = vmatmul.f32.gmra.mxu0 %v2943
    %v2974 = vpop.f32.mrf.mxu0
    %v2975 = vadd.f32 %v2928, %v2974
    %2976 = vmatmul.f32.gmra.mxu0 %v2946
    %v2977 = vpop.f32.mrf.mxu0
    %v2978 = vadd.f32 %v2931, %v2977
    %2979 = vdwg.mxu0
    %s2980 = scalar_lea.vmem %s7, 128
    %v2981 = vld [vmem:[%s2980] sm:$0xff]
    %v2982 = vld [vmem:[%s2980 + $0x8] sm:$0xff]
    %v2983 = vld [vmem:[%s2980 + $0x10] sm:$0xff]
    %v2984 = vld [vmem:[%s2980 + $0x18] sm:$0xff]
    %v2985 = vld [vmem:[%s2980 + $0x20] sm:$0xff]
    %v2986 = vld [vmem:[%s2980 + $0x28] sm:$0xff]
    %v2987 = vld [vmem:[%s2980 + $0x30] sm:$0xff]
    %v2988 = vld [vmem:[%s2980 + $0x38] sm:$0xff]
    %v2990 = vsel %vm2885, %v2854, 0
    %v2993 = vsel %vm2885, %v2857, 0
    %v2996 = vsel %vm2885, %v2860, 0
    %v2999 = vsel %vm2885, %v2863, 0
    %v3002 = vsel %vm2885, %v2866, 0
    %3004 = vmatpush.msra.mxu0 0.0
    %3005 = vmatpush.msra.mxu0 0.0
    %3006 = vmatpush.msra.mxu0 0.0
    %3007 = vmatpush.msra.mxu0 0.0
    %3008 = vmatpush.msra.mxu0 0.0
    %3009 = vmatpush.msra.mxu0 0.0
    %3010 = vmatpush.msra.mxu0 0.0
    %3011 = vmatpush.msra.mxu0 0.0
    %3012 = vmatpush.msra.mxu0 %v2988
    %3013 = vmatpush.msra.mxu0 %v2987
    %3014 = vmatpush.msra.mxu0 %v2986
    %3015 = vmatpush.msra.mxu0 %v2985
    %3016 = vmatpush.msra.mxu0 %v2984
    %3017 = vmatpush.msra.mxu0 %v2983
    %3018 = vmatpush.msra.mxu0 %v2982
    %3019 = vmatpush.msra.mxu0 %v2981
    %3020 = vmatmul.f32.gmra.mxu0 %v2990
    %v3021 = vpop.f32.mrf.mxu0
    %v3022 = vadd.f32 0.0, %v3021
    %3023 = vmatmul.f32.gmra.mxu0 %v2993
    %v3024 = vpop.f32.mrf.mxu0
    %v3025 = vadd.f32 0.0, %v3024
    %3026 = vmatmul.f32.gmra.mxu0 %v2996
    %v3027 = vpop.f32.mrf.mxu0
    %v3028 = vadd.f32 0.0, %v3027
    %3029 = vmatmul.f32.gmra.mxu0 %v2999
    %v3030 = vpop.f32.mrf.mxu0
    %v3031 = vadd.f32 0.0, %v3030
    %3032 = vmatmul.f32.gmra.mxu0 %v3002
    %v3033 = vpop.f32.mrf.mxu0
    %v3034 = vadd.f32 0.0, %v3033
    %3035 = vdwg.mxu0
    %v3036 = vadd.f32 %v2966, %v3022
    %v3037 = vadd.f32 %v2969, %v3025
    %v3038 = vadd.f32 %v2972, %v3028
    %v3039 = vadd.f32 %v2975, %v3031
    %v3040 = vadd.f32 %v2978, %v3034
    %v3041 = vld [vmem:[%s8] sm:$0x1]
    %v3043 = vperm.slane %v3041, 0
    %v3045 = vadd.f32 %v3036, %v3043
    %v3046 = vadd.f32 %v3037, %v3043
    %v3047 = vadd.f32 %v3038, %v3043
    %v3048 = vadd.f32 %v3039, %v3043
    %v3049 = vadd.f32 %v3040, %v3043
    %v3050 = vmax.f32 %v3045, 0.0
    %v3051 = vmax.f32 %v3046, 0.0
    %v3052 = vmax.f32 %v3047, 0.0
    %v3053 = vmax.f32 %v3048, 0.0
    %v3054 = vmax.f32 %v3049, 0.0
    %v3055 = vsel %vm2773, %v1672, 0
    %v3057 = vsel %vm2773, %v1674, 0
    %v3059 = vsel %vm2773, %v1676, 0
    %3061 = vmatpush.msra.mxu0 0.0
    %3062 = vmatpush.msra.mxu0 0.0
    %3063 = vmatpush.msra.mxu0 0.0
    %3064 = vmatpush.msra.mxu0 0.0
    %3065 = vmatpush.msra.mxu0 0.0
    %3066 = vmatpush.msra.mxu0 0.0
    %3067 = vmatpush.msra.mxu0 0.0
    %3068 = vmatpush.msra.mxu0 0.0
    %3069 = vmatpush.msra.mxu0 0.0
    %3070 = vmatpush.msra.mxu0 0.0
    %3071 = vmatpush.msra.mxu0 0.0
    %3072 = vmatpush.msra.mxu0 %v3054
    %3073 = vmatpush.msra.mxu0 %v3053
    %3074 = vmatpush.msra.mxu0 %v3052
    %3075 = vmatpush.msra.mxu0 %v3051
    %3076 = vmatpush.msra.mxu0 %v3050
    %3077 = vmatmul.f32.gmra.mxu0 %v3055
    %v3078 = vpop.f32.mrf.mxu0
    %v3079 = vadd.f32 0.0, %v3078
    %3080 = vmatmul.f32.gmra.mxu0 %v3057
    %v3081 = vpop.f32.mrf.mxu0
    %v3082 = vadd.f32 0.0, %v3081
    %3083 = vmatmul.f32.gmra.mxu0 %v3059
    %v3084 = vpop.f32.mrf.mxu0
    %v3085 = vadd.f32 0.0, %v3084
    %3086 = vdwg.mxu0
    %v3087 = vsel %vm2773, %v1722, 0
    %v3089 = vsel %vm2773, %v1724, 0
    %v3091 = vsel %vm2773, %v1726, 0
    %3093 = vmatpush.msra.mxu0 0.0
    %3094 = vmatpush.msra.mxu0 0.0
    %3095 = vmatpush.msra.mxu0 0.0
    %3096 = vmatpush.msra.mxu0 0.0
    %3097 = vmatpush.msra.mxu0 0.0
    %3098 = vmatpush.msra.mxu0 0.0
    %3099 = vmatpush.msra.mxu0 0.0
    %3100 = vmatpush.msra.mxu0 0.0
    %3101 = vmatpush.msra.mxu0 0.0
    %3102 = vmatpush.msra.mxu0 0.0
    %3103 = vmatpush.msra.mxu0 0.0
    %3104 = vmatpush.msra.mxu0 %v3054
    %3105 = vmatpush.msra.mxu0 %v3053
    %3106 = vmatpush.msra.mxu0 %v3052
    %3107 = vmatpush.msra.mxu0 %v3051
    %3108 = vmatpush.msra.mxu0 %v3050
    %3109 = vmatmul.f32.gmra.mxu0 %v3087
    %v3110 = vpop.f32.mrf.mxu0
    %v3111 = vadd.f32 0.0, %v3110
    %3112 = vmatmul.f32.gmra.mxu0 %v3089
    %v3113 = vpop.f32.mrf.mxu0
    %v3114 = vadd.f32 0.0, %v3113
    %3115 = vmatmul.f32.gmra.mxu0 %v3091
    %v3116 = vpop.f32.mrf.mxu0
    %v3117 = vadd.f32 0.0, %v3116
    %3118 = vdwg.mxu0
    %v3119 = vmax.f32 %v3079, %v3111
    %v3120 = vmax.f32 %v3082, %v3114
    %v3121 = vmax.f32 %v3085, %v3117
    %v3122 = vmul.u32 %v132, 5
    %vm3123 = vcmp.eq.s32.totalorder %v153, %v3122
    %v3124 = vsel %vm3123, 1.0, 0.0
    %vm3125 = vcmask 162816
    %v3127 = vsel %vm3125, %v3124, 0
    %vm3129 = vcmask 1043456
    %v3131 = vsel %vm3129, %v3121, 0
    %3133 = vmatpush.msra.mxu0 0.0
    %3134 = vmatpush.msra.mxu0 0.0
    %3135 = vmatpush.msra.mxu0 0.0
    %3136 = vmatpush.msra.mxu0 0.0
    %3137 = vmatpush.msra.mxu0 0.0
    %3138 = vmatpush.msra.mxu0 0.0
    %3139 = vmatpush.msra.mxu0 0.0
    %3140 = vmatpush.msra.mxu0 0.0
    %3141 = vmatpush.msra.mxu0 0.0
    %3142 = vmatpush.msra.mxu0 0.0
    %3143 = vmatpush.msra.mxu0 0.0
    %3144 = vmatpush.msra.mxu0 0.0
    %3145 = vmatpush.msra.mxu0 0.0
    %3146 = vmatpush.msra.mxu0 %v3131
    %3147 = vmatpush.msra.mxu0 %v3120
    %3148 = vmatpush.msra.mxu0 %v3119
    %3149 = vmatmul.f32.gmra.mxu0 %v3127
    %v3150 = vpop.f32.mrf.mxu0
    %v3151 = vadd.f32 0.0, %v3150
    %3152 = vdwg.mxu0
    %v3153 = vld [vmem:[#allocation3] sm:$0xff]
    %v3154 = vld [vmem:[#allocation3 + $0x8] sm:$0xff]
    %v3155 = vld [vmem:[#allocation3 + $0x10] sm:$0xff]
    %v3156 = vld [vmem:[#allocation3 + $0x18] sm:$0xff]
    %v3157 = vld [vmem:[#allocation3 + $0x20] sm:$0xff]
    %v3158 = vld [vmem:[#allocation3 + $0x28] sm:$0xff]
    %v3159 = vld [vmem:[#allocation3 + $0x30] sm:$0xff]
    %v3160 = vld [vmem:[#allocation3 + $0x38] sm:$0xff]
    %v3161 = vld [vmem:[#allocation3 + $0x40] sm:$0xff]
    %v3162 = vld [vmem:[#allocation3 + $0x48] sm:$0xff]
    %v3163 = vld [vmem:[#allocation3 + $0x50] sm:$0xff]
    %v3164 = vld [vmem:[#allocation3 + $0x58] sm:$0xff]
    %v3165 = vld [vmem:[#allocation3 + $0x60] sm:$0xff]
    %v3166 = vld [vmem:[#allocation3 + $0x68] sm:$0xff]
    %v3167 = vld [vmem:[#allocation3 + $0x70] sm:$0xff]
    %v3168 = vld [vmem:[#allocation3 + $0x78] sm:$0xff]
    %v3169 = vadd.s32 %v3122, 1
    %vm3170 = vcmp.eq.s32.totalorder %v153, %v3169
    %v3171 = vsel %vm3170, 1.0, 0.0
    %v3173 = vsel %vm3125, %v3171, 0
    %3175 = vmatpush.msra.mxu0 0.0
    %3176 = vmatpush.msra.mxu0 0.0
    %3177 = vmatpush.msra.mxu0 0.0
    %3178 = vmatpush.msra.mxu0 0.0
    %3179 = vmatpush.msra.mxu0 0.0
    %3180 = vmatpush.msra.mxu0 0.0
    %3181 = vmatpush.msra.mxu0 0.0
    %3182 = vmatpush.msra.mxu0 0.0
    %3183 = vmatpush.msra.mxu0 0.0
    %3184 = vmatpush.msra.mxu0 0.0
    %3185 = vmatpush.msra.mxu0 0.0
    %3186 = vmatpush.msra.mxu0 0.0
    %3187 = vmatpush.msra.mxu0 0.0
    %3188 = vmatpush.msra.mxu0 %v3131
    %3189 = vmatpush.msra.mxu0 %v3120
    %3190 = vmatpush.msra.mxu0 %v3119
    %3191 = vmatmul.f32.gmra.mxu0 %v3173
    %v3192 = vpop.f32.mrf.mxu0
    %v3193 = vadd.f32 0.0, %v3192
    %3194 = vdwg.mxu0
    %s3195 = scalar_lea.vmem [#allocation3], 128
    %v3196 = vld [vmem:[%s3195] sm:$0xff]
    %v3197 = vld [vmem:[%s3195 + $0x8] sm:$0xff]
    %v3198 = vld [vmem:[%s3195 + $0x10] sm:$0xff]
    %v3199 = vld [vmem:[%s3195 + $0x18] sm:$0xff]
    %v3200 = vld [vmem:[%s3195 + $0x20] sm:$0xff]
    %v3201 = vld [vmem:[%s3195 + $0x28] sm:$0xff]
    %v3202 = vld [vmem:[%s3195 + $0x30] sm:$0xff]
    %v3203 = vld [vmem:[%s3195 + $0x38] sm:$0xff]
    %v3204 = vld [vmem:[%s3195 + $0x40] sm:$0xff]
    %v3205 = vld [vmem:[%s3195 + $0x48] sm:$0xff]
    %v3206 = vld [vmem:[%s3195 + $0x50] sm:$0xff]
    %v3207 = vld [vmem:[%s3195 + $0x58] sm:$0xff]
    %v3208 = vld [vmem:[%s3195 + $0x60] sm:$0xff]
    %v3209 = vld [vmem:[%s3195 + $0x68] sm:$0xff]
    %v3210 = vld [vmem:[%s3195 + $0x70] sm:$0xff]
    %v3211 = vld [vmem:[%s3195 + $0x78] sm:$0xff]
    %3212 = vmatpush.msra.mxu0 %v3211
    %3213 = vmatpush.msra.mxu0 %v3210
    %3214 = vmatpush.msra.mxu0 %v3209
    %3215 = vmatpush.msra.mxu0 %v3208
    %3216 = vmatpush.msra.mxu0 %v3207
    %3217 = vmatpush.msra.mxu0 %v3206
    %3218 = vmatpush.msra.mxu0 %v3205
    %3219 = vmatpush.msra.mxu0 %v3204
    %3220 = vmatpush.msra.mxu0 %v3203
    %3221 = vmatpush.msra.mxu0 %v3202
    %3222 = vmatpush.msra.mxu0 %v3201
    %3223 = vmatpush.msra.mxu0 %v3200
    %3224 = vmatpush.msra.mxu0 %v3199
    %3225 = vmatpush.msra.mxu0 %v3198
    %3226 = vmatpush.msra.mxu0 %v3197
    %3227 = vmatpush.msra.mxu0 %v3196
    %3228 = vmatmul.f32.gmra.mxu0 %v3193
    %v3229 = vpop.f32.mrf.mxu0
    %v3230 = vadd.f32 0.0, %v3229
    %3231 = vdwg.mxu0
    %3232 = vmatpush.msra.mxu0 %v3168
    %3233 = vmatpush.msra.mxu0 %v3167
    %3234 = vmatpush.msra.mxu0 %v3166
    %3235 = vmatpush.msra.mxu0 %v3165
    %3236 = vmatpush.msra.mxu0 %v3164
    %3237 = vmatpush.msra.mxu0 %v3163
    %3238 = vmatpush.msra.mxu0 %v3162
    %3239 = vmatpush.msra.mxu0 %v3161
    %3240 = vmatpush.msra.mxu0 %v3160
    %3241 = vmatpush.msra.mxu0 %v3159
    %3242 = vmatpush.msra.mxu0 %v3158
    %3243 = vmatpush.msra.mxu0 %v3157
    %3244 = vmatpush.msra.mxu0 %v3156
    %3245 = vmatpush.msra.mxu0 %v3155
    %3246 = vmatpush.msra.mxu0 %v3154
    %3247 = vmatpush.msra.mxu0 %v3153
    %3248 = vmatmul.f32.gmra.mxu0 %v3151
    %v3249 = vpop.f32.mrf.mxu0
    %v3250 = vadd.f32 %v3230, %v3249
    %3251 = vdwg.mxu0
    %v3252 = vadd.s32 %v3122, 2
    %vm3253 = vcmp.eq.s32.totalorder %v153, %v3252
    %v3254 = vsel %vm3253, 1.0, 0.0
    %v3256 = vsel %vm3125, %v3254, 0
    %3258 = vmatpush.msra.mxu0 0.0
    %3259 = vmatpush.msra.mxu0 0.0
    %3260 = vmatpush.msra.mxu0 0.0
    %3261 = vmatpush.msra.mxu0 0.0
    %3262 = vmatpush.msra.mxu0 0.0
    %3263 = vmatpush.msra.mxu0 0.0
    %3264 = vmatpush.msra.mxu0 0.0
    %3265 = vmatpush.msra.mxu0 0.0
    %3266 = vmatpush.msra.mxu0 0.0
    %3267 = vmatpush.msra.mxu0 0.0
    %3268 = vmatpush.msra.mxu0 0.0
    %3269 = vmatpush.msra.mxu0 0.0
    %3270 = vmatpush.msra.mxu0 0.0
    %3271 = vmatpush.msra.mxu0 %v3131
    %3272 = vmatpush.msra.mxu0 %v3120
    %3273 = vmatpush.msra.mxu0 %v3119
    %3274 = vmatmul.f32.gmra.mxu0 %v3256
    %v3275 = vpop.f32.mrf.mxu0
    %v3276 = vadd.f32 0.0, %v3275
    %3277 = vdwg.mxu0
    %s3278 = scalar_lea.vmem [#allocation3], 256
    %v3279 = vld [vmem:[%s3278] sm:$0xff]
    %v3280 = vld [vmem:[%s3278 + $0x8] sm:$0xff]
    %v3281 = vld [vmem:[%s3278 + $0x10] sm:$0xff]
    %v3282 = vld [vmem:[%s3278 + $0x18] sm:$0xff]
    %v3283 = vld [vmem:[%s3278 + $0x20] sm:$0xff]
    %v3284 = vld [vmem:[%s3278 + $0x28] sm:$0xff]
    %v3285 = vld [vmem:[%s3278 + $0x30] sm:$0xff]
    %v3286 = vld [vmem:[%s3278 + $0x38] sm:$0xff]
    %v3287 = vld [vmem:[%s3278 + $0x40] sm:$0xff]
    %v3288 = vld [vmem:[%s3278 + $0x48] sm:$0xff]
    %v3289 = vld [vmem:[%s3278 + $0x50] sm:$0xff]
    %v3290 = vld [vmem:[%s3278 + $0x58] sm:$0xff]
    %v3291 = vld [vmem:[%s3278 + $0x60] sm:$0xff]
    %v3292 = vld [vmem:[%s3278 + $0x68] sm:$0xff]
    %v3293 = vld [vmem:[%s3278 + $0x70] sm:$0xff]
    %v3294 = vld [vmem:[%s3278 + $0x78] sm:$0xff]
    %3295 = vmatpush.msra.mxu0 %v3294
    %3296 = vmatpush.msra.mxu0 %v3293
    %3297 = vmatpush.msra.mxu0 %v3292
    %3298 = vmatpush.msra.mxu0 %v3291
    %3299 = vmatpush.msra.mxu0 %v3290
    %3300 = vmatpush.msra.mxu0 %v3289
    %3301 = vmatpush.msra.mxu0 %v3288
    %3302 = vmatpush.msra.mxu0 %v3287
    %3303 = vmatpush.msra.mxu0 %v3286
    %3304 = vmatpush.msra.mxu0 %v3285
    %3305 = vmatpush.msra.mxu0 %v3284
    %3306 = vmatpush.msra.mxu0 %v3283
    %3307 = vmatpush.msra.mxu0 %v3282
    %3308 = vmatpush.msra.mxu0 %v3281
    %3309 = vmatpush.msra.mxu0 %v3280
    %3310 = vmatpush.msra.mxu0 %v3279
    %3311 = vmatmul.f32.gmra.mxu0 %v3276
    %v3312 = vpop.f32.mrf.mxu0
    %v3313 = vadd.f32 0.0, %v3312
    %3314 = vdwg.mxu0
    %v3315 = vadd.f32 %v3250, %v3313
    %v3316 = vadd.s32 %v3122, 3
    %vm3317 = vcmp.eq.s32.totalorder %v153, %v3316
    %v3318 = vsel %vm3317, 1.0, 0.0
    %v3320 = vsel %vm3125, %v3318, 0
    %3322 = vmatpush.msra.mxu0 0.0
    %3323 = vmatpush.msra.mxu0 0.0
    %3324 = vmatpush.msra.mxu0 0.0
    %3325 = vmatpush.msra.mxu0 0.0
    %3326 = vmatpush.msra.mxu0 0.0
    %3327 = vmatpush.msra.mxu0 0.0
    %3328 = vmatpush.msra.mxu0 0.0
    %3329 = vmatpush.msra.mxu0 0.0
    %3330 = vmatpush.msra.mxu0 0.0
    %3331 = vmatpush.msra.mxu0 0.0
    %3332 = vmatpush.msra.mxu0 0.0
    %3333 = vmatpush.msra.mxu0 0.0
    %3334 = vmatpush.msra.mxu0 0.0
    %3335 = vmatpush.msra.mxu0 %v3131
    %3336 = vmatpush.msra.mxu0 %v3120
    %3337 = vmatpush.msra.mxu0 %v3119
    %3338 = vmatmul.f32.gmra.mxu0 %v3320
    %v3339 = vpop.f32.mrf.mxu0
    %v3340 = vadd.f32 0.0, %v3339
    %3341 = vdwg.mxu0
    %s3342 = scalar_lea.vmem [#allocation3], 384
    %v3343 = vld [vmem:[%s3342] sm:$0xff]
    %v3344 = vld [vmem:[%s3342 + $0x8] sm:$0xff]
    %v3345 = vld [vmem:[%s3342 + $0x10] sm:$0xff]
    %v3346 = vld [vmem:[%s3342 + $0x18] sm:$0xff]
    %v3347 = vld [vmem:[%s3342 + $0x20] sm:$0xff]
    %v3348 = vld [vmem:[%s3342 + $0x28] sm:$0xff]
    %v3349 = vld [vmem:[%s3342 + $0x30] sm:$0xff]
    %v3350 = vld [vmem:[%s3342 + $0x38] sm:$0xff]
    %v3351 = vld [vmem:[%s3342 + $0x40] sm:$0xff]
    %v3352 = vld [vmem:[%s3342 + $0x48] sm:$0xff]
    %v3353 = vld [vmem:[%s3342 + $0x50] sm:$0xff]
    %v3354 = vld [vmem:[%s3342 + $0x58] sm:$0xff]
    %v3355 = vld [vmem:[%s3342 + $0x60] sm:$0xff]
    %v3356 = vld [vmem:[%s3342 + $0x68] sm:$0xff]
    %v3357 = vld [vmem:[%s3342 + $0x70] sm:$0xff]
    %v3358 = vld [vmem:[%s3342 + $0x78] sm:$0xff]
    %3359 = vmatpush.msra.mxu0 %v3358
    %3360 = vmatpush.msra.mxu0 %v3357
    %3361 = vmatpush.msra.mxu0 %v3356
    %3362 = vmatpush.msra.mxu0 %v3355
    %3363 = vmatpush.msra.mxu0 %v3354
    %3364 = vmatpush.msra.mxu0 %v3353
    %3365 = vmatpush.msra.mxu0 %v3352
    %3366 = vmatpush.msra.mxu0 %v3351
    %3367 = vmatpush.msra.mxu0 %v3350
    %3368 = vmatpush.msra.mxu0 %v3349
    %3369 = vmatpush.msra.mxu0 %v3348
    %3370 = vmatpush.msra.mxu0 %v3347
    %3371 = vmatpush.msra.mxu0 %v3346
    %3372 = vmatpush.msra.mxu0 %v3345
    %3373 = vmatpush.msra.mxu0 %v3344
    %3374 = vmatpush.msra.mxu0 %v3343
    %3375 = vmatmul.f32.gmra.mxu0 %v3340
    %v3376 = vpop.f32.mrf.mxu0
    %v3377 = vadd.f32 0.0, %v3376
    %3378 = vdwg.mxu0
    %v3379 = vadd.f32 %v3315, %v3377
    %v3380 = vadd.s32 %v3122, 4
    %vm3381 = vcmp.eq.s32.totalorder %v153, %v3380
    %v3382 = vsel %vm3381, 1.0, 0.0
    %v3384 = vsel %vm3125, %v3382, 0
    %3386 = vmatpush.msra.mxu0 0.0
    %3387 = vmatpush.msra.mxu0 0.0
    %3388 = vmatpush.msra.mxu0 0.0
    %3389 = vmatpush.msra.mxu0 0.0
    %3390 = vmatpush.msra.mxu0 0.0
    %3391 = vmatpush.msra.mxu0 0.0
    %3392 = vmatpush.msra.mxu0 0.0
    %3393 = vmatpush.msra.mxu0 0.0
    %3394 = vmatpush.msra.mxu0 0.0
    %3395 = vmatpush.msra.mxu0 0.0
    %3396 = vmatpush.msra.mxu0 0.0
    %3397 = vmatpush.msra.mxu0 0.0
    %3398 = vmatpush.msra.mxu0 0.0
    %3399 = vmatpush.msra.mxu0 %v3131
    %3400 = vmatpush.msra.mxu0 %v3120
    %3401 = vmatpush.msra.mxu0 %v3119
    %3402 = vmatmul.f32.gmra.mxu0 %v3384
    %v3403 = vpop.f32.mrf.mxu0
    %v3404 = vadd.f32 0.0, %v3403
    %3405 = vdwg.mxu0
    %s3406 = scalar_lea.vmem [#allocation3], 512
    %v3407 = vld [vmem:[%s3406] sm:$0xff]
    %v3408 = vld [vmem:[%s3406 + $0x8] sm:$0xff]
    %v3409 = vld [vmem:[%s3406 + $0x10] sm:$0xff]
    %v3410 = vld [vmem:[%s3406 + $0x18] sm:$0xff]
    %v3411 = vld [vmem:[%s3406 + $0x20] sm:$0xff]
    %v3412 = vld [vmem:[%s3406 + $0x28] sm:$0xff]
    %v3413 = vld [vmem:[%s3406 + $0x30] sm:$0xff]
    %v3414 = vld [vmem:[%s3406 + $0x38] sm:$0xff]
    %v3415 = vld [vmem:[%s3406 + $0x40] sm:$0xff]
    %v3416 = vld [vmem:[%s3406 + $0x48] sm:$0xff]
    %v3417 = vld [vmem:[%s3406 + $0x50] sm:$0xff]
    %v3418 = vld [vmem:[%s3406 + $0x58] sm:$0xff]
    %v3419 = vld [vmem:[%s3406 + $0x60] sm:$0xff]
    %v3420 = vld [vmem:[%s3406 + $0x68] sm:$0xff]
    %v3421 = vld [vmem:[%s3406 + $0x70] sm:$0xff]
    %v3422 = vld [vmem:[%s3406 + $0x78] sm:$0xff]
    %3423 = vmatpush.msra.mxu0 %v3422
    %3424 = vmatpush.msra.mxu0 %v3421
    %3425 = vmatpush.msra.mxu0 %v3420
    %3426 = vmatpush.msra.mxu0 %v3419
    %3427 = vmatpush.msra.mxu0 %v3418
    %3428 = vmatpush.msra.mxu0 %v3417
    %3429 = vmatpush.msra.mxu0 %v3416
    %3430 = vmatpush.msra.mxu0 %v3415
    %3431 = vmatpush.msra.mxu0 %v3414
    %3432 = vmatpush.msra.mxu0 %v3413
    %3433 = vmatpush.msra.mxu0 %v3412
    %3434 = vmatpush.msra.mxu0 %v3411
    %3435 = vmatpush.msra.mxu0 %v3410
    %3436 = vmatpush.msra.mxu0 %v3409
    %3437 = vmatpush.msra.mxu0 %v3408
    %3438 = vmatpush.msra.mxu0 %v3407
    %3439 = vmatmul.f32.gmra.mxu0 %v3404
    %v3440 = vpop.f32.mrf.mxu0
    %v3441 = vadd.f32 0.0, %v3440
    %3442 = vdwg.mxu0
    %v3443 = vadd.f32 %v3379, %v3441
    %v3444 = vld [vmem:[#allocation6] sm:$0x1]
    %v3446 = vperm.slane %v3444, 0
    %v3448 = vadd.f32 %v3443, %v3446
    %v3449 = vmax.f32 %v3448, 0.0
    %s3450 = sld [smem:[#allocation2]]
    %v3451 = vand.u32 2147483647, %v3449
    %v3452 = vsel %vm3129, %v3451, 0.0
    %3453 = vadd.xlane.f32.xlu0 %v3452
    %v3454 = vpop.xlane.xlu0 %3453
    %v3455 = vrot.slane %v3454, 4
    %v3456 = vadd.f32 %v3454, %v3455
    %v3457 = vrot.slane %v3456, 2
    %v3458 = vadd.f32 %v3456, %v3457
    %v3459 = vrot.slane %v3458, 1
    %v3460 = vadd.f32 %v3458, %v3459
    %s3461 = vtos %v3460
    %v3462 = vstv %s3461
    %v3463 = vrcp.pop 512.0
    %v3464 = vmul.f32 512.0, %v3463
    %v3465 = vsub.f32 1.0, %v3464
    %v3466 = vmul.f32 %v3463, %v3465
    %v3467 = vadd.f32 %v3463, %v3466
    %vm3468 = vweird.f32 %v3463
    %v3469 = vsel %vm3468, %v3463, %v3467
    %v3470 = vmul.f32 %v3462, %v3469
    %v3471 = vstv %s3450
    %v3472 = vmul.f32 %v3471, %v3470
    %v3473 = vld [vmem:[%s2] sm:$0xf]
    %v3474 = vmul.f32 %v3472, %v3473
    %v3475 = vadd.f32 %v3449, %v3474
    %v3476 = vld [vmem:[#allocation8] sm:$0xff]
    %v3477 = vld [vmem:[#allocation8 + $0x8] sm:$0xff]
    %v3478 = vld [vmem:[#allocation8 + $0x10] sm:$0xff]
    %v3479 = vld [vmem:[#allocation8 + $0x18] sm:$0xff]
    %v3480 = vld [vmem:[#allocation8 + $0x20] sm:$0xff]
    %v3481 = vld [vmem:[#allocation8 + $0x28] sm:$0xff]
    %v3482 = vld [vmem:[#allocation8 + $0x30] sm:$0xff]
    %v3483 = vld [vmem:[#allocation8 + $0x38] sm:$0xff]
    %v3484 = vld [vmem:[#allocation8 + $0x40] sm:$0xff]
    %v3485 = vld [vmem:[#allocation8 + $0x48] sm:$0xff]
    %v3486 = vld [vmem:[#allocation8 + $0x50] sm:$0xff]
    %v3487 = vld [vmem:[#allocation8 + $0x58] sm:$0xff]
    %v3488 = vld [vmem:[#allocation8 + $0x60] sm:$0xff]
    %v3489 = vld [vmem:[#allocation8 + $0x68] sm:$0xff]
    %v3490 = vld [vmem:[#allocation8 + $0x70] sm:$0xff]
    %v3491 = vld [vmem:[#allocation8 + $0x78] sm:$0xff]
    %v3492 = vld [vmem:[%s12] sm:$0x1]
    %v3494 = vperm.slane %v3492, 0
    %3496 = vmatpush.msra.mxu0 %v3491
    %3497 = vmatpush.msra.mxu0 %v3490
    %3498 = vmatpush.msra.mxu0 %v3489
    %3499 = vmatpush.msra.mxu0 %v3488
    %3500 = vmatpush.msra.mxu0 %v3487
    %3501 = vmatpush.msra.mxu0 %v3486
    %3502 = vmatpush.msra.mxu0 %v3485
    %3503 = vmatpush.msra.mxu0 %v3484
    %3504 = vmatpush.msra.mxu0 %v3483
    %3505 = vmatpush.msra.mxu0 %v3482
    %3506 = vmatpush.msra.mxu0 %v3481
    %3507 = vmatpush.msra.mxu0 %v3480
    %3508 = vmatpush.msra.mxu0 %v3479
    %3509 = vmatpush.msra.mxu0 %v3478
    %3510 = vmatpush.msra.mxu0 %v3477
    %3511 = vmatpush.msra.mxu0 %v3476
    %3512 = vmatmul.f32.gmra.mxu0 %v3475
    %v3513 = vpop.f32.mrf.mxu0
    %v3514 = vadd.f32 %v3494, %v3513
    %3515 = vdwg.mxu0
    %v3516 = vmax.f32 %v3514, 0.0
    %v3517 = vld [vmem:[%s13] sm:$0xff]
    %v3518 = vld [vmem:[%s13 + $0x8] sm:$0xff]
    %v3519 = vld [vmem:[%s13 + $0x10] sm:$0xff]
    %v3520 = vld [vmem:[%s13 + $0x18] sm:$0xff]
    %v3521 = vld [vmem:[%s13 + $0x20] sm:$0xff]
    %v3522 = vld [vmem:[%s13 + $0x28] sm:$0xff]
    %v3523 = vld [vmem:[%s13 + $0x30] sm:$0xff]
    %v3524 = vld [vmem:[%s13 + $0x38] sm:$0xff]
    %v3525 = vld [vmem:[%s13 + $0x40] sm:$0xff]
    %v3526 = vld [vmem:[%s13 + $0x48] sm:$0xff]
    %v3527 = vld [vmem:[%s13 + $0x50] sm:$0xff]
    %v3528 = vld [vmem:[%s13 + $0x58] sm:$0xff]
    %v3529 = vld [vmem:[%s13 + $0x60] sm:$0xff]
    %v3530 = vld [vmem:[%s13 + $0x68] sm:$0xff]
    %v3531 = vld [vmem:[%s13 + $0x70] sm:$0xff]
    %v3532 = vld [vmem:[%s13 + $0x78] sm:$0xff]
    %v3533 = vld [vmem:[#allocation9] sm:$0x1]
    %v3535 = vperm.slane %v3533, 0
    %3537 = vmatpush.msra.mxu0 %v3532
    %3538 = vmatpush.msra.mxu0 %v3531
    %3539 = vmatpush.msra.mxu0 %v3530
    %3540 = vmatpush.msra.mxu0 %v3529
    %3541 = vmatpush.msra.mxu0 %v3528
    %3542 = vmatpush.msra.mxu0 %v3527
    %3543 = vmatpush.msra.mxu0 %v3526
    %3544 = vmatpush.msra.mxu0 %v3525
    %3545 = vmatpush.msra.mxu0 %v3524
    %3546 = vmatpush.msra.mxu0 %v3523
    %3547 = vmatpush.msra.mxu0 %v3522
    %3548 = vmatpush.msra.mxu0 %v3521
    %3549 = vmatpush.msra.mxu0 %v3520
    %3550 = vmatpush.msra.mxu0 %v3519
    %3551 = vmatpush.msra.mxu0 %v3518
    %3552 = vmatpush.msra.mxu0 %v3517
    %3553 = vmatmul.f32.gmra.mxu0 %v3516
    %v3554 = vpop.f32.mrf.mxu0
    %v3555 = vadd.f32 %v3535, %v3554
    %3556 = vdwg.mxu0
    %vm3557 = vcmask 60416
    %3558 = vst.msk [vmem:[#allocation11] sm:$0xf] %vm3557, %v3555
    // Predicated region
    $region78: #{umt_audio_forward.1} parent=1 // pred_check
      _
    $region79: #{umt_audio_forward.1} parent=1 // pred_check_branch
      %3560 = sbr.rel (0) target = $region81
    $region80: #{umt_audio_forward.1} parent=1 // pred_region
      %3562 = vsyncadd [#allocation5], 0
      %s3564 = sshll.u32 [#allocation11], 4
      %s3565 = int_to_ptr.vmem [resolvable:$true] %s3564
      %s3566 = sshll.u32 %s15, 4
      %s3567 = int_to_ptr.hbm [resolvable:$true] %s3566
      %3569 = dma.vmem_to_hbm [thread:$0]  %s3565, 64, %s3567, [#allocation5]
    $region81: #{umt_audio_forward.1} parent=1 // pred_fallthru
      _
    // Predicated region
    $region82: #{umt_audio_forward.1} parent=1 // pred_check
      _
    $region83: #{umt_audio_forward.1} parent=1 // pred_check_branch
      %3571 = sbr.rel (0) target = $region85
    $region84: #{umt_audio_forward.1} parent=1 // pred_region
      %3573 = dma.done [#allocation5], 64
    $region85: #{umt_audio_forward.1} parent=1 // pred_fallthru
      _
    %3574 = vsyncpa [#allocation4], 1
    %3575 = vsyncpa [#allocation7], 1
    %3576 = vsyncpa [#allocation10], 1
    %3577 = vsyncpa [#allocation5], 1

</llo_original>
